<compile_context>
chip_gen: v7x
topology: tpu7x:2x2x1
jax: 0.10.0
libtpu: 0.0.40
codegen_flags: <defaults>
</compile_context>

<pallas_src>
import math

import jax
import jax.numpy as jnp
from jax.experimental import pallas as pl
from jax.experimental.pallas import tpu as pltpu

# ----------------------------- model dims ----------------------------------
B = 32         # parcels (batch)
T = 8          # time steps (acquisition dates)
C_IN = 16      # input channels per timestep
H_ENC = 64     # encoder hidden
D = 32         # model / attention dim
H_CLS = 64     # classifier hidden
N_CLASSES = 20
N_PAD = 128    # classifier output padded to one full vreg lane width

B_TILE = 16    # parcels per grid step  ->  B_TILE*T = 128 matmul rows
assert B % B_TILE == 0
R = B_TILE * T


# ------------------------------ kernel --------------------------------------
def parcel_kernel(x_ref, pe_ref,
                  we1_ref, be1_ref, we2_ref, be2_ref,
                  wq_ref, wk_ref, wv_ref,
                  wc1_ref, bc1_ref, wc2_ref, bc2_ref,
                  out_ref):
    # x_ref : (R, C_IN)  -- B_TILE parcels x T timesteps, flattened row-wise
    # pe_ref: (R, D)     -- precomputed sinusoidal positional encoding
    x = x_ref[...]

    # ---------------- encoder: per-timestep 2-layer MLP (128-row matmuls) ---
    h = jnp.dot(x, we1_ref[...], preferred_element_type=jnp.float32) + be1_ref[...]
    h = jnp.maximum(h, 0.0)                                        # (R, H_ENC)
    h = jnp.dot(h, we2_ref[...], preferred_element_type=jnp.float32) + be2_ref[...]
    h = h + pe_ref[...]                                            # (R, D)

    # ---------------- q/k/v projections stay flat for MXU shape -------------
    q = jnp.dot(h, wq_ref[...], preferred_element_type=jnp.float32)   # (R, D)
    k = jnp.dot(h, wk_ref[...], preferred_element_type=jnp.float32)
    v = jnp.dot(h, wv_ref[...], preferred_element_type=jnp.float32)

    q3 = q.reshape(B_TILE, T, D)
    k3 = k.reshape(B_TILE, T, D)
    v3 = v.reshape(B_TILE, T, D)

    # ---------------- single-head self-attention per parcel -----------------
    s = jnp.einsum("bqd,bkd->bqk", q3, k3,
                   preferred_element_type=jnp.float32)             # (B_TILE, T, T)
    s = s * (1.0 / math.sqrt(D))
    s_max = jnp.max(s, axis=-1, keepdims=True)
    p = jnp.exp(s - s_max)
    p = p / jnp.sum(p, axis=-1, keepdims=True)
    att = jnp.einsum("bqk,bkd->bqd", p, v3,
                     preferred_element_type=jnp.float32)           # (B_TILE, T, D)

    pooled = jnp.mean(att, axis=1)                                 # (B_TILE, D)

    # ---------------- classifier: 2-layer MLP, lane-dense padded output -----
    z = jnp.dot(pooled, wc1_ref[...], preferred_element_type=jnp.float32) + bc1_ref[...]
    z = jnp.maximum(z, 0.0)                                        # (B_TILE, H_CLS)
    logits = jnp.dot(z, wc2_ref[...], preferred_element_type=jnp.float32) + bc2_ref[...]

    out_ref[...] = logits                                          # (B_TILE, N_PAD)


# ------------------------------ wrapper --------------------------------------
def _positional_encoding(day_of_year):
    doy = day_of_year.astype(jnp.float32)[..., None]               # (B, T, 1)
    d_idx = jnp.arange(D, dtype=jnp.float32)
    div = jnp.exp(-(2.0 * jnp.floor(d_idx * 0.5) / D) * math.log(10000.0))
    angle = doy * div                                              # (B, T, D)
    return jnp.where(jnp.arange(D) % 2 == 0, jnp.sin(angle), jnp.cos(angle))


@jax.jit
def parcel_model(x, day_of_year, params):
    (we1, be1, we2, be2, wq, wk, wv, wc1, bc1, wc2, bc2) = params

    # Positional encoding computed once in XLA (same f32 formula as reference).
    pe = _positional_encoding(day_of_year).reshape(B * T, D)
    x_flat = x.reshape(B * T, C_IN)

    # Zero-pad classifier output columns to a full 128-lane vreg row so the
    # kernel's final store is unmasked / lane-dense.
    wc2_p = jnp.zeros((H_CLS, N_PAD), jnp.float32).at[:, :N_CLASSES].set(wc2)
    bc2_p = jnp.zeros((1, N_PAD), jnp.float32).at[:, :N_CLASSES].set(bc2)

    full = lambda shape: pl.BlockSpec(shape, lambda i: tuple(0 for _ in shape))

    out = pl.pallas_call(
        parcel_kernel,
        out_shape=jax.ShapeDtypeStruct((B, N_PAD), jnp.float32),
        grid_spec=pltpu.PrefetchScalarGridSpec(
            num_scalar_prefetch=0,
            grid=(B // B_TILE,),   # >= 2 tiles so both v7x TensorCores get work
            in_specs=[
                pl.BlockSpec((R, C_IN), lambda i: (i, 0)),    # x (flattened)
                pl.BlockSpec((R, D), lambda i: (i, 0)),       # positional encoding
                full((C_IN, H_ENC)), full((1, H_ENC)),        # encoder L1
                full((H_ENC, D)), full((1, D)),               # encoder L2
                full((D, D)), full((D, D)), full((D, D)),     # Wq, Wk, Wv
                full((D, H_CLS)), full((1, H_CLS)),           # classifier L1
                full((H_CLS, N_PAD)), full((1, N_PAD)),       # classifier L2 (padded)
            ],
            out_specs=pl.BlockSpec((B_TILE, N_PAD), lambda i: (i, 0)),
        ),
        compiler_params=pltpu.CompilerParams(
            dimension_semantics=("parallel",)),
    )(x_flat, pe, we1, be1, we2, be2, wq, wk, wv, wc1, bc1, wc2_p, bc2_p)

    return out[:, :N_CLASSES]


# --------------------------- pure-JAX reference ------------------------------
def parcel_model_ref(x, day_of_year, params):
    (we1, be1, we2, be2, wq, wk, wv, wc1, bc1, wc2, bc2) = params
    doy = day_of_year.astype(jnp.float32)[..., None]               # (B, T, 1)
    h = jnp.maximum(x @ we1 + be1, 0.0) @ we2 + be2                # (B, T, D)

    d_idx = jnp.arange(D, dtype=jnp.float32)
    div = jnp.exp(-(2.0 * jnp.floor(d_idx * 0.5) / D) * math.log(10000.0))
    angle = doy * div                                              # (B, T, D)
    pe = jnp.where(jnp.arange(D) % 2 == 0, jnp.sin(angle), jnp.cos(angle))
    h = h + pe

    q, k, v = h @ wq, h @ wk, h @ wv
    s = jnp.einsum("btd,bsd->bts", q, k) / math.sqrt(D)
    p = jax.nn.softmax(s, axis=-1)
    att = jnp.einsum("bts,bsd->btd", p, v)
    pooled = att.mean(axis=1)                                      # (B, D)

    z = jnp.maximum(pooled @ wc1 + bc1, 0.0)
    return z @ wc2 + bc2


# ------------------------------ params / main --------------------------------
def init_params(key):
    ks = jax.random.split(key, 8)
    def lin(k, fan_in, shape):
        return jax.random.normal(k, shape, jnp.float32) / math.sqrt(fan_in)
    we1 = lin(ks[0], C_IN, (C_IN, H_ENC)); be1 = jnp.zeros((1, H_ENC), jnp.float32)
    we2 = lin(ks[1], H_ENC, (H_ENC, D));   be2 = jnp.zeros((1, D), jnp.float32)
    wq = lin(ks[2], D, (D, D))
    wk = lin(ks[3], D, (D, D))
    wv = lin(ks[4], D, (D, D))
    wc1 = lin(ks[5], D, (D, H_CLS));       bc1 = jnp.zeros((1, H_CLS), jnp.float32)
    wc2 = lin(ks[6], H_CLS, (H_CLS, N_CLASSES))
    bc2 = jnp.zeros((1, N_CLASSES), jnp.float32)
    return (we1, be1, we2, be2, wq, wk, wv, wc1, bc1, wc2, bc2)


if __name__ == "__main__":
    key = jax.random.PRNGKey(0)
    kx, kd, kp = jax.random.split(key, 3)
    x = jax.random.normal(kx, (B, T, C_IN), jnp.float32)
    day_of_year = jax.random.randint(kd, (B, T), 1, 366).astype(jnp.int32)
    params = init_params(kp)

    out = parcel_model(x, day_of_year, params)
    jax.block_until_ready(out)

    ref = parcel_model_ref(x, day_of_year, params)
    assert out.shape == (B, N_CLASSES)
    assert jnp.allclose(out, ref, atol=1e-4, rtol=1e-4), "mismatch vs JAX reference"

    print("KERNEL_OK")
</pallas_src>

<mosaic_0001>
module attributes {stable_mosaic.version = 11 : i64} {
  func.func @parcel_kernel(%arg0: i32, %arg1: memref<128x16xf32, #tpu.memory_space<vmem>>, %arg2: memref<128x32xf32, #tpu.memory_space<vmem>>, %arg3: memref<16x64xf32, #tpu.memory_space<vmem>>, %arg4: memref<1x64xf32, #tpu.memory_space<vmem>>, %arg5: memref<64x32xf32, #tpu.memory_space<vmem>>, %arg6: memref<1x32xf32, #tpu.memory_space<vmem>>, %arg7: memref<32x32xf32, #tpu.memory_space<vmem>>, %arg8: memref<32x32xf32, #tpu.memory_space<vmem>>, %arg9: memref<32x32xf32, #tpu.memory_space<vmem>>, %arg10: memref<32x64xf32, #tpu.memory_space<vmem>>, %arg11: memref<1x64xf32, #tpu.memory_space<vmem>>, %arg12: memref<64x128xf32, #tpu.memory_space<vmem>>, %arg13: memref<1x128xf32, #tpu.memory_space<vmem>>, %arg14: memref<16x128xf32, #tpu.memory_space<vmem>>) attributes {dimension_semantics = [#tpu.dimension_semantics<parallel>], iteration_bounds = array<i64: 2>, scalar_prefetch = 0 : i64, scratch_operands = 0 : i64, tpu.core_type = #tpu.core_type<tc>, window_params = [{transform_indices = @transform_0, window_bounds = array<i64: 128, 16>}, {transform_indices = @transform_1, window_bounds = array<i64: 128, 32>}, {pipeline_mode = #tpu.pipeline_mode<synchronous>, transform_indices = @transform_2, window_bounds = array<i64: 16, 64>}, {pipeline_mode = #tpu.pipeline_mode<synchronous>, transform_indices = @transform_3, window_bounds = array<i64: 1, 64>}, {pipeline_mode = #tpu.pipeline_mode<synchronous>, transform_indices = @transform_4, window_bounds = array<i64: 64, 32>}, {pipeline_mode = #tpu.pipeline_mode<synchronous>, transform_indices = @transform_5, window_bounds = array<i64: 1, 32>}, {pipeline_mode = #tpu.pipeline_mode<synchronous>, transform_indices = @transform_6, window_bounds = array<i64: 32, 32>}, {pipeline_mode = #tpu.pipeline_mode<synchronous>, transform_indices = @transform_7, window_bounds = array<i64: 32, 32>}, {pipeline_mode = #tpu.pipeline_mode<synchronous>, transform_indices = @transform_8, window_bounds = array<i64: 32, 32>}, {pipeline_mode = #tpu.pipeline_mode<synchronous>, transform_indices = @transform_9, window_bounds = array<i64: 32, 64>}, {pipeline_mode = #tpu.pipeline_mode<synchronous>, transform_indices = @transform_10, window_bounds = array<i64: 1, 64>}, {pipeline_mode = #tpu.pipeline_mode<synchronous>, transform_indices = @transform_11, window_bounds = array<i64: 64, 128>}, {pipeline_mode = #tpu.pipeline_mode<synchronous>, transform_indices = @transform_12, window_bounds = array<i64: 1, 128>}, {transform_indices = @transform_13, window_bounds = array<i64: 16, 128>}]} {
    %c0 = arith.constant 0 : index
    %c0_0 = arith.constant 0 : index
    %0 = vector.load %arg1[%c0, %c0_0] : memref<128x16xf32, #tpu.memory_space<vmem>>, vector<128x16xf32>
    %c0_1 = arith.constant 0 : index
    %c0_2 = arith.constant 0 : index
    %1 = vector.load %arg3[%c0_1, %c0_2] : memref<16x64xf32, #tpu.memory_space<vmem>>, vector<16x64xf32>
    %cst = arith.constant dense<0.000000e+00> : vector<128x64xf32>
    %2 = tpu.matmul %0, %1, %cst {dimension_numbers = #tpu.dot_dimension_numbers<[1], [0], [0], [1], [0, 0, 1, 1], [], []>} : vector<128x16xf32>, vector<16x64xf32>, vector<128x64xf32> -> vector<128x64xf32>
    %c0_3 = arith.constant 0 : index
    %c0_4 = arith.constant 0 : index
    %3 = vector.load %arg4[%c0_3, %c0_4] : memref<1x64xf32, #tpu.memory_space<vmem>>, vector<1x64xf32>
    %4 = vector.broadcast %3 : vector<1x64xf32> to vector<128x64xf32>
    %5 = arith.addf %2, %4 : vector<128x64xf32>
    %cst_5 = arith.constant 0.000000e+00 : f32
    %6 = vector.broadcast %cst_5 : f32 to vector<128x64xf32>
    %7 = arith.maximumf %5, %6 : vector<128x64xf32>
    %c0_6 = arith.constant 0 : index
    %c0_7 = arith.constant 0 : index
    %8 = vector.load %arg5[%c0_6, %c0_7] : memref<64x32xf32, #tpu.memory_space<vmem>>, vector<64x32xf32>
    %cst_8 = arith.constant dense<0.000000e+00> : vector<128x32xf32>
    %9 = tpu.matmul %7, %8, %cst_8 {dimension_numbers = #tpu.dot_dimension_numbers<[1], [0], [0], [1], [0, 0, 1, 1], [], []>} : vector<128x64xf32>, vector<64x32xf32>, vector<128x32xf32> -> vector<128x32xf32>
    %c0_9 = arith.constant 0 : index
    %c0_10 = arith.constant 0 : index
    %10 = vector.load %arg6[%c0_9, %c0_10] : memref<1x32xf32, #tpu.memory_space<vmem>>, vector<1x32xf32>
    %11 = vector.broadcast %10 : vector<1x32xf32> to vector<128x32xf32>
    %12 = arith.addf %9, %11 : vector<128x32xf32>
    %c0_11 = arith.constant 0 : index
    %c0_12 = arith.constant 0 : index
    %13 = vector.load %arg2[%c0_11, %c0_12] : memref<128x32xf32, #tpu.memory_space<vmem>>, vector<128x32xf32>
    %14 = arith.addf %12, %13 : vector<128x32xf32>
    %c0_13 = arith.constant 0 : index
    %c0_14 = arith.constant 0 : index
    %15 = vector.load %arg7[%c0_13, %c0_14] : memref<32x32xf32, #tpu.memory_space<vmem>>, vector<32x32xf32>
    %cst_15 = arith.constant dense<0.000000e+00> : vector<128x32xf32>
    %16 = tpu.matmul %14, %15, %cst_15 {dimension_numbers = #tpu.dot_dimension_numbers<[1], [0], [0], [1], [0, 0, 1, 1], [], []>} : vector<128x32xf32>, vector<32x32xf32>, vector<128x32xf32> -> vector<128x32xf32>
    %c0_16 = arith.constant 0 : index
    %c0_17 = arith.constant 0 : index
    %17 = vector.load %arg8[%c0_16, %c0_17] : memref<32x32xf32, #tpu.memory_space<vmem>>, vector<32x32xf32>
    %cst_18 = arith.constant dense<0.000000e+00> : vector<128x32xf32>
    %18 = tpu.matmul %14, %17, %cst_18 {dimension_numbers = #tpu.dot_dimension_numbers<[1], [0], [0], [1], [0, 0, 1, 1], [], []>} : vector<128x32xf32>, vector<32x32xf32>, vector<128x32xf32> -> vector<128x32xf32>
    %c0_19 = arith.constant 0 : index
    %c0_20 = arith.constant 0 : index
    %19 = vector.load %arg9[%c0_19, %c0_20] : memref<32x32xf32, #tpu.memory_space<vmem>>, vector<32x32xf32>
    %cst_21 = arith.constant dense<0.000000e+00> : vector<128x32xf32>
    %20 = tpu.matmul %14, %19, %cst_21 {dimension_numbers = #tpu.dot_dimension_numbers<[1], [0], [0], [1], [0, 0, 1, 1], [], []>} : vector<128x32xf32>, vector<32x32xf32>, vector<128x32xf32> -> vector<128x32xf32>
    %21 = vector.shape_cast %16 : vector<128x32xf32> to vector<16x8x32xf32>
    %22 = vector.shape_cast %18 : vector<128x32xf32> to vector<16x8x32xf32>
    %23 = vector.shape_cast %20 : vector<128x32xf32> to vector<16x8x32xf32>
    "tpu.trace_start"() <{level = 10 : i32, message = "bqd,bkd->bqk"}> : () -> ()
    %cst_22 = arith.constant dense<0.000000e+00> : vector<16x8x8xf32>
    %24 = tpu.matmul %21, %22, %cst_22 {dimension_numbers = #tpu.dot_dimension_numbers<[2], [2], [1], [1], [0, 0, 0, 1, 1, 1], [0], [0]>} : vector<16x8x32xf32>, vector<16x8x32xf32>, vector<16x8x8xf32> -> vector<16x8x8xf32>
    "tpu.trace_stop"() : () -> ()
    %cst_23 = arith.constant 0.176776692 : f32
    %25 = vector.broadcast %cst_23 : f32 to vector<16x8x8xf32>
    %26 = arith.mulf %24, %25 : vector<16x8x8xf32>
    %cst_24 = arith.constant dense<0xFF800000> : vector<16x8xf32>
    %27 = vector.multi_reduction <maximumf>, %26, %cst_24 [2] : vector<16x8x8xf32> to vector<16x8xf32>
    %28 = vector.shape_cast %27 : vector<16x8xf32> to vector<16x8x1xf32>
    %29 = vector.broadcast %28 : vector<16x8x1xf32> to vector<16x8x8xf32>
    %30 = arith.subf %26, %29 : vector<16x8x8xf32>
    %31 = math.exp %30 : vector<16x8x8xf32>
    %cst_25 = arith.constant dense<0.000000e+00> : vector<16x8xf32>
    %32 = vector.multi_reduction <add>, %31, %cst_25 [2] : vector<16x8x8xf32> to vector<16x8xf32>
    %33 = vector.shape_cast %32 : vector<16x8xf32> to vector<16x8x1xf32>
    %34 = vector.broadcast %33 : vector<16x8x1xf32> to vector<16x8x8xf32>
    %35 = arith.divf %31, %34 : vector<16x8x8xf32>
    "tpu.trace_start"() <{level = 10 : i32, message = "bqk,bkd->bqd"}> : () -> ()
    %cst_26 = arith.constant dense<0.000000e+00> : vector<16x8x32xf32>
    %36 = tpu.matmul %35, %23, %cst_26 {dimension_numbers = #tpu.dot_dimension_numbers<[2], [1], [1], [2], [0, 0, 0, 1, 1, 2], [0], [0]>} : vector<16x8x8xf32>, vector<16x8x32xf32>, vector<16x8x32xf32> -> vector<16x8x32xf32>
    "tpu.trace_stop"() : () -> ()
    %cst_27 = arith.constant dense<0.000000e+00> : vector<16x32xf32>
    %37 = vector.multi_reduction <add>, %36, %cst_27 [1] : vector<16x8x32xf32> to vector<16x32xf32>
    %cst_28 = arith.constant 8.000000e+00 : f32
    %38 = vector.broadcast %cst_28 : f32 to vector<16x32xf32>
    %39 = arith.divf %37, %38 : vector<16x32xf32>
    %c0_29 = arith.constant 0 : index
    %c0_30 = arith.constant 0 : index
    %40 = vector.load %arg10[%c0_29, %c0_30] : memref<32x64xf32, #tpu.memory_space<vmem>>, vector<32x64xf32>
    %cst_31 = arith.constant dense<0.000000e+00> : vector<16x64xf32>
    %41 = tpu.matmul %39, %40, %cst_31 {dimension_numbers = #tpu.dot_dimension_numbers<[1], [0], [0], [1], [0, 0, 1, 1], [], []>} : vector<16x32xf32>, vector<32x64xf32>, vector<16x64xf32> -> vector<16x64xf32>
    %c0_32 = arith.constant 0 : index
    %c0_33 = arith.constant 0 : index
    %42 = vector.load %arg11[%c0_32, %c0_33] : memref<1x64xf32, #tpu.memory_space<vmem>>, vector<1x64xf32>
    %43 = vector.broadcast %42 : vector<1x64xf32> to vector<16x64xf32>
    %44 = arith.addf %41, %43 : vector<16x64xf32>
    %cst_34 = arith.constant 0.000000e+00 : f32
    %45 = vector.broadcast %cst_34 : f32 to vector<16x64xf32>
    %46 = arith.maximumf %44, %45 : vector<16x64xf32>
    %c0_35 = arith.constant 0 : index
    %c0_36 = arith.constant 0 : index
    %47 = vector.load %arg12[%c0_35, %c0_36] : memref<64x128xf32, #tpu.memory_space<vmem>>, vector<64x128xf32>
    %cst_37 = arith.constant dense<0.000000e+00> : vector<16x128xf32>
    %48 = tpu.matmul %46, %47, %cst_37 {dimension_numbers = #tpu.dot_dimension_numbers<[1], [0], [0], [1], [0, 0, 1, 1], [], []>} : vector<16x64xf32>, vector<64x128xf32>, vector<16x128xf32> -> vector<16x128xf32>
    %c0_38 = arith.constant 0 : index
    %c0_39 = arith.constant 0 : index
    %49 = vector.load %arg13[%c0_38, %c0_39] : memref<1x128xf32, #tpu.memory_space<vmem>>, vector<1x128xf32>
    %50 = vector.broadcast %49 : vector<1x128xf32> to vector<16x128xf32>
    %51 = arith.addf %48, %50 : vector<16x128xf32>
    %c0_40 = arith.constant 0 : index
    %c0_41 = arith.constant 0 : index
    %52 = vector.load %arg14[%c0_40, %c0_41] : memref<16x128xf32, #tpu.memory_space<vmem>>, vector<16x128xf32>
    tpu.vector_store %arg14[%c0_40, %c0_41], %51 {strides = array<i32>} : memref<16x128xf32, #tpu.memory_space<vmem>>, vector<16x128xf32>,
    return
  }
  func.func @transform_0(%arg0: i32) -> (i32, i32) {
    %c0_i32 = arith.constant 0 : i32
    %c0_i32_0 = arith.constant 0 : i32
    return %arg0, %c0_i32 : i32, i32
  }
  func.func @transform_1(%arg0: i32) -> (i32, i32) {
    %c0_i32 = arith.constant 0 : i32
    %c0_i32_0 = arith.constant 0 : i32
    return %arg0, %c0_i32 : i32, i32
  }
  func.func @transform_2(%arg0: i32) -> (i32, i32) {
    %c0_i32 = arith.constant 0 : i32
    %c0_i32_0 = arith.constant 0 : i32
    %c0_i32_1 = arith.constant 0 : i32
    return %c0_i32, %c0_i32_0 : i32, i32
  }
  func.func @transform_3(%arg0: i32) -> (i32, i32) {
    %c0_i32 = arith.constant 0 : i32
    %c0_i32_0 = arith.constant 0 : i32
    %c0_i32_1 = arith.constant 0 : i32
    return %c0_i32, %c0_i32_0 : i32, i32
  }
  func.func @transform_4(%arg0: i32) -> (i32, i32) {
    %c0_i32 = arith.constant 0 : i32
    %c0_i32_0 = arith.constant 0 : i32
    %c0_i32_1 = arith.constant 0 : i32
    return %c0_i32, %c0_i32_0 : i32, i32
  }
  func.func @transform_5(%arg0: i32) -> (i32, i32) {
    %c0_i32 = arith.constant 0 : i32
    %c0_i32_0 = arith.constant 0 : i32
    %c0_i32_1 = arith.constant 0 : i32
    return %c0_i32, %c0_i32_0 : i32, i32
  }
  func.func @transform_6(%arg0: i32) -> (i32, i32) {
    %c0_i32 = arith.constant 0 : i32
    %c0_i32_0 = arith.constant 0 : i32
    %c0_i32_1 = arith.constant 0 : i32
    return %c0_i32, %c0_i32_0 : i32, i32
  }
  func.func @transform_7(%arg0: i32) -> (i32, i32) {
    %c0_i32 = arith.constant 0 : i32
    %c0_i32_0 = arith.constant 0 : i32
    %c0_i32_1 = arith.constant 0 : i32
    return %c0_i32, %c0_i32_0 : i32, i32
  }
  func.func @transform_8(%arg0: i32) -> (i32, i32) {
    %c0_i32 = arith.constant 0 : i32
    %c0_i32_0 = arith.constant 0 : i32
    %c0_i32_1 = arith.constant 0 : i32
    return %c0_i32, %c0_i32_0 : i32, i32
  }
  func.func @transform_9(%arg0: i32) -> (i32, i32) {
    %c0_i32 = arith.constant 0 : i32
    %c0_i32_0 = arith.constant 0 : i32
    %c0_i32_1 = arith.constant 0 : i32
    return %c0_i32, %c0_i32_0 : i32, i32
  }
  func.func @transform_10(%arg0: i32) -> (i32, i32) {
    %c0_i32 = arith.constant 0 : i32
    %c0_i32_0 = arith.constant 0 : i32
    %c0_i32_1 = arith.constant 0 : i32
    return %c0_i32, %c0_i32_0 : i32, i32
  }
  func.func @transform_11(%arg0: i32) -> (i32, i32) {
    %c0_i32 = arith.constant 0 : i32
    %c0_i32_0 = arith.constant 0 : i32
    %c0_i32_1 = arith.constant 0 : i32
    return %c0_i32, %c0_i32_0 : i32, i32
  }
  func.func @transform_12(%arg0: i32) -> (i32, i32) {
    %c0_i32 = arith.constant 0 : i32
    %c0_i32_0 = arith.constant 0 : i32
    %c0_i32_1 = arith.constant 0 : i32
    return %c0_i32, %c0_i32_0 : i32, i32
  }
  func.func @transform_13(%arg0: i32) -> (i32, i32) {
    %c0_i32 = arith.constant 0 : i32
    %c0_i32_0 = arith.constant 0 : i32
    return %arg0, %c0_i32 : i32, i32
  }
}

</mosaic_0001>

<llo_original>
// kernel: parcel_model.1
$region0: #{parcel_model.1}
  #allocation0 [shape = 'u32[]', space=smem, size = 0x4, offset = 0x4, fixed_abs, tag = 'smem constant byte address 0x4 - core index']
  #allocation1 [shape = 'u32[144,128]{1,0:T(1,128)}', space=vmem, size = 0x12000, scoped, tag = 'internal scratch']
  %s0 = inlined_call_operand.vmem [shape: f32[256,16], index: 0, kind: input, shape index: {}]
  %s1 = inlined_call_operand.vmem [shape: f32[256,32], index: 1, kind: input, shape index: {}]
  %s2 = inlined_call_operand.vmem [shape: f32[16,64], index: 2, kind: input, shape index: {}]
  %s3 = inlined_call_operand.vmem [shape: f32[1,64], index: 3, kind: input, shape index: {}]
  %s4 = inlined_call_operand.vmem [shape: f32[64,32], index: 4, kind: input, shape index: {}]
  %s5 = inlined_call_operand.vmem [shape: f32[1,32], index: 5, kind: input, shape index: {}]
  %s6 = inlined_call_operand.vmem [shape: f32[32,32], index: 6, kind: input, shape index: {}]
  %s7 = inlined_call_operand.vmem [shape: f32[32,32], index: 7, kind: input, shape index: {}]
  %s8 = inlined_call_operand.vmem [shape: f32[32,32], index: 8, kind: input, shape index: {}]
  %s9 = inlined_call_operand.vmem [shape: f32[32,64], index: 9, kind: input, shape index: {}]
  %s10 = inlined_call_operand.vmem [shape: f32[1,64], index: 10, kind: input, shape index: {}]
  %s11 = inlined_call_operand.vmem [shape: f32[64,128], index: 11, kind: input, shape index: {}]
  %s12 = inlined_call_operand.vmem [shape: f32[1,128], index: 12, kind: input, shape index: {}]
  %s13 = inlined_call_operand.vmem [shape: f32[32,128], index: 13, kind: output, shape index: {}]
  %s14 = sld [smem:[#allocation0]]
  $region85: #{parcel_model.1} parent=0
    _
  %s16 = ssub.s32 1, %s14
  %s17 = scalar_select 0, %s16, %s14
  loop: start=0, step=1, limit=4
  $region2: #{parcel_model.1} parent=0 // loop_pre_header
    _
  $region3: #{parcel_model.1} parent=0 // loop_header
    %s19 = sphi 0, %s23
    %p20 = scmp.ge.s32.totalorder %s19, 4
    %s29 = sphi 0, %s31
    %s32 = sphi 0, %s29
    %s33 = sphi 0, %s32
    %s49 = sphi 0, %s33
    %s55 = sphi 0, %s57
    %s58 = sphi 0, %s55
    %s59 = sphi 0, %s58
    %s75 = sphi 0, %s59
    %s79 = sphi 0, %s79
    %s81 = sphi 0, %s79
    %s82 = sphi 0, %s81
    %s96 = sphi 0, %s82
    %s100 = sphi 0, %s100
    %s102 = sphi 0, %s100
    %s103 = sphi 0, %s102
    %s117 = sphi 0, %s103
    %s121 = sphi 0, %s121
    %s123 = sphi 0, %s121
    %s124 = sphi 0, %s123
    %s138 = sphi 0, %s124
    %s142 = sphi 0, %s142
    %s144 = sphi 0, %s142
    %s145 = sphi 0, %s144
    %s159 = sphi 0, %s145
    %s163 = sphi 0, %s163
    %s165 = sphi 0, %s163
    %s166 = sphi 0, %s165
    %s180 = sphi 0, %s166
    %s184 = sphi 0, %s184
    %s186 = sphi 0, %s184
    %s187 = sphi 0, %s186
    %s201 = sphi 0, %s187
    %s205 = sphi 0, %s205
    %s207 = sphi 0, %s205
    %s208 = sphi 0, %s207
    %s222 = sphi 0, %s208
    %s226 = sphi 0, %s226
    %s228 = sphi 0, %s226
    %s229 = sphi 0, %s228
    %s243 = sphi 0, %s229
    %s247 = sphi 0, %s247
    %s249 = sphi 0, %s247
    %s250 = sphi 0, %s249
    %s264 = sphi 0, %s250
    %s268 = sphi 0, %s268
    %s270 = sphi 0, %s268
    %s271 = sphi 0, %s270
    %s285 = sphi 0, %s271
    %s289 = sphi 0, %s289
    %s291 = sphi 0, %s289
    %s292 = sphi 0, %s291
    %s306 = sphi 0, %s292
    %s312 = sphi 0, %s314
    %s315 = sphi 0, %s312
    %s316 = sphi 0, %s315
    %s332 = sphi 0, %s316
  $region4: #{parcel_model.1} parent=0 // loop_header_branch
    %22 = sbr.rel (%p20) target = $region8
  $region5: #{parcel_model.1} parent=0 // loop_body
    %s24 = ssub.s32 %s19, 1
    %s25 = ssub.s32 %s19, 2
    %s26 = sadd.s32 %s19, 1
    %s27 = ssub.s32 %s19, %s26
    %p28 = scmp.eq.s32.totalorder %s27, 0
    %s30 = sadd.s32 %s29, 1
    %s31 = scalar_select %p28, %s29, %s30
    %p34 = pneg %p28
    %p35 = scmp.eq.s32.totalorder %s19, 1
    %p36 = por %p34, %p35
    %p37 = scmp.ne.s32.totalorder %s29, %s32
    %p38 = scmp.eq.s32.totalorder %s19, 0
    %p39 = por %p37, %p38
    %p40 = scmp.ne.s32.totalorder %s29, %s32
    %p41 = scmp.eq.s32.totalorder %s24, 1
    %p42 = por %p40, %p41
    %p43 = scmp.ne.s32.totalorder %s32, %s33
    %p44 = scmp.eq.s32.totalorder %s24, 0
    %p45 = por %p43, %p44
    %p46 = scmp.ne.s32.totalorder %s32, %s33
    %p47 = scmp.eq.s32.totalorder %s25, 1
    %p48 = por %p46, %p47
    %p50 = scmp.ne.s32.totalorder %s33, %s49
    %p51 = scmp.eq.s32.totalorder %s25, 0
    %p52 = por %p50, %p51
    %s53 = ssub.s32 %s19, %s26
    %p54 = scmp.eq.s32.totalorder %s53, 0
    %s56 = sadd.s32 %s55, 1
    %s57 = scalar_select %p54, %s55, %s56
    %p60 = pneg %p54
    %p61 = scmp.eq.s32.totalorder %s19, 1
    %p62 = por %p60, %p61
    %p63 = scmp.ne.s32.totalorder %s55, %s58
    %p64 = scmp.eq.s32.totalorder %s19, 0
    %p65 = por %p63, %p64
    %p66 = scmp.ne.s32.totalorder %s55, %s58
    %p67 = scmp.eq.s32.totalorder %s24, 1
    %p68 = por %p66, %p67
    %p69 = scmp.ne.s32.totalorder %s58, %s59
    %p70 = scmp.eq.s32.totalorder %s24, 0
    %p71 = por %p69, %p70
    %p72 = scmp.ne.s32.totalorder %s58, %s59
    %p73 = scmp.eq.s32.totalorder %s25, 1
    %p74 = por %p72, %p73
    %p76 = scmp.ne.s32.totalorder %s59, %s75
    %p77 = scmp.eq.s32.totalorder %s25, 0
    %p78 = por %p76, %p77
    %s80 = sadd.s32 %s79, 1
    %p83 = scmp.eq.s32.totalorder %s19, 1
    %p84 = scmp.ne.s32.totalorder %s79, %s81
    %p85 = scmp.eq.s32.totalorder %s19, 0
    %p86 = por %p84, %p85
    %p87 = scmp.ne.s32.totalorder %s79, %s81
    %p88 = scmp.eq.s32.totalorder %s24, 1
    %p89 = por %p87, %p88
    %p90 = scmp.ne.s32.totalorder %s81, %s82
    %p91 = scmp.eq.s32.totalorder %s24, 0
    %p92 = por %p90, %p91
    %p93 = scmp.ne.s32.totalorder %s81, %s82
    %p94 = scmp.eq.s32.totalorder %s25, 1
    %p95 = por %p93, %p94
    %p97 = scmp.ne.s32.totalorder %s82, %s96
    %p98 = scmp.eq.s32.totalorder %s25, 0
    %p99 = por %p97, %p98
    %s101 = sadd.s32 %s100, 1
    %p104 = scmp.eq.s32.totalorder %s19, 1
    %p105 = scmp.ne.s32.totalorder %s100, %s102
    %p106 = scmp.eq.s32.totalorder %s19, 0
    %p107 = por %p105, %p106
    %p108 = scmp.ne.s32.totalorder %s100, %s102
    %p109 = scmp.eq.s32.totalorder %s24, 1
    %p110 = por %p108, %p109
    %p111 = scmp.ne.s32.totalorder %s102, %s103
    %p112 = scmp.eq.s32.totalorder %s24, 0
    %p113 = por %p111, %p112
    %p114 = scmp.ne.s32.totalorder %s102, %s103
    %p115 = scmp.eq.s32.totalorder %s25, 1
    %p116 = por %p114, %p115
    %p118 = scmp.ne.s32.totalorder %s103, %s117
    %p119 = scmp.eq.s32.totalorder %s25, 0
    %p120 = por %p118, %p119
    %s122 = sadd.s32 %s121, 1
    %p125 = scmp.eq.s32.totalorder %s19, 1
    %p126 = scmp.ne.s32.totalorder %s121, %s123
    %p127 = scmp.eq.s32.totalorder %s19, 0
    %p128 = por %p126, %p127
    %p129 = scmp.ne.s32.totalorder %s121, %s123
    %p130 = scmp.eq.s32.totalorder %s24, 1
    %p131 = por %p129, %p130
    %p132 = scmp.ne.s32.totalorder %s123, %s124
    %p133 = scmp.eq.s32.totalorder %s24, 0
    %p134 = por %p132, %p133
    %p135 = scmp.ne.s32.totalorder %s123, %s124
    %p136 = scmp.eq.s32.totalorder %s25, 1
    %p137 = por %p135, %p136
    %p139 = scmp.ne.s32.totalorder %s124, %s138
    %p140 = scmp.eq.s32.totalorder %s25, 0
    %p141 = por %p139, %p140
    %s143 = sadd.s32 %s142, 1
    %p146 = scmp.eq.s32.totalorder %s19, 1
    %p147 = scmp.ne.s32.totalorder %s142, %s144
    %p148 = scmp.eq.s32.totalorder %s19, 0
    %p149 = por %p147, %p148
    %p150 = scmp.ne.s32.totalorder %s142, %s144
    %p151 = scmp.eq.s32.totalorder %s24, 1
    %p152 = por %p150, %p151
    %p153 = scmp.ne.s32.totalorder %s144, %s145
    %p154 = scmp.eq.s32.totalorder %s24, 0
    %p155 = por %p153, %p154
    %p156 = scmp.ne.s32.totalorder %s144, %s145
    %p157 = scmp.eq.s32.totalorder %s25, 1
    %p158 = por %p156, %p157
    %p160 = scmp.ne.s32.totalorder %s145, %s159
    %p161 = scmp.eq.s32.totalorder %s25, 0
    %p162 = por %p160, %p161
    %s164 = sadd.s32 %s163, 1
    %p167 = scmp.eq.s32.totalorder %s19, 1
    %p168 = scmp.ne.s32.totalorder %s163, %s165
    %p169 = scmp.eq.s32.totalorder %s19, 0
    %p170 = por %p168, %p169
    %p171 = scmp.ne.s32.totalorder %s163, %s165
    %p172 = scmp.eq.s32.totalorder %s24, 1
    %p173 = por %p171, %p172
    %p174 = scmp.ne.s32.totalorder %s165, %s166
    %p175 = scmp.eq.s32.totalorder %s24, 0
    %p176 = por %p174, %p175
    %p177 = scmp.ne.s32.totalorder %s165, %s166
    %p178 = scmp.eq.s32.totalorder %s25, 1
    %p179 = por %p177, %p178
    %p181 = scmp.ne.s32.totalorder %s166, %s180
    %p182 = scmp.eq.s32.totalorder %s25, 0
    %p183 = por %p181, %p182
    %s185 = sadd.s32 %s184, 1
    %p188 = scmp.eq.s32.totalorder %s19, 1
    %p189 = scmp.ne.s32.totalorder %s184, %s186
    %p190 = scmp.eq.s32.totalorder %s19, 0
    %p191 = por %p189, %p190
    %p192 = scmp.ne.s32.totalorder %s184, %s186
    %p193 = scmp.eq.s32.totalorder %s24, 1
    %p194 = por %p192, %p193
    %p195 = scmp.ne.s32.totalorder %s186, %s187
    %p196 = scmp.eq.s32.totalorder %s24, 0
    %p197 = por %p195, %p196
    %p198 = scmp.ne.s32.totalorder %s186, %s187
    %p199 = scmp.eq.s32.totalorder %s25, 1
    %p200 = por %p198, %p199
    %p202 = scmp.ne.s32.totalorder %s187, %s201
    %p203 = scmp.eq.s32.totalorder %s25, 0
    %p204 = por %p202, %p203
    %s206 = sadd.s32 %s205, 1
    %p209 = scmp.eq.s32.totalorder %s19, 1
    %p210 = scmp.ne.s32.totalorder %s205, %s207
    %p211 = scmp.eq.s32.totalorder %s19, 0
    %p212 = por %p210, %p211
    %p213 = scmp.ne.s32.totalorder %s205, %s207
    %p214 = scmp.eq.s32.totalorder %s24, 1
    %p215 = por %p213, %p214
    %p216 = scmp.ne.s32.totalorder %s207, %s208
    %p217 = scmp.eq.s32.totalorder %s24, 0
    %p218 = por %p216, %p217
    %p219 = scmp.ne.s32.totalorder %s207, %s208
    %p220 = scmp.eq.s32.totalorder %s25, 1
    %p221 = por %p219, %p220
    %p223 = scmp.ne.s32.totalorder %s208, %s222
    %p224 = scmp.eq.s32.totalorder %s25, 0
    %p225 = por %p223, %p224
    %s227 = sadd.s32 %s226, 1
    %p230 = scmp.eq.s32.totalorder %s19, 1
    %p231 = scmp.ne.s32.totalorder %s226, %s228
    %p232 = scmp.eq.s32.totalorder %s19, 0
    %p233 = por %p231, %p232
    %p234 = scmp.ne.s32.totalorder %s226, %s228
    %p235 = scmp.eq.s32.totalorder %s24, 1
    %p236 = por %p234, %p235
    %p237 = scmp.ne.s32.totalorder %s228, %s229
    %p238 = scmp.eq.s32.totalorder %s24, 0
    %p239 = por %p237, %p238
    %p240 = scmp.ne.s32.totalorder %s228, %s229
    %p241 = scmp.eq.s32.totalorder %s25, 1
    %p242 = por %p240, %p241
    %p244 = scmp.ne.s32.totalorder %s229, %s243
    %p245 = scmp.eq.s32.totalorder %s25, 0
    %p246 = por %p244, %p245
    %s248 = sadd.s32 %s247, 1
    %p251 = scmp.eq.s32.totalorder %s19, 1
    %p252 = scmp.ne.s32.totalorder %s247, %s249
    %p253 = scmp.eq.s32.totalorder %s19, 0
    %p254 = por %p252, %p253
    %p255 = scmp.ne.s32.totalorder %s247, %s249
    %p256 = scmp.eq.s32.totalorder %s24, 1
    %p257 = por %p255, %p256
    %p258 = scmp.ne.s32.totalorder %s249, %s250
    %p259 = scmp.eq.s32.totalorder %s24, 0
    %p260 = por %p258, %p259
    %p261 = scmp.ne.s32.totalorder %s249, %s250
    %p262 = scmp.eq.s32.totalorder %s25, 1
    %p263 = por %p261, %p262
    %p265 = scmp.ne.s32.totalorder %s250, %s264
    %p266 = scmp.eq.s32.totalorder %s25, 0
    %p267 = por %p265, %p266
    %s269 = sadd.s32 %s268, 1
    %p272 = scmp.eq.s32.totalorder %s19, 1
    %p273 = scmp.ne.s32.totalorder %s268, %s270
    %p274 = scmp.eq.s32.totalorder %s19, 0
    %p275 = por %p273, %p274
    %p276 = scmp.ne.s32.totalorder %s268, %s270
    %p277 = scmp.eq.s32.totalorder %s24, 1
    %p278 = por %p276, %p277
    %p279 = scmp.ne.s32.totalorder %s270, %s271
    %p280 = scmp.eq.s32.totalorder %s24, 0
    %p281 = por %p279, %p280
    %p282 = scmp.ne.s32.totalorder %s270, %s271
    %p283 = scmp.eq.s32.totalorder %s25, 1
    %p284 = por %p282, %p283
    %p286 = scmp.ne.s32.totalorder %s271, %s285
    %p287 = scmp.eq.s32.totalorder %s25, 0
    %p288 = por %p286, %p287
    %s290 = sadd.s32 %s289, 1
    %p293 = scmp.eq.s32.totalorder %s19, 1
    %p294 = scmp.ne.s32.totalorder %s289, %s291
    %p295 = scmp.eq.s32.totalorder %s19, 0
    %p296 = por %p294, %p295
    %p297 = scmp.ne.s32.totalorder %s289, %s291
    %p298 = scmp.eq.s32.totalorder %s24, 1
    %p299 = por %p297, %p298
    %p300 = scmp.ne.s32.totalorder %s291, %s292
    %p301 = scmp.eq.s32.totalorder %s24, 0
    %p302 = por %p300, %p301
    %p303 = scmp.ne.s32.totalorder %s291, %s292
    %p304 = scmp.eq.s32.totalorder %s25, 1
    %p305 = por %p303, %p304
    %p307 = scmp.ne.s32.totalorder %s292, %s306
    %p308 = scmp.eq.s32.totalorder %s25, 0
    %p309 = por %p307, %p308
    %s310 = ssub.s32 %s19, %s26
    %p311 = scmp.eq.s32.totalorder %s310, 0
    %s313 = sadd.s32 %s312, 1
    %s314 = scalar_select %p311, %s312, %s313
    %p317 = pneg %p311
    %p318 = scmp.eq.s32.totalorder %s19, 1
    %p319 = por %p317, %p318
    %p320 = scmp.ne.s32.totalorder %s312, %s315
    %p321 = scmp.eq.s32.totalorder %s19, 0
    %p322 = por %p320, %p321
    %p323 = scmp.ne.s32.totalorder %s312, %s315
    %p324 = scmp.eq.s32.totalorder %s24, 1
    %p325 = por %p323, %p324
    %p326 = scmp.ne.s32.totalorder %s315, %s316
    %p327 = scmp.eq.s32.totalorder %s24, 0
    %p328 = por %p326, %p327
    %p329 = scmp.ne.s32.totalorder %s315, %s316
    %p330 = scmp.eq.s32.totalorder %s25, 1
    %p331 = por %p329, %p330
    %p333 = scmp.ne.s32.totalorder %s316, %s332
    %p334 = scmp.eq.s32.totalorder %s25, 0
    %p335 = por %p333, %p334
    %p336 = scmp.le.s32.totalorder 1, %s19
    %p337 = scmp.lt.s32.totalorder %s19, 3
    %p338 = pnand %p336, %p337
    %p339 = pneg %p338
    // Predicated region
    $region9: #{parcel_model.1} parent=5 // pred_check
      _
    $region10: #{parcel_model.1} parent=5 // pred_check_branch
      %341 = sbr.rel (%p338) target = $region12
    $region11: #{parcel_model.1} parent=5 // pred_region
      %s342 = ssub.s32 %s19, 1
      // Predicated region
      $region13: #{parcel_model.1} parent=11 // pred_check
        %p343 = pneg %p92
      $region14: #{parcel_model.1} parent=11 // pred_check_branch
        %345 = sbr.rel (%p343) target = $region16
      $region15: #{parcel_model.1} parent=11 // pred_region
        _
      $region16: #{parcel_model.1} parent=11 // pred_fallthru
        _
      // Predicated region
      $region17: #{parcel_model.1} parent=11 // pred_check
        %p346 = pneg %p113
      $region18: #{parcel_model.1} parent=11 // pred_check_branch
        %348 = sbr.rel (%p346) target = $region20
      $region19: #{parcel_model.1} parent=11 // pred_region
        _
      $region20: #{parcel_model.1} parent=11 // pred_fallthru
        _
      // Predicated region
      $region21: #{parcel_model.1} parent=11 // pred_check
        %p349 = pneg %p134
      $region22: #{parcel_model.1} parent=11 // pred_check_branch
        %351 = sbr.rel (%p349) target = $region24
      $region23: #{parcel_model.1} parent=11 // pred_region
        _
      $region24: #{parcel_model.1} parent=11 // pred_fallthru
        _
      // Predicated region
      $region25: #{parcel_model.1} parent=11 // pred_check
        %p352 = pneg %p155
      $region26: #{parcel_model.1} parent=11 // pred_check_branch
        %354 = sbr.rel (%p352) target = $region28
      $region27: #{parcel_model.1} parent=11 // pred_region
        _
      $region28: #{parcel_model.1} parent=11 // pred_fallthru
        _
      // Predicated region
      $region29: #{parcel_model.1} parent=11 // pred_check
        %p355 = pneg %p176
      $region30: #{parcel_model.1} parent=11 // pred_check_branch
        %357 = sbr.rel (%p355) target = $region32
      $region31: #{parcel_model.1} parent=11 // pred_region
        _
      $region32: #{parcel_model.1} parent=11 // pred_fallthru
        _
      // Predicated region
      $region33: #{parcel_model.1} parent=11 // pred_check
        %p358 = pneg %p197
      $region34: #{parcel_model.1} parent=11 // pred_check_branch
        %360 = sbr.rel (%p358) target = $region36
      $region35: #{parcel_model.1} parent=11 // pred_region
        _
      $region36: #{parcel_model.1} parent=11 // pred_fallthru
        _
      // Predicated region
      $region37: #{parcel_model.1} parent=11 // pred_check
        %p361 = pneg %p218
      $region38: #{parcel_model.1} parent=11 // pred_check_branch
        %363 = sbr.rel (%p361) target = $region40
      $region39: #{parcel_model.1} parent=11 // pred_region
        _
      $region40: #{parcel_model.1} parent=11 // pred_fallthru
        _
      // Predicated region
      $region41: #{parcel_model.1} parent=11 // pred_check
        %p364 = pneg %p239
      $region42: #{parcel_model.1} parent=11 // pred_check_branch
        %366 = sbr.rel (%p364) target = $region44
      $region43: #{parcel_model.1} parent=11 // pred_region
        _
      $region44: #{parcel_model.1} parent=11 // pred_fallthru
        _
      // Predicated region
      $region45: #{parcel_model.1} parent=11 // pred_check
        %p367 = pneg %p260
      $region46: #{parcel_model.1} parent=11 // pred_check_branch
        %369 = sbr.rel (%p367) target = $region48
      $region47: #{parcel_model.1} parent=11 // pred_region
        _
      $region48: #{parcel_model.1} parent=11 // pred_fallthru
        _
      // Predicated region
      $region49: #{parcel_model.1} parent=11 // pred_check
        %p370 = pneg %p281
      $region50: #{parcel_model.1} parent=11 // pred_check_branch
        %372 = sbr.rel (%p370) target = $region52
      $region51: #{parcel_model.1} parent=11 // pred_region
        _
      $region52: #{parcel_model.1} parent=11 // pred_fallthru
        _
      // Predicated region
      $region53: #{parcel_model.1} parent=11 // pred_check
        %p373 = pneg %p302
      $region54: #{parcel_model.1} parent=11 // pred_check_branch
        %375 = sbr.rel (%p373) target = $region56
      $region55: #{parcel_model.1} parent=11 // pred_region
        _
      $region56: #{parcel_model.1} parent=11 // pred_fallthru
        _
    $region12: #{parcel_model.1} parent=5 // pred_fallthru
      _
    %p376 = scmp.lt.s32.totalorder %s19, 2
    // Predicated region
    $region57: #{parcel_model.1} parent=5 // pred_check
      %p377 = pneg %p376
    $region58: #{parcel_model.1} parent=5 // pred_check_branch
      %379 = sbr.rel (%p377) target = $region60
    $region59: #{parcel_model.1} parent=5 // pred_region
      // Predicated region
      $region61: #{parcel_model.1} parent=59 // pred_check
        %p380 = pneg %p39
      $region62: #{parcel_model.1} parent=59 // pred_check_branch
        %382 = sbr.rel (%p380) target = $region64
      $region63: #{parcel_model.1} parent=59 // pred_region
        %s383 = smul.u32 16, %s19
        %p384 = scmp.lt.s32.totalorder %s383, 31
        %s385 = scalar_select %p384, %s383, 31
        %s386 = smul.addr %s385, 8
        %s387 = scalar_lea.vmem %s0, %s386
        %s388 = smul.u32 16, %s19
      $region64: #{parcel_model.1} parent=59 // pred_fallthru
        _
      // Predicated region
      $region65: #{parcel_model.1} parent=59 // pred_check
        %p389 = pneg %p65
      $region66: #{parcel_model.1} parent=59 // pred_check_branch
        %391 = sbr.rel (%p389) target = $region68
      $region67: #{parcel_model.1} parent=59 // pred_region
        %s392 = smul.u32 16, %s19
        %p393 = scmp.lt.s32.totalorder %s392, 31
        %s394 = scalar_select %p393, %s392, 31
        %s395 = smul.addr %s394, 8
        %s396 = scalar_lea.vmem %s1, %s395
        %s397 = smul.u32 16, %s19
      $region68: #{parcel_model.1} parent=59 // pred_fallthru
        _
    $region60: #{parcel_model.1} parent=5 // pred_fallthru
      _
    %p398 = scmp.le.s32.totalorder 1, %s19
    %p399 = scmp.lt.s32.totalorder %s19, 3
    %p400 = pnand %p398, %p399
    %p401 = pneg %p400
    // Predicated region
    $region69: #{parcel_model.1} parent=5 // pred_check
      _
    $region70: #{parcel_model.1} parent=5 // pred_check_branch
      %403 = sbr.rel (%p400) target = $region72
    $region71: #{parcel_model.1} parent=5 // pred_region
      %s404 = ssub.s32 %s19, 1
      %s405 = smul.u32 16, %s24
      %p406 = scmp.lt.s32.totalorder %s405, 31
      %s407 = scalar_select %p406, %s405, 31
      %s408 = smul.addr %s407, 8
      %s409 = scalar_lea.vmem %s0, %s408
      %p410 = pneg %p45
      %p411 = pneg %p42
      %s412 = smul.u32 16, %s24
      %p413 = scmp.lt.s32.totalorder %s412, 31
      %s414 = scalar_select %p413, %s412, 31
      %s415 = smul.addr %s414, 8
      %s416 = scalar_lea.vmem %s1, %s415
      %p417 = pneg %p71
      %p418 = pneg %p68
      %p419 = pneg %p92
      %p420 = pneg %p89
      %p421 = pneg %p113
      %p422 = pneg %p110
      %p423 = pneg %p134
      %p424 = pneg %p131
      %p425 = pneg %p155
      %p426 = pneg %p152
      %p427 = pneg %p176
      %p428 = pneg %p173
      %p429 = pneg %p197
      %p430 = pneg %p194
      %p431 = pneg %p218
      %p432 = pneg %p215
      %p433 = pneg %p239
      %p434 = pneg %p236
      %p435 = pneg %p260
      %p436 = pneg %p257
      %p437 = pneg %p281
      %p438 = pneg %p278
      %p439 = pneg %p302
      %p440 = pneg %p299
      %p441 = pneg %p328
      %p442 = pneg %p325
      %s443 = smul.u32 2, %s24
      %p444 = scmp.lt.s32.totalorder %s443, 3
      %s445 = scalar_select %p444, %s443, 3
      %s446 = smul.addr %s445, 8
      %s447 = scalar_lea.vmem %s13, %s446
      %s448 = smul.u32 16, %s24
      %p449 = scmp.lt.s32.totalorder %s448, 31
      %s450 = scalar_select %p449, %s448, 31
      %s451 = smul.addr %s450, 8
      %s452 = scalar_lea.vmem %s0, %s451
      %s453 = smul.u32 16, %s24
      %s454 = smul.u32 16, %s24
      %p455 = scmp.lt.s32.totalorder %s454, 31
      %s456 = scalar_select %p455, %s454, 31
      %s457 = smul.addr %s456, 8
      %s458 = scalar_lea.vmem %s1, %s457
      %s459 = smul.u32 16, %s24
      %s460 = smul.u32 2, %s24
      %p461 = scmp.lt.s32.totalorder %s460, 3
      %s462 = scalar_select %p461, %s460, 3
      %s463 = smul.addr %s462, 8
      %s464 = scalar_lea.vmem %s13, %s463
      %s465 = smul.u32 2, %s24
      %v466 = vld [vmem:[%s452] sm:$0xff]
      %v467 = vld [vmem:[%s452 + $0x8] sm:$0xff]
      %v468 = vld [vmem:[%s452 + $0x10] sm:$0xff]
      %v469 = vld [vmem:[%s452 + $0x18] sm:$0xff]
      %v470 = vld [vmem:[%s452 + $0x20] sm:$0xff]
      %v471 = vld [vmem:[%s452 + $0x28] sm:$0xff]
      %v472 = vld [vmem:[%s452 + $0x30] sm:$0xff]
      %v473 = vld [vmem:[%s452 + $0x38] sm:$0xff]
      %v474 = vld [vmem:[%s452 + $0x40] sm:$0xff]
      %v475 = vld [vmem:[%s452 + $0x48] sm:$0xff]
      %v476 = vld [vmem:[%s452 + $0x50] sm:$0xff]
      %v477 = vld [vmem:[%s452 + $0x58] sm:$0xff]
      %v478 = vld [vmem:[%s452 + $0x60] sm:$0xff]
      %v479 = vld [vmem:[%s452 + $0x68] sm:$0xff]
      %v480 = vld [vmem:[%s452 + $0x70] sm:$0xff]
      %v481 = vld [vmem:[%s452 + $0x78] sm:$0xff]
      %v482 = vld [vmem:[%s2] sm:$0xff]
      %v483 = vld [vmem:[%s2 + $0x8] sm:$0xff]
      %v484 = vld [vmem:[%s3] sm:$0x1]
      %v486 = vlaneseq
      %v487 = vshrl.u32 %v486, 7
      %v488 = vsub.s32 0, %v487
      %v489 = vrot.slane %v484, %v488
      %vm491 = vcmask 130048
      %v493 = vsel %vm491, %v466, 0
      %v496 = vsel %vm491, %v467, 0
      %v499 = vsel %vm491, %v468, 0
      %v502 = vsel %vm491, %v469, 0
      %v505 = vsel %vm491, %v470, 0
      %v508 = vsel %vm491, %v471, 0
      %v511 = vsel %vm491, %v472, 0
      %v514 = vsel %vm491, %v473, 0
      %v517 = vsel %vm491, %v474, 0
      %v520 = vsel %vm491, %v475, 0
      %v523 = vsel %vm491, %v476, 0
      %v526 = vsel %vm491, %v477, 0
      %v529 = vsel %vm491, %v478, 0
      %v532 = vsel %vm491, %v479, 0
      %v535 = vsel %vm491, %v480, 0
      %v538 = vsel %vm491, %v481, 0
      %540 = vmatprep.subr.mxu0 0.0
      %541 = vmatpush1.msra.mxu0 %v482
      %542 = vmatprep.subr.mxu0 0.0
      %543 = vmatpush1.msra.mxu0 %v483
      %544 = vmatprep.subr.mxu0 0.0
      %545 = vmatpush1.msra.mxu0 0.0
      %546 = vmatprep.subr.mxu0 0.0
      %547 = vmatpush1.msra.mxu0 0.0
      %548 = vmatprep.subr.mxu0 0.0
      %549 = vmatpush1.msra.mxu0 0.0
      %550 = vmatprep.subr.mxu0 0.0
      %551 = vmatpush1.msra.mxu0 0.0
      %552 = vmatprep.subr.mxu0 0.0
      %553 = vmatpush1.msra.mxu0 0.0
      %554 = vmatprep.subr.mxu0 0.0
      %555 = vmatpush1.msra.mxu0 0.0
      %556 = vmatprep.subr.mxu0 0.0
      %557 = vmatpush1.msra.mxu0 0.0
      %558 = vmatprep.subr.mxu0 0.0
      %559 = vmatpush1.msra.mxu0 0.0
      %560 = vmatprep.subr.mxu0 0.0
      %561 = vmatpush1.msra.mxu0 0.0
      %562 = vmatprep.subr.mxu0 0.0
      %563 = vmatpush1.msra.mxu0 0.0
      %564 = vmatprep.subr.mxu0 0.0
      %565 = vmatpush1.msra.mxu0 0.0
      %566 = vmatprep.subr.mxu0 0.0
      %567 = vmatpush1.msra.mxu0 0.0
      %568 = vmatprep.subr.mxu0 0.0
      %569 = vmatpush1.msra.mxu0 0.0
      %570 = vmatprep.subr.mxu0 0.0
      %571 = vmatpush1.msra.mxu0 0.0
      %572 = vmatprep.subr.mxu0 0.0
      %573 = vmatpush1.msra.mxu0 0.0
      %574 = vmatprep.subr.mxu0 0.0
      %575 = vmatpush1.msra.mxu0 0.0
      %576 = vmatprep.subr.mxu0 0.0
      %577 = vmatpush1.msra.mxu0 0.0
      %578 = vmatprep.subr.mxu0 0.0
      %579 = vmatpush1.msra.mxu0 0.0
      %580 = vmatprep.subr.mxu0 0.0
      %581 = vmatpush1.msra.mxu0 0.0
      %582 = vmatprep.subr.mxu0 0.0
      %583 = vmatpush1.msra.mxu0 0.0
      %584 = vmatprep.subr.mxu0 0.0
      %585 = vmatpush1.msra.mxu0 0.0
      %586 = vmatprep.subr.mxu0 0.0
      %587 = vmatpush1.msra.mxu0 0.0
      %588 = vmatprep.subr.mxu0 0.0
      %589 = vmatpush1.msra.mxu0 0.0
      %590 = vmatprep.subr.mxu0 0.0
      %591 = vmatpush1.msra.mxu0 0.0
      %592 = vmatprep.subr.mxu0 0.0
      %593 = vmatpush1.msra.mxu0 0.0
      %594 = vmatprep.subr.mxu0 0.0
      %595 = vmatpush1.msra.mxu0 0.0
      %596 = vmatprep.subr.mxu0 0.0
      %597 = vmatpush1.msra.mxu0 0.0
      %598 = vmatprep.subr.mxu0 0.0
      %599 = vmatpush1.msra.mxu0 0.0
      %600 = vmatprep.subr.mxu0 0.0
      %601 = vmatpush1.msra.mxu0 0.0
      %602 = vmatprep.subr.mxu0 0.0
      %603 = vmatpush1.msra.mxu0 0.0
      %604 = vmatprep.mubr.f32.mxu0 0.0
      %605 = vmatmul.mubr.f32.gmra.mrb[0].mxu0 %v493
      %v606 = vpop.f32.mrb[0].mxu0
      %v607 = vadd.f32 %v489, %v606
      %v608 = vpop.f32.mrb[0].mxu0
      %609 = vmatprep.mubr.f32.mxu0 0.0
      %610 = vmatmul.mubr.f32.gmra.mrb[0].mxu0 %v496
      %v611 = vpop.f32.mrb[0].mxu0
      %v612 = vadd.f32 %v489, %v611
      %v613 = vpop.f32.mrb[0].mxu0
      %614 = vmatprep.mubr.f32.mxu0 0.0
      %615 = vmatmul.mubr.f32.gmra.mrb[0].mxu0 %v499
      %v616 = vpop.f32.mrb[0].mxu0
      %v617 = vadd.f32 %v489, %v616
      %v618 = vpop.f32.mrb[0].mxu0
      %619 = vmatprep.mubr.f32.mxu0 0.0
      %620 = vmatmul.mubr.f32.gmra.mrb[0].mxu0 %v502
      %v621 = vpop.f32.mrb[0].mxu0
      %v622 = vadd.f32 %v489, %v621
      %v623 = vpop.f32.mrb[0].mxu0
      %624 = vmatprep.mubr.f32.mxu0 0.0
      %625 = vmatmul.mubr.f32.gmra.mrb[0].mxu0 %v505
      %v626 = vpop.f32.mrb[0].mxu0
      %v627 = vadd.f32 %v489, %v626
      %v628 = vpop.f32.mrb[0].mxu0
      %629 = vmatprep.mubr.f32.mxu0 0.0
      %630 = vmatmul.mubr.f32.gmra.mrb[0].mxu0 %v508
      %v631 = vpop.f32.mrb[0].mxu0
      %v632 = vadd.f32 %v489, %v631
      %v633 = vpop.f32.mrb[0].mxu0
      %634 = vmatprep.mubr.f32.mxu0 0.0
      %635 = vmatmul.mubr.f32.gmra.mrb[0].mxu0 %v511
      %v636 = vpop.f32.mrb[0].mxu0
      %v637 = vadd.f32 %v489, %v636
      %v638 = vpop.f32.mrb[0].mxu0
      %639 = vmatprep.mubr.f32.mxu0 0.0
      %640 = vmatmul.mubr.f32.gmra.mrb[0].mxu0 %v514
      %v641 = vpop.f32.mrb[0].mxu0
      %v642 = vadd.f32 %v489, %v641
      %v643 = vpop.f32.mrb[0].mxu0
      %644 = vmatprep.mubr.f32.mxu0 0.0
      %645 = vmatmul.mubr.f32.gmra.mrb[0].mxu0 %v517
      %v646 = vpop.f32.mrb[0].mxu0
      %v647 = vadd.f32 %v489, %v646
      %v648 = vpop.f32.mrb[0].mxu0
      %649 = vmatprep.mubr.f32.mxu0 0.0
      %650 = vmatmul.mubr.f32.gmra.mrb[0].mxu0 %v520
      %v651 = vpop.f32.mrb[0].mxu0
      %v652 = vadd.f32 %v489, %v651
      %v653 = vpop.f32.mrb[0].mxu0
      %654 = vmatprep.mubr.f32.mxu0 0.0
      %655 = vmatmul.mubr.f32.gmra.mrb[0].mxu0 %v523
      %v656 = vpop.f32.mrb[0].mxu0
      %v657 = vadd.f32 %v489, %v656
      %v658 = vpop.f32.mrb[0].mxu0
      %659 = vmatprep.mubr.f32.mxu0 0.0
      %660 = vmatmul.mubr.f32.gmra.mrb[0].mxu0 %v526
      %v661 = vpop.f32.mrb[0].mxu0
      %v662 = vadd.f32 %v489, %v661
      %v663 = vpop.f32.mrb[0].mxu0
      %664 = vmatprep.mubr.f32.mxu0 0.0
      %665 = vmatmul.mubr.f32.gmra.mrb[0].mxu0 %v529
      %v666 = vpop.f32.mrb[0].mxu0
      %v667 = vadd.f32 %v489, %v666
      %v668 = vpop.f32.mrb[0].mxu0
      %669 = vmatprep.mubr.f32.mxu0 0.0
      %670 = vmatmul.mubr.f32.gmra.mrb[0].mxu0 %v532
      %v671 = vpop.f32.mrb[0].mxu0
      %v672 = vadd.f32 %v489, %v671
      %v673 = vpop.f32.mrb[0].mxu0
      %674 = vmatprep.mubr.f32.mxu0 0.0
      %675 = vmatmul.mubr.f32.gmra.mrb[0].mxu0 %v535
      %v676 = vpop.f32.mrb[0].mxu0
      %v677 = vadd.f32 %v489, %v676
      %v678 = vpop.f32.mrb[0].mxu0
      %679 = vmatprep.mubr.f32.mxu0 0.0
      %680 = vmatmul.mubr.f32.gmra.mrb[0].mxu0 %v538
      %v681 = vpop.f32.mrb[0].mxu0
      %v682 = vadd.f32 %v489, %v681
      %v683 = vpop.f32.mrb[0].mxu0
      %684 = vdwg.mxu0
      %v685 = vmax.f32 %v607, 0.0
      %v686 = vmax.f32 %v612, 0.0
      %v687 = vmax.f32 %v617, 0.0
      %v688 = vmax.f32 %v622, 0.0
      %v689 = vmax.f32 %v627, 0.0
      %v690 = vmax.f32 %v632, 0.0
      %v691 = vmax.f32 %v637, 0.0
      %v692 = vmax.f32 %v642, 0.0
      %v693 = vmax.f32 %v647, 0.0
      %v694 = vmax.f32 %v652, 0.0
      %v695 = vmax.f32 %v657, 0.0
      %v696 = vmax.f32 %v662, 0.0
      %v697 = vmax.f32 %v667, 0.0
      %v698 = vmax.f32 %v672, 0.0
      %v699 = vmax.f32 %v677, 0.0
      %v700 = vmax.f32 %v682, 0.0
      %v701 = vld [vmem:[%s4] sm:$0xff]
      %v702 = vld [vmem:[%s4 + $0x8] sm:$0xff]
      %v703 = vld [vmem:[%s4 + $0x10] sm:$0xff]
      %v704 = vld [vmem:[%s4 + $0x18] sm:$0xff]
      %v705 = vld [vmem:[%s4 + $0x20] sm:$0xff]
      %v706 = vld [vmem:[%s4 + $0x28] sm:$0xff]
      %v707 = vld [vmem:[%s4 + $0x30] sm:$0xff]
      %v708 = vld [vmem:[%s4 + $0x38] sm:$0xff]
      %v709 = vld [vmem:[%s5] sm:$0x1]
      %v711 = vlaneseq
      %v712 = vshrl.u32 %v711, 7
      %v713 = vsub.s32 0, %v712
      %v714 = vrot.slane %v709, %v713
      %vm716 = vcmask 523264
      %v718 = vsel %vm716, %v685, 0
      %v721 = vsel %vm716, %v686, 0
      %v724 = vsel %vm716, %v687, 0
      %v727 = vsel %vm716, %v688, 0
      %v730 = vsel %vm716, %v689, 0
      %v733 = vsel %vm716, %v690, 0
      %v736 = vsel %vm716, %v691, 0
      %v739 = vsel %vm716, %v692, 0
      %v742 = vsel %vm716, %v693, 0
      %v745 = vsel %vm716, %v694, 0
      %v748 = vsel %vm716, %v695, 0
      %v751 = vsel %vm716, %v696, 0
      %v754 = vsel %vm716, %v697, 0
      %v757 = vsel %vm716, %v698, 0
      %v760 = vsel %vm716, %v699, 0
      %v763 = vsel %vm716, %v700, 0
      %765 = vmatprep.subr.mxu0 0.0
      %766 = vmatpush1.msra.mxu0 %v701
      %767 = vmatprep.subr.mxu0 0.0
      %768 = vmatpush1.msra.mxu0 %v702
      %769 = vmatprep.subr.mxu0 0.0
      %770 = vmatpush1.msra.mxu0 %v703
      %771 = vmatprep.subr.mxu0 0.0
      %772 = vmatpush1.msra.mxu0 %v704
      %773 = vmatprep.subr.mxu0 0.0
      %774 = vmatpush1.msra.mxu0 %v705
      %775 = vmatprep.subr.mxu0 0.0
      %776 = vmatpush1.msra.mxu0 %v706
      %777 = vmatprep.subr.mxu0 0.0
      %778 = vmatpush1.msra.mxu0 %v707
      %779 = vmatprep.subr.mxu0 0.0
      %780 = vmatpush1.msra.mxu0 %v708
      %781 = vmatprep.subr.mxu0 0.0
      %782 = vmatpush1.msra.mxu0 0.0
      %783 = vmatprep.subr.mxu0 0.0
      %784 = vmatpush1.msra.mxu0 0.0
      %785 = vmatprep.subr.mxu0 0.0
      %786 = vmatpush1.msra.mxu0 0.0
      %787 = vmatprep.subr.mxu0 0.0
      %788 = vmatpush1.msra.mxu0 0.0
      %789 = vmatprep.subr.mxu0 0.0
      %790 = vmatpush1.msra.mxu0 0.0
      %791 = vmatprep.subr.mxu0 0.0
      %792 = vmatpush1.msra.mxu0 0.0
      %793 = vmatprep.subr.mxu0 0.0
      %794 = vmatpush1.msra.mxu0 0.0
      %795 = vmatprep.subr.mxu0 0.0
      %796 = vmatpush1.msra.mxu0 0.0
      %797 = vmatprep.subr.mxu0 0.0
      %798 = vmatpush1.msra.mxu0 0.0
      %799 = vmatprep.subr.mxu0 0.0
      %800 = vmatpush1.msra.mxu0 0.0
      %801 = vmatprep.subr.mxu0 0.0
      %802 = vmatpush1.msra.mxu0 0.0
      %803 = vmatprep.subr.mxu0 0.0
      %804 = vmatpush1.msra.mxu0 0.0
      %805 = vmatprep.subr.mxu0 0.0
      %806 = vmatpush1.msra.mxu0 0.0
      %807 = vmatprep.subr.mxu0 0.0
      %808 = vmatpush1.msra.mxu0 0.0
      %809 = vmatprep.subr.mxu0 0.0
      %810 = vmatpush1.msra.mxu0 0.0
      %811 = vmatprep.subr.mxu0 0.0
      %812 = vmatpush1.msra.mxu0 0.0
      %813 = vmatprep.subr.mxu0 0.0
      %814 = vmatpush1.msra.mxu0 0.0
      %815 = vmatprep.subr.mxu0 0.0
      %816 = vmatpush1.msra.mxu0 0.0
      %817 = vmatprep.subr.mxu0 0.0
      %818 = vmatpush1.msra.mxu0 0.0
      %819 = vmatprep.subr.mxu0 0.0
      %820 = vmatpush1.msra.mxu0 0.0
      %821 = vmatprep.subr.mxu0 0.0
      %822 = vmatpush1.msra.mxu0 0.0
      %823 = vmatprep.subr.mxu0 0.0
      %824 = vmatpush1.msra.mxu0 0.0
      %825 = vmatprep.subr.mxu0 0.0
      %826 = vmatpush1.msra.mxu0 0.0
      %827 = vmatprep.subr.mxu0 0.0
      %828 = vmatpush1.msra.mxu0 0.0
      %829 = vmatprep.mubr.f32.mxu0 0.0
      %830 = vmatmul.mubr.f32.gmra.mrb[0].mxu0 %v718
      %v831 = vpop.f32.mrb[0].mxu0
      %v832 = vadd.f32 %v714, %v831
      %v833 = vpop.f32.mrb[0].mxu0
      %834 = vmatprep.mubr.f32.mxu0 0.0
      %835 = vmatmul.mubr.f32.gmra.mrb[0].mxu0 %v721
      %v836 = vpop.f32.mrb[0].mxu0
      %v837 = vadd.f32 %v714, %v836
      %v838 = vpop.f32.mrb[0].mxu0
      %839 = vmatprep.mubr.f32.mxu0 0.0
      %840 = vmatmul.mubr.f32.gmra.mrb[0].mxu0 %v724
      %v841 = vpop.f32.mrb[0].mxu0
      %v842 = vadd.f32 %v714, %v841
      %v843 = vpop.f32.mrb[0].mxu0
      %844 = vmatprep.mubr.f32.mxu0 0.0
      %845 = vmatmul.mubr.f32.gmra.mrb[0].mxu0 %v727
      %v846 = vpop.f32.mrb[0].mxu0
      %v847 = vadd.f32 %v714, %v846
      %v848 = vpop.f32.mrb[0].mxu0
      %849 = vmatprep.mubr.f32.mxu0 0.0
      %850 = vmatmul.mubr.f32.gmra.mrb[0].mxu0 %v730
      %v851 = vpop.f32.mrb[0].mxu0
      %v852 = vadd.f32 %v714, %v851
      %v853 = vpop.f32.mrb[0].mxu0
      %854 = vmatprep.mubr.f32.mxu0 0.0
      %855 = vmatmul.mubr.f32.gmra.mrb[0].mxu0 %v733
      %v856 = vpop.f32.mrb[0].mxu0
      %v857 = vadd.f32 %v714, %v856
      %v858 = vpop.f32.mrb[0].mxu0
      %859 = vmatprep.mubr.f32.mxu0 0.0
      %860 = vmatmul.mubr.f32.gmra.mrb[0].mxu0 %v736
      %v861 = vpop.f32.mrb[0].mxu0
      %v862 = vadd.f32 %v714, %v861
      %v863 = vpop.f32.mrb[0].mxu0
      %864 = vmatprep.mubr.f32.mxu0 0.0
      %865 = vmatmul.mubr.f32.gmra.mrb[0].mxu0 %v739
      %v866 = vpop.f32.mrb[0].mxu0
      %v867 = vadd.f32 %v714, %v866
      %v868 = vpop.f32.mrb[0].mxu0
      %869 = vmatprep.mubr.f32.mxu0 0.0
      %870 = vmatmul.mubr.f32.gmra.mrb[0].mxu0 %v742
      %v871 = vpop.f32.mrb[0].mxu0
      %v872 = vadd.f32 %v714, %v871
      %v873 = vpop.f32.mrb[0].mxu0
      %874 = vmatprep.mubr.f32.mxu0 0.0
      %875 = vmatmul.mubr.f32.gmra.mrb[0].mxu0 %v745
      %v876 = vpop.f32.mrb[0].mxu0
      %v877 = vadd.f32 %v714, %v876
      %v878 = vpop.f32.mrb[0].mxu0
      %879 = vmatprep.mubr.f32.mxu0 0.0
      %880 = vmatmul.mubr.f32.gmra.mrb[0].mxu0 %v748
      %v881 = vpop.f32.mrb[0].mxu0
      %v882 = vadd.f32 %v714, %v881
      %v883 = vpop.f32.mrb[0].mxu0
      %884 = vmatprep.mubr.f32.mxu0 0.0
      %885 = vmatmul.mubr.f32.gmra.mrb[0].mxu0 %v751
      %v886 = vpop.f32.mrb[0].mxu0
      %v887 = vadd.f32 %v714, %v886
      %v888 = vpop.f32.mrb[0].mxu0
      %889 = vmatprep.mubr.f32.mxu0 0.0
      %890 = vmatmul.mubr.f32.gmra.mrb[0].mxu0 %v754
      %v891 = vpop.f32.mrb[0].mxu0
      %v892 = vadd.f32 %v714, %v891
      %v893 = vpop.f32.mrb[0].mxu0
      %894 = vmatprep.mubr.f32.mxu0 0.0
      %895 = vmatmul.mubr.f32.gmra.mrb[0].mxu0 %v757
      %v896 = vpop.f32.mrb[0].mxu0
      %v897 = vadd.f32 %v714, %v896
      %v898 = vpop.f32.mrb[0].mxu0
      %899 = vmatprep.mubr.f32.mxu0 0.0
      %900 = vmatmul.mubr.f32.gmra.mrb[0].mxu0 %v760
      %v901 = vpop.f32.mrb[0].mxu0
      %v902 = vadd.f32 %v714, %v901
      %v903 = vpop.f32.mrb[0].mxu0
      %904 = vmatprep.mubr.f32.mxu0 0.0
      %905 = vmatmul.mubr.f32.gmra.mrb[0].mxu0 %v763
      %v906 = vpop.f32.mrb[0].mxu0
      %v907 = vadd.f32 %v714, %v906
      %v908 = vpop.f32.mrb[0].mxu0
      %909 = vdwg.mxu0
      %v910 = vld [vmem:[%s458] sm:$0xff]
      %v911 = vld [vmem:[%s458 + $0x8] sm:$0xff]
      %v912 = vld [vmem:[%s458 + $0x10] sm:$0xff]
      %v913 = vld [vmem:[%s458 + $0x18] sm:$0xff]
      %v914 = vld [vmem:[%s458 + $0x20] sm:$0xff]
      %v915 = vld [vmem:[%s458 + $0x28] sm:$0xff]
      %v916 = vld [vmem:[%s458 + $0x30] sm:$0xff]
      %v917 = vld [vmem:[%s458 + $0x38] sm:$0xff]
      %v918 = vld [vmem:[%s458 + $0x40] sm:$0xff]
      %v919 = vld [vmem:[%s458 + $0x48] sm:$0xff]
      %v920 = vld [vmem:[%s458 + $0x50] sm:$0xff]
      %v921 = vld [vmem:[%s458 + $0x58] sm:$0xff]
      %v922 = vld [vmem:[%s458 + $0x60] sm:$0xff]
      %v923 = vld [vmem:[%s458 + $0x68] sm:$0xff]
      %v924 = vld [vmem:[%s458 + $0x70] sm:$0xff]
      %v925 = vld [vmem:[%s458 + $0x78] sm:$0xff]
      %v926 = vadd.f32 %v832, %v910
      %v927 = vadd.f32 %v837, %v911
      %v928 = vadd.f32 %v842, %v912
      %v929 = vadd.f32 %v847, %v913
      %v930 = vadd.f32 %v852, %v914
      %v931 = vadd.f32 %v857, %v915
      %v932 = vadd.f32 %v862, %v916
      %v933 = vadd.f32 %v867, %v917
      %v934 = vadd.f32 %v872, %v918
      %v935 = vadd.f32 %v877, %v919
      %v936 = vadd.f32 %v882, %v920
      %v937 = vadd.f32 %v887, %v921
      %v938 = vadd.f32 %v892, %v922
      %v939 = vadd.f32 %v897, %v923
      %v940 = vadd.f32 %v902, %v924
      %v941 = vadd.f32 %v907, %v925
      %v942 = vld [vmem:[%s6] sm:$0xff]
      %v943 = vld [vmem:[%s6 + $0x8] sm:$0xff]
      %v944 = vld [vmem:[%s6 + $0x10] sm:$0xff]
      %v945 = vld [vmem:[%s6 + $0x18] sm:$0xff]
      %vm946 = vcmask 261120
      %v948 = vsel %vm946, %v926, 0
      %v951 = vsel %vm946, %v927, 0
      %v954 = vsel %vm946, %v928, 0
      %v957 = vsel %vm946, %v929, 0
      %v960 = vsel %vm946, %v930, 0
      %v963 = vsel %vm946, %v931, 0
      %v966 = vsel %vm946, %v932, 0
      %v969 = vsel %vm946, %v933, 0
      %v972 = vsel %vm946, %v934, 0
      %v975 = vsel %vm946, %v935, 0
      %v978 = vsel %vm946, %v936, 0
      %v981 = vsel %vm946, %v937, 0
      %v984 = vsel %vm946, %v938, 0
      %v987 = vsel %vm946, %v939, 0
      %v990 = vsel %vm946, %v940, 0
      %v993 = vsel %vm946, %v941, 0
      %995 = vmatprep.subr.mxu0 0.0
      %996 = vmatpush1.msra.mxu0 %v942
      %997 = vmatprep.subr.mxu0 0.0
      %998 = vmatpush1.msra.mxu0 %v943
      %999 = vmatprep.subr.mxu0 0.0
      %1000 = vmatpush1.msra.mxu0 %v944
      %1001 = vmatprep.subr.mxu0 0.0
      %1002 = vmatpush1.msra.mxu0 %v945
      %1003 = vmatprep.subr.mxu0 0.0
      %1004 = vmatpush1.msra.mxu0 0.0
      %1005 = vmatprep.subr.mxu0 0.0
      %1006 = vmatpush1.msra.mxu0 0.0
      %1007 = vmatprep.subr.mxu0 0.0
      %1008 = vmatpush1.msra.mxu0 0.0
      %1009 = vmatprep.subr.mxu0 0.0
      %1010 = vmatpush1.msra.mxu0 0.0
      %1011 = vmatprep.subr.mxu0 0.0
      %1012 = vmatpush1.msra.mxu0 0.0
      %1013 = vmatprep.subr.mxu0 0.0
      %1014 = vmatpush1.msra.mxu0 0.0
      %1015 = vmatprep.subr.mxu0 0.0
      %1016 = vmatpush1.msra.mxu0 0.0
      %1017 = vmatprep.subr.mxu0 0.0
      %1018 = vmatpush1.msra.mxu0 0.0
      %1019 = vmatprep.subr.mxu0 0.0
      %1020 = vmatpush1.msra.mxu0 0.0
      %1021 = vmatprep.subr.mxu0 0.0
      %1022 = vmatpush1.msra.mxu0 0.0
      %1023 = vmatprep.subr.mxu0 0.0
      %1024 = vmatpush1.msra.mxu0 0.0
      %1025 = vmatprep.subr.mxu0 0.0
      %1026 = vmatpush1.msra.mxu0 0.0
      %1027 = vmatprep.subr.mxu0 0.0
      %1028 = vmatpush1.msra.mxu0 0.0
      %1029 = vmatprep.subr.mxu0 0.0
      %1030 = vmatpush1.msra.mxu0 0.0
      %1031 = vmatprep.subr.mxu0 0.0
      %1032 = vmatpush1.msra.mxu0 0.0
      %1033 = vmatprep.subr.mxu0 0.0
      %1034 = vmatpush1.msra.mxu0 0.0
      %1035 = vmatprep.subr.mxu0 0.0
      %1036 = vmatpush1.msra.mxu0 0.0
      %1037 = vmatprep.subr.mxu0 0.0
      %1038 = vmatpush1.msra.mxu0 0.0
      %1039 = vmatprep.subr.mxu0 0.0
      %1040 = vmatpush1.msra.mxu0 0.0
      %1041 = vmatprep.subr.mxu0 0.0
      %1042 = vmatpush1.msra.mxu0 0.0
      %1043 = vmatprep.subr.mxu0 0.0
      %1044 = vmatpush1.msra.mxu0 0.0
      %1045 = vmatprep.subr.mxu0 0.0
      %1046 = vmatpush1.msra.mxu0 0.0
      %1047 = vmatprep.subr.mxu0 0.0
      %1048 = vmatpush1.msra.mxu0 0.0
      %1049 = vmatprep.subr.mxu0 0.0
      %1050 = vmatpush1.msra.mxu0 0.0
      %1051 = vmatprep.subr.mxu0 0.0
      %1052 = vmatpush1.msra.mxu0 0.0
      %1053 = vmatprep.subr.mxu0 0.0
      %1054 = vmatpush1.msra.mxu0 0.0
      %1055 = vmatprep.subr.mxu0 0.0
      %1056 = vmatpush1.msra.mxu0 0.0
      %1057 = vmatprep.subr.mxu0 0.0
      %1058 = vmatpush1.msra.mxu0 0.0
      %1059 = vmatprep.mubr.f32.mxu0 0.0
      %1060 = vmatmul.mubr.f32.gmra.mrb[0].mxu0 %v948
      %v1061 = vpop.f32.mrb[0].mxu0
      %v1062 = vadd.f32 0.0, %v1061
      %v1063 = vpop.f32.mrb[0].mxu0
      %1064 = vmatprep.mubr.f32.mxu0 0.0
      %1065 = vmatmul.mubr.f32.gmra.mrb[0].mxu0 %v951
      %v1066 = vpop.f32.mrb[0].mxu0
      %v1067 = vadd.f32 0.0, %v1066
      %v1068 = vpop.f32.mrb[0].mxu0
      %1069 = vmatprep.mubr.f32.mxu0 0.0
      %1070 = vmatmul.mubr.f32.gmra.mrb[0].mxu0 %v954
      %v1071 = vpop.f32.mrb[0].mxu0
      %v1072 = vadd.f32 0.0, %v1071
      %v1073 = vpop.f32.mrb[0].mxu0
      %1074 = vmatprep.mubr.f32.mxu0 0.0
      %1075 = vmatmul.mubr.f32.gmra.mrb[0].mxu0 %v957
      %v1076 = vpop.f32.mrb[0].mxu0
      %v1077 = vadd.f32 0.0, %v1076
      %v1078 = vpop.f32.mrb[0].mxu0
      %1079 = vmatprep.mubr.f32.mxu0 0.0
      %1080 = vmatmul.mubr.f32.gmra.mrb[0].mxu0 %v960
      %v1081 = vpop.f32.mrb[0].mxu0
      %v1082 = vadd.f32 0.0, %v1081
      %v1083 = vpop.f32.mrb[0].mxu0
      %1084 = vmatprep.mubr.f32.mxu0 0.0
      %1085 = vmatmul.mubr.f32.gmra.mrb[0].mxu0 %v963
      %v1086 = vpop.f32.mrb[0].mxu0
      %v1087 = vadd.f32 0.0, %v1086
      %v1088 = vpop.f32.mrb[0].mxu0
      %1089 = vmatprep.mubr.f32.mxu0 0.0
      %1090 = vmatmul.mubr.f32.gmra.mrb[0].mxu0 %v966
      %v1091 = vpop.f32.mrb[0].mxu0
      %v1092 = vadd.f32 0.0, %v1091
      %v1093 = vpop.f32.mrb[0].mxu0
      %1094 = vmatprep.mubr.f32.mxu0 0.0
      %1095 = vmatmul.mubr.f32.gmra.mrb[0].mxu0 %v969
      %v1096 = vpop.f32.mrb[0].mxu0
      %v1097 = vadd.f32 0.0, %v1096
      %v1098 = vpop.f32.mrb[0].mxu0
      %1099 = vmatprep.mubr.f32.mxu0 0.0
      %1100 = vmatmul.mubr.f32.gmra.mrb[0].mxu0 %v972
      %v1101 = vpop.f32.mrb[0].mxu0
      %v1102 = vadd.f32 0.0, %v1101
      %v1103 = vpop.f32.mrb[0].mxu0
      %1104 = vmatprep.mubr.f32.mxu0 0.0
      %1105 = vmatmul.mubr.f32.gmra.mrb[0].mxu0 %v975
      %v1106 = vpop.f32.mrb[0].mxu0
      %v1107 = vadd.f32 0.0, %v1106
      %v1108 = vpop.f32.mrb[0].mxu0
      %1109 = vmatprep.mubr.f32.mxu0 0.0
      %1110 = vmatmul.mubr.f32.gmra.mrb[0].mxu0 %v978
      %v1111 = vpop.f32.mrb[0].mxu0
      %v1112 = vadd.f32 0.0, %v1111
      %v1113 = vpop.f32.mrb[0].mxu0
      %1114 = vmatprep.mubr.f32.mxu0 0.0
      %1115 = vmatmul.mubr.f32.gmra.mrb[0].mxu0 %v981
      %v1116 = vpop.f32.mrb[0].mxu0
      %v1117 = vadd.f32 0.0, %v1116
      %v1118 = vpop.f32.mrb[0].mxu0
      %1119 = vmatprep.mubr.f32.mxu0 0.0
      %1120 = vmatmul.mubr.f32.gmra.mrb[0].mxu0 %v984
      %v1121 = vpop.f32.mrb[0].mxu0
      %v1122 = vadd.f32 0.0, %v1121
      %v1123 = vpop.f32.mrb[0].mxu0
      %1124 = vmatprep.mubr.f32.mxu0 0.0
      %1125 = vmatmul.mubr.f32.gmra.mrb[0].mxu0 %v987
      %v1126 = vpop.f32.mrb[0].mxu0
      %v1127 = vadd.f32 0.0, %v1126
      %v1128 = vpop.f32.mrb[0].mxu0
      %1129 = vmatprep.mubr.f32.mxu0 0.0
      %1130 = vmatmul.mubr.f32.gmra.mrb[0].mxu0 %v990
      %v1131 = vpop.f32.mrb[0].mxu0
      %v1132 = vadd.f32 0.0, %v1131
      %v1133 = vpop.f32.mrb[0].mxu0
      %1134 = vmatprep.mubr.f32.mxu0 0.0
      %1135 = vmatmul.mubr.f32.gmra.mrb[0].mxu0 %v993
      %v1136 = vpop.f32.mrb[0].mxu0
      %v1137 = vadd.f32 0.0, %v1136
      %v1138 = vpop.f32.mrb[0].mxu0
      %1139 = vdwg.mxu0
      %v1140 = vld [vmem:[%s7] sm:$0xff]
      %v1141 = vld [vmem:[%s7 + $0x8] sm:$0xff]
      %v1142 = vld [vmem:[%s7 + $0x10] sm:$0xff]
      %v1143 = vld [vmem:[%s7 + $0x18] sm:$0xff]
      %1144 = vmatprep.subr.mxu0 0.0
      %1145 = vmatpush1.msra.mxu0 %v1140
      %1146 = vmatprep.subr.mxu0 0.0
      %1147 = vmatpush1.msra.mxu0 %v1141
      %1148 = vmatprep.subr.mxu0 0.0
      %1149 = vmatpush1.msra.mxu0 %v1142
      %1150 = vmatprep.subr.mxu0 0.0
      %1151 = vmatpush1.msra.mxu0 %v1143
      %1152 = vmatprep.subr.mxu0 0.0
      %1153 = vmatpush1.msra.mxu0 0.0
      %1154 = vmatprep.subr.mxu0 0.0
      %1155 = vmatpush1.msra.mxu0 0.0
      %1156 = vmatprep.subr.mxu0 0.0
      %1157 = vmatpush1.msra.mxu0 0.0
      %1158 = vmatprep.subr.mxu0 0.0
      %1159 = vmatpush1.msra.mxu0 0.0
      %1160 = vmatprep.subr.mxu0 0.0
      %1161 = vmatpush1.msra.mxu0 0.0
      %1162 = vmatprep.subr.mxu0 0.0
      %1163 = vmatpush1.msra.mxu0 0.0
      %1164 = vmatprep.subr.mxu0 0.0
      %1165 = vmatpush1.msra.mxu0 0.0
      %1166 = vmatprep.subr.mxu0 0.0
      %1167 = vmatpush1.msra.mxu0 0.0
      %1168 = vmatprep.subr.mxu0 0.0
      %1169 = vmatpush1.msra.mxu0 0.0
      %1170 = vmatprep.subr.mxu0 0.0
      %1171 = vmatpush1.msra.mxu0 0.0
      %1172 = vmatprep.subr.mxu0 0.0
      %1173 = vmatpush1.msra.mxu0 0.0
      %1174 = vmatprep.subr.mxu0 0.0
      %1175 = vmatpush1.msra.mxu0 0.0
      %1176 = vmatprep.subr.mxu0 0.0
      %1177 = vmatpush1.msra.mxu0 0.0
      %1178 = vmatprep.subr.mxu0 0.0
      %1179 = vmatpush1.msra.mxu0 0.0
      %1180 = vmatprep.subr.mxu0 0.0
      %1181 = vmatpush1.msra.mxu0 0.0
      %1182 = vmatprep.subr.mxu0 0.0
      %1183 = vmatpush1.msra.mxu0 0.0
      %1184 = vmatprep.subr.mxu0 0.0
      %1185 = vmatpush1.msra.mxu0 0.0
      %1186 = vmatprep.subr.mxu0 0.0
      %1187 = vmatpush1.msra.mxu0 0.0
      %1188 = vmatprep.subr.mxu0 0.0
      %1189 = vmatpush1.msra.mxu0 0.0
      %1190 = vmatprep.subr.mxu0 0.0
      %1191 = vmatpush1.msra.mxu0 0.0
      %1192 = vmatprep.subr.mxu0 0.0
      %1193 = vmatpush1.msra.mxu0 0.0
      %1194 = vmatprep.subr.mxu0 0.0
      %1195 = vmatpush1.msra.mxu0 0.0
      %1196 = vmatprep.subr.mxu0 0.0
      %1197 = vmatpush1.msra.mxu0 0.0
      %1198 = vmatprep.subr.mxu0 0.0
      %1199 = vmatpush1.msra.mxu0 0.0
      %1200 = vmatprep.subr.mxu0 0.0
      %1201 = vmatpush1.msra.mxu0 0.0
      %1202 = vmatprep.subr.mxu0 0.0
      %1203 = vmatpush1.msra.mxu0 0.0
      %1204 = vmatprep.subr.mxu0 0.0
      %1205 = vmatpush1.msra.mxu0 0.0
      %1206 = vmatprep.subr.mxu0 0.0
      %1207 = vmatpush1.msra.mxu0 0.0
      %1208 = vmatprep.mubr.f32.mxu0 0.0
      %1209 = vmatmul.mubr.f32.gmra.mrb[0].mxu0 %v948
      %v1210 = vpop.f32.mrb[0].mxu0
      %v1211 = vadd.f32 0.0, %v1210
      %v1212 = vpop.f32.mrb[0].mxu0
      %1213 = vmatprep.mubr.f32.mxu0 0.0
      %1214 = vmatmul.mubr.f32.gmra.mrb[0].mxu0 %v951
      %v1215 = vpop.f32.mrb[0].mxu0
      %v1216 = vadd.f32 0.0, %v1215
      %v1217 = vpop.f32.mrb[0].mxu0
      %1218 = vmatprep.mubr.f32.mxu0 0.0
      %1219 = vmatmul.mubr.f32.gmra.mrb[0].mxu0 %v954
      %v1220 = vpop.f32.mrb[0].mxu0
      %v1221 = vadd.f32 0.0, %v1220
      %v1222 = vpop.f32.mrb[0].mxu0
      %1223 = vmatprep.mubr.f32.mxu0 0.0
      %1224 = vmatmul.mubr.f32.gmra.mrb[0].mxu0 %v957
      %v1225 = vpop.f32.mrb[0].mxu0
      %v1226 = vadd.f32 0.0, %v1225
      %v1227 = vpop.f32.mrb[0].mxu0
      %1228 = vmatprep.mubr.f32.mxu0 0.0
      %1229 = vmatmul.mubr.f32.gmra.mrb[0].mxu0 %v960
      %v1230 = vpop.f32.mrb[0].mxu0
      %v1231 = vadd.f32 0.0, %v1230
      %v1232 = vpop.f32.mrb[0].mxu0
      %1233 = vmatprep.mubr.f32.mxu0 0.0
      %1234 = vmatmul.mubr.f32.gmra.mrb[0].mxu0 %v963
      %v1235 = vpop.f32.mrb[0].mxu0
      %v1236 = vadd.f32 0.0, %v1235
      %v1237 = vpop.f32.mrb[0].mxu0
      %1238 = vmatprep.mubr.f32.mxu0 0.0
      %1239 = vmatmul.mubr.f32.gmra.mrb[0].mxu0 %v966
      %v1240 = vpop.f32.mrb[0].mxu0
      %v1241 = vadd.f32 0.0, %v1240
      %v1242 = vpop.f32.mrb[0].mxu0
      %1243 = vmatprep.mubr.f32.mxu0 0.0
      %1244 = vmatmul.mubr.f32.gmra.mrb[0].mxu0 %v969
      %v1245 = vpop.f32.mrb[0].mxu0
      %v1246 = vadd.f32 0.0, %v1245
      %v1247 = vpop.f32.mrb[0].mxu0
      %1248 = vmatprep.mubr.f32.mxu0 0.0
      %1249 = vmatmul.mubr.f32.gmra.mrb[0].mxu0 %v972
      %v1250 = vpop.f32.mrb[0].mxu0
      %v1251 = vadd.f32 0.0, %v1250
      %v1252 = vpop.f32.mrb[0].mxu0
      %1253 = vmatprep.mubr.f32.mxu0 0.0
      %1254 = vmatmul.mubr.f32.gmra.mrb[0].mxu0 %v975
      %v1255 = vpop.f32.mrb[0].mxu0
      %v1256 = vadd.f32 0.0, %v1255
      %v1257 = vpop.f32.mrb[0].mxu0
      %1258 = vmatprep.mubr.f32.mxu0 0.0
      %1259 = vmatmul.mubr.f32.gmra.mrb[0].mxu0 %v978
      %v1260 = vpop.f32.mrb[0].mxu0
      %v1261 = vadd.f32 0.0, %v1260
      %v1262 = vpop.f32.mrb[0].mxu0
      %1263 = vmatprep.mubr.f32.mxu0 0.0
      %1264 = vmatmul.mubr.f32.gmra.mrb[0].mxu0 %v981
      %v1265 = vpop.f32.mrb[0].mxu0
      %v1266 = vadd.f32 0.0, %v1265
      %v1267 = vpop.f32.mrb[0].mxu0
      %1268 = vmatprep.mubr.f32.mxu0 0.0
      %1269 = vmatmul.mubr.f32.gmra.mrb[0].mxu0 %v984
      %v1270 = vpop.f32.mrb[0].mxu0
      %v1271 = vadd.f32 0.0, %v1270
      %v1272 = vpop.f32.mrb[0].mxu0
      %1273 = vmatprep.mubr.f32.mxu0 0.0
      %1274 = vmatmul.mubr.f32.gmra.mrb[0].mxu0 %v987
      %v1275 = vpop.f32.mrb[0].mxu0
      %v1276 = vadd.f32 0.0, %v1275
      %v1277 = vpop.f32.mrb[0].mxu0
      %1278 = vmatprep.mubr.f32.mxu0 0.0
      %1279 = vmatmul.mubr.f32.gmra.mrb[0].mxu0 %v990
      %v1280 = vpop.f32.mrb[0].mxu0
      %v1281 = vadd.f32 0.0, %v1280
      %v1282 = vpop.f32.mrb[0].mxu0
      %1283 = vmatprep.mubr.f32.mxu0 0.0
      %1284 = vmatmul.mubr.f32.gmra.mrb[0].mxu0 %v993
      %v1285 = vpop.f32.mrb[0].mxu0
      %v1286 = vadd.f32 0.0, %v1285
      %v1287 = vpop.f32.mrb[0].mxu0
      %1288 = vdwg.mxu0
      %v1289 = vld [vmem:[%s8] sm:$0xff]
      %v1290 = vld [vmem:[%s8 + $0x8] sm:$0xff]
      %v1291 = vld [vmem:[%s8 + $0x10] sm:$0xff]
      %v1292 = vld [vmem:[%s8 + $0x18] sm:$0xff]
      %1293 = vmatprep.subr.mxu0 0.0
      %1294 = vmatpush1.msra.mxu0 %v1289
      %1295 = vmatprep.subr.mxu0 0.0
      %1296 = vmatpush1.msra.mxu0 %v1290
      %1297 = vmatprep.subr.mxu0 0.0
      %1298 = vmatpush1.msra.mxu0 %v1291
      %1299 = vmatprep.subr.mxu0 0.0
      %1300 = vmatpush1.msra.mxu0 %v1292
      %1301 = vmatprep.subr.mxu0 0.0
      %1302 = vmatpush1.msra.mxu0 0.0
      %1303 = vmatprep.subr.mxu0 0.0
      %1304 = vmatpush1.msra.mxu0 0.0
      %1305 = vmatprep.subr.mxu0 0.0
      %1306 = vmatpush1.msra.mxu0 0.0
      %1307 = vmatprep.subr.mxu0 0.0
      %1308 = vmatpush1.msra.mxu0 0.0
      %1309 = vmatprep.subr.mxu0 0.0
      %1310 = vmatpush1.msra.mxu0 0.0
      %1311 = vmatprep.subr.mxu0 0.0
      %1312 = vmatpush1.msra.mxu0 0.0
      %1313 = vmatprep.subr.mxu0 0.0
      %1314 = vmatpush1.msra.mxu0 0.0
      %1315 = vmatprep.subr.mxu0 0.0
      %1316 = vmatpush1.msra.mxu0 0.0
      %1317 = vmatprep.subr.mxu0 0.0
      %1318 = vmatpush1.msra.mxu0 0.0
      %1319 = vmatprep.subr.mxu0 0.0
      %1320 = vmatpush1.msra.mxu0 0.0
      %1321 = vmatprep.subr.mxu0 0.0
      %1322 = vmatpush1.msra.mxu0 0.0
      %1323 = vmatprep.subr.mxu0 0.0
      %1324 = vmatpush1.msra.mxu0 0.0
      %1325 = vmatprep.subr.mxu0 0.0
      %1326 = vmatpush1.msra.mxu0 0.0
      %1327 = vmatprep.subr.mxu0 0.0
      %1328 = vmatpush1.msra.mxu0 0.0
      %1329 = vmatprep.subr.mxu0 0.0
      %1330 = vmatpush1.msra.mxu0 0.0
      %1331 = vmatprep.subr.mxu0 0.0
      %1332 = vmatpush1.msra.mxu0 0.0
      %1333 = vmatprep.subr.mxu0 0.0
      %1334 = vmatpush1.msra.mxu0 0.0
      %1335 = vmatprep.subr.mxu0 0.0
      %1336 = vmatpush1.msra.mxu0 0.0
      %1337 = vmatprep.subr.mxu0 0.0
      %1338 = vmatpush1.msra.mxu0 0.0
      %1339 = vmatprep.subr.mxu0 0.0
      %1340 = vmatpush1.msra.mxu0 0.0
      %1341 = vmatprep.subr.mxu0 0.0
      %1342 = vmatpush1.msra.mxu0 0.0
      %1343 = vmatprep.subr.mxu0 0.0
      %1344 = vmatpush1.msra.mxu0 0.0
      %1345 = vmatprep.subr.mxu0 0.0
      %1346 = vmatpush1.msra.mxu0 0.0
      %1347 = vmatprep.subr.mxu0 0.0
      %1348 = vmatpush1.msra.mxu0 0.0
      %1349 = vmatprep.subr.mxu0 0.0
      %1350 = vmatpush1.msra.mxu0 0.0
      %1351 = vmatprep.subr.mxu0 0.0
      %1352 = vmatpush1.msra.mxu0 0.0
      %1353 = vmatprep.subr.mxu0 0.0
      %1354 = vmatpush1.msra.mxu0 0.0
      %1355 = vmatprep.subr.mxu0 0.0
      %1356 = vmatpush1.msra.mxu0 0.0
      %1357 = vmatprep.mubr.f32.mxu0 0.0
      %1358 = vmatmul.mubr.f32.gmra.mrb[0].mxu0 %v948
      %v1359 = vpop.f32.mrb[0].mxu0
      %v1360 = vadd.f32 0.0, %v1359
      %v1361 = vpop.f32.mrb[0].mxu0
      %1362 = vmatprep.mubr.f32.mxu0 0.0
      %1363 = vmatmul.mubr.f32.gmra.mrb[0].mxu0 %v951
      %v1364 = vpop.f32.mrb[0].mxu0
      %v1365 = vadd.f32 0.0, %v1364
      %v1366 = vpop.f32.mrb[0].mxu0
      %1367 = vmatprep.mubr.f32.mxu0 0.0
      %1368 = vmatmul.mubr.f32.gmra.mrb[0].mxu0 %v954
      %v1369 = vpop.f32.mrb[0].mxu0
      %v1370 = vadd.f32 0.0, %v1369
      %v1371 = vpop.f32.mrb[0].mxu0
      %1372 = vmatprep.mubr.f32.mxu0 0.0
      %1373 = vmatmul.mubr.f32.gmra.mrb[0].mxu0 %v957
      %v1374 = vpop.f32.mrb[0].mxu0
      %v1375 = vadd.f32 0.0, %v1374
      %v1376 = vpop.f32.mrb[0].mxu0
      %1377 = vmatprep.mubr.f32.mxu0 0.0
      %1378 = vmatmul.mubr.f32.gmra.mrb[0].mxu0 %v960
      %v1379 = vpop.f32.mrb[0].mxu0
      %v1380 = vadd.f32 0.0, %v1379
      %v1381 = vpop.f32.mrb[0].mxu0
      %1382 = vmatprep.mubr.f32.mxu0 0.0
      %1383 = vmatmul.mubr.f32.gmra.mrb[0].mxu0 %v963
      %v1384 = vpop.f32.mrb[0].mxu0
      %v1385 = vadd.f32 0.0, %v1384
      %v1386 = vpop.f32.mrb[0].mxu0
      %1387 = vmatprep.mubr.f32.mxu0 0.0
      %1388 = vmatmul.mubr.f32.gmra.mrb[0].mxu0 %v966
      %v1389 = vpop.f32.mrb[0].mxu0
      %v1390 = vadd.f32 0.0, %v1389
      %v1391 = vpop.f32.mrb[0].mxu0
      %1392 = vmatprep.mubr.f32.mxu0 0.0
      %1393 = vmatmul.mubr.f32.gmra.mrb[0].mxu0 %v969
      %v1394 = vpop.f32.mrb[0].mxu0
      %v1395 = vadd.f32 0.0, %v1394
      %v1396 = vpop.f32.mrb[0].mxu0
      %1397 = vmatprep.mubr.f32.mxu0 0.0
      %1398 = vmatmul.mubr.f32.gmra.mrb[0].mxu0 %v972
      %v1399 = vpop.f32.mrb[0].mxu0
      %v1400 = vadd.f32 0.0, %v1399
      %v1401 = vpop.f32.mrb[0].mxu0
      %1402 = vmatprep.mubr.f32.mxu0 0.0
      %1403 = vmatmul.mubr.f32.gmra.mrb[0].mxu0 %v975
      %v1404 = vpop.f32.mrb[0].mxu0
      %v1405 = vadd.f32 0.0, %v1404
      %v1406 = vpop.f32.mrb[0].mxu0
      %1407 = vmatprep.mubr.f32.mxu0 0.0
      %1408 = vmatmul.mubr.f32.gmra.mrb[0].mxu0 %v978
      %v1409 = vpop.f32.mrb[0].mxu0
      %v1410 = vadd.f32 0.0, %v1409
      %v1411 = vpop.f32.mrb[0].mxu0
      %1412 = vmatprep.mubr.f32.mxu0 0.0
      %1413 = vmatmul.mubr.f32.gmra.mrb[0].mxu0 %v981
      %v1414 = vpop.f32.mrb[0].mxu0
      %v1415 = vadd.f32 0.0, %v1414
      %v1416 = vpop.f32.mrb[0].mxu0
      %1417 = vmatprep.mubr.f32.mxu0 0.0
      %1418 = vmatmul.mubr.f32.gmra.mrb[0].mxu0 %v984
      %v1419 = vpop.f32.mrb[0].mxu0
      %v1420 = vadd.f32 0.0, %v1419
      %v1421 = vpop.f32.mrb[0].mxu0
      %1422 = vmatprep.mubr.f32.mxu0 0.0
      %1423 = vmatmul.mubr.f32.gmra.mrb[0].mxu0 %v987
      %v1424 = vpop.f32.mrb[0].mxu0
      %v1425 = vadd.f32 0.0, %v1424
      %v1426 = vpop.f32.mrb[0].mxu0
      %1427 = vmatprep.mubr.f32.mxu0 0.0
      %1428 = vmatmul.mubr.f32.gmra.mrb[0].mxu0 %v990
      %v1429 = vpop.f32.mrb[0].mxu0
      %v1430 = vadd.f32 0.0, %v1429
      %v1431 = vpop.f32.mrb[0].mxu0
      %1432 = vmatprep.mubr.f32.mxu0 0.0
      %1433 = vmatmul.mubr.f32.gmra.mrb[0].mxu0 %v993
      %v1434 = vpop.f32.mrb[0].mxu0
      %v1435 = vadd.f32 0.0, %v1434
      %v1436 = vpop.f32.mrb[0].mxu0
      %1437 = vdwg.mxu0
      %v1439 = vsel %vm946, %v1062, 0
      %v1442 = vsel %vm946, %v1211, 0
      %1444 = vmatprep.subr.mxu0 0.0
      %1445 = vmatpush1.xpose.msra.mxu0 %v1442
      %1446 = vmatprep.subr.mxu0 0.0
      %1447 = vmatpush1.xpose.msra.mxu0 0.0
      %1448 = vmatprep.subr.mxu0 0.0
      %1449 = vmatpush1.xpose.msra.mxu0 0.0
      %1450 = vmatprep.subr.mxu0 0.0
      %1451 = vmatpush1.xpose.msra.mxu0 0.0
      %1452 = vmatprep.subr.mxu0 0.0
      %1453 = vmatpush1.xpose.msra.mxu0 0.0
      %1454 = vmatprep.subr.mxu0 0.0
      %1455 = vmatpush1.xpose.msra.mxu0 0.0
      %1456 = vmatprep.subr.mxu0 0.0
      %1457 = vmatpush1.xpose.msra.mxu0 0.0
      %1458 = vmatprep.subr.mxu0 0.0
      %1459 = vmatpush1.xpose.msra.mxu0 0.0
      %1460 = vmatprep.subr.mxu0 0.0
      %1461 = vmatpush1.xpose.msra.mxu0 0.0
      %1462 = vmatprep.subr.mxu0 0.0
      %1463 = vmatpush1.xpose.msra.mxu0 0.0
      %1464 = vmatprep.subr.mxu0 0.0
      %1465 = vmatpush1.xpose.msra.mxu0 0.0
      %1466 = vmatprep.subr.mxu0 0.0
      %1467 = vmatpush1.xpose.msra.mxu0 0.0
      %1468 = vmatprep.subr.mxu0 0.0
      %1469 = vmatpush1.xpose.msra.mxu0 0.0
      %1470 = vmatprep.subr.mxu0 0.0
      %1471 = vmatpush1.xpose.msra.mxu0 0.0
      %1472 = vmatprep.subr.mxu0 0.0
      %1473 = vmatpush1.xpose.msra.mxu0 0.0
      %1474 = vmatprep.subr.mxu0 0.0
      %1475 = vmatpush1.xpose.msra.mxu0 0.0
      %1476 = vmatprep.subr.mxu0 0.0
      %1477 = vmatpush1.xpose.msra.mxu0 0.0
      %1478 = vmatprep.subr.mxu0 0.0
      %1479 = vmatpush1.xpose.msra.mxu0 0.0
      %1480 = vmatprep.subr.mxu0 0.0
      %1481 = vmatpush1.xpose.msra.mxu0 0.0
      %1482 = vmatprep.subr.mxu0 0.0
      %1483 = vmatpush1.xpose.msra.mxu0 0.0
      %1484 = vmatprep.subr.mxu0 0.0
      %1485 = vmatpush1.xpose.msra.mxu0 0.0
      %1486 = vmatprep.subr.mxu0 0.0
      %1487 = vmatpush1.xpose.msra.mxu0 0.0
      %1488 = vmatprep.subr.mxu0 0.0
      %1489 = vmatpush1.xpose.msra.mxu0 0.0
      %1490 = vmatprep.subr.mxu0 0.0
      %1491 = vmatpush1.xpose.msra.mxu0 0.0
      %1492 = vmatprep.subr.mxu0 0.0
      %1493 = vmatpush1.xpose.msra.mxu0 0.0
      %1494 = vmatprep.subr.mxu0 0.0
      %1495 = vmatpush1.xpose.msra.mxu0 0.0
      %1496 = vmatprep.subr.mxu0 0.0
      %1497 = vmatpush1.xpose.msra.mxu0 0.0
      %1498 = vmatprep.subr.mxu0 0.0
      %1499 = vmatpush1.xpose.msra.mxu0 0.0
      %1500 = vmatprep.subr.mxu0 0.0
      %1501 = vmatpush1.xpose.msra.mxu0 0.0
      %1502 = vmatprep.subr.mxu0 0.0
      %1503 = vmatpush1.xpose.msra.mxu0 0.0
      %1504 = vmatprep.subr.mxu0 0.0
      %1505 = vmatpush1.xpose.msra.mxu0 0.0
      %1506 = vmatprep.subr.mxu0 0.0
      %1507 = vmatpush1.xpose.msra.mxu0 0.0
      %1508 = vmatprep.mubr.f32.mxu0 0.0
      %1509 = vmatmul.mubr.f32.gmra.mrb[0].mxu0 %v1439
      %v1510 = vpop.f32.mrb[0].mxu0
      %v1511 = vadd.f32 0.0, %v1510
      %v1512 = vpop.f32.mrb[0].mxu0
      %1513 = vdwg.mxu0
      %v1515 = vsel %vm946, %v1067, 0
      %v1518 = vsel %vm946, %v1216, 0
      %1520 = vmatprep.subr.mxu0 0.0
      %1521 = vmatpush1.xpose.msra.mxu0 %v1518
      %1522 = vmatprep.subr.mxu0 0.0
      %1523 = vmatpush1.xpose.msra.mxu0 0.0
      %1524 = vmatprep.subr.mxu0 0.0
      %1525 = vmatpush1.xpose.msra.mxu0 0.0
      %1526 = vmatprep.subr.mxu0 0.0
      %1527 = vmatpush1.xpose.msra.mxu0 0.0
      %1528 = vmatprep.subr.mxu0 0.0
      %1529 = vmatpush1.xpose.msra.mxu0 0.0
      %1530 = vmatprep.subr.mxu0 0.0
      %1531 = vmatpush1.xpose.msra.mxu0 0.0
      %1532 = vmatprep.subr.mxu0 0.0
      %1533 = vmatpush1.xpose.msra.mxu0 0.0
      %1534 = vmatprep.subr.mxu0 0.0
      %1535 = vmatpush1.xpose.msra.mxu0 0.0
      %1536 = vmatprep.subr.mxu0 0.0
      %1537 = vmatpush1.xpose.msra.mxu0 0.0
      %1538 = vmatprep.subr.mxu0 0.0
      %1539 = vmatpush1.xpose.msra.mxu0 0.0
      %1540 = vmatprep.subr.mxu0 0.0
      %1541 = vmatpush1.xpose.msra.mxu0 0.0
      %1542 = vmatprep.subr.mxu0 0.0
      %1543 = vmatpush1.xpose.msra.mxu0 0.0
      %1544 = vmatprep.subr.mxu0 0.0
      %1545 = vmatpush1.xpose.msra.mxu0 0.0
      %1546 = vmatprep.subr.mxu0 0.0
      %1547 = vmatpush1.xpose.msra.mxu0 0.0
      %1548 = vmatprep.subr.mxu0 0.0
      %1549 = vmatpush1.xpose.msra.mxu0 0.0
      %1550 = vmatprep.subr.mxu0 0.0
      %1551 = vmatpush1.xpose.msra.mxu0 0.0
      %1552 = vmatprep.subr.mxu0 0.0
      %1553 = vmatpush1.xpose.msra.mxu0 0.0
      %1554 = vmatprep.subr.mxu0 0.0
      %1555 = vmatpush1.xpose.msra.mxu0 0.0
      %1556 = vmatprep.subr.mxu0 0.0
      %1557 = vmatpush1.xpose.msra.mxu0 0.0
      %1558 = vmatprep.subr.mxu0 0.0
      %1559 = vmatpush1.xpose.msra.mxu0 0.0
      %1560 = vmatprep.subr.mxu0 0.0
      %1561 = vmatpush1.xpose.msra.mxu0 0.0
      %1562 = vmatprep.subr.mxu0 0.0
      %1563 = vmatpush1.xpose.msra.mxu0 0.0
      %1564 = vmatprep.subr.mxu0 0.0
      %1565 = vmatpush1.xpose.msra.mxu0 0.0
      %1566 = vmatprep.subr.mxu0 0.0
      %1567 = vmatpush1.xpose.msra.mxu0 0.0
      %1568 = vmatprep.subr.mxu0 0.0
      %1569 = vmatpush1.xpose.msra.mxu0 0.0
      %1570 = vmatprep.subr.mxu0 0.0
      %1571 = vmatpush1.xpose.msra.mxu0 0.0
      %1572 = vmatprep.subr.mxu0 0.0
      %1573 = vmatpush1.xpose.msra.mxu0 0.0
      %1574 = vmatprep.subr.mxu0 0.0
      %1575 = vmatpush1.xpose.msra.mxu0 0.0
      %1576 = vmatprep.subr.mxu0 0.0
      %1577 = vmatpush1.xpose.msra.mxu0 0.0
      %1578 = vmatprep.subr.mxu0 0.0
      %1579 = vmatpush1.xpose.msra.mxu0 0.0
      %1580 = vmatprep.subr.mxu0 0.0
      %1581 = vmatpush1.xpose.msra.mxu0 0.0
      %1582 = vmatprep.subr.mxu0 0.0
      %1583 = vmatpush1.xpose.msra.mxu0 0.0
      %1584 = vmatprep.mubr.f32.mxu0 0.0
      %1585 = vmatmul.mubr.f32.gmra.mrb[0].mxu0 %v1515
      %v1586 = vpop.f32.mrb[0].mxu0
      %v1587 = vadd.f32 0.0, %v1586
      %v1588 = vpop.f32.mrb[0].mxu0
      %1589 = vdwg.mxu0
      %v1591 = vsel %vm946, %v1072, 0
      %v1594 = vsel %vm946, %v1221, 0
      %1596 = vmatprep.subr.mxu0 0.0
      %1597 = vmatpush1.xpose.msra.mxu0 %v1594
      %1598 = vmatprep.subr.mxu0 0.0
      %1599 = vmatpush1.xpose.msra.mxu0 0.0
      %1600 = vmatprep.subr.mxu0 0.0
      %1601 = vmatpush1.xpose.msra.mxu0 0.0
      %1602 = vmatprep.subr.mxu0 0.0
      %1603 = vmatpush1.xpose.msra.mxu0 0.0
      %1604 = vmatprep.subr.mxu0 0.0
      %1605 = vmatpush1.xpose.msra.mxu0 0.0
      %1606 = vmatprep.subr.mxu0 0.0
      %1607 = vmatpush1.xpose.msra.mxu0 0.0
      %1608 = vmatprep.subr.mxu0 0.0
      %1609 = vmatpush1.xpose.msra.mxu0 0.0
      %1610 = vmatprep.subr.mxu0 0.0
      %1611 = vmatpush1.xpose.msra.mxu0 0.0
      %1612 = vmatprep.subr.mxu0 0.0
      %1613 = vmatpush1.xpose.msra.mxu0 0.0
      %1614 = vmatprep.subr.mxu0 0.0
      %1615 = vmatpush1.xpose.msra.mxu0 0.0
      %1616 = vmatprep.subr.mxu0 0.0
      %1617 = vmatpush1.xpose.msra.mxu0 0.0
      %1618 = vmatprep.subr.mxu0 0.0
      %1619 = vmatpush1.xpose.msra.mxu0 0.0
      %1620 = vmatprep.subr.mxu0 0.0
      %1621 = vmatpush1.xpose.msra.mxu0 0.0
      %1622 = vmatprep.subr.mxu0 0.0
      %1623 = vmatpush1.xpose.msra.mxu0 0.0
      %1624 = vmatprep.subr.mxu0 0.0
      %1625 = vmatpush1.xpose.msra.mxu0 0.0
      %1626 = vmatprep.subr.mxu0 0.0
      %1627 = vmatpush1.xpose.msra.mxu0 0.0
      %1628 = vmatprep.subr.mxu0 0.0
      %1629 = vmatpush1.xpose.msra.mxu0 0.0
      %1630 = vmatprep.subr.mxu0 0.0
      %1631 = vmatpush1.xpose.msra.mxu0 0.0
      %1632 = vmatprep.subr.mxu0 0.0
      %1633 = vmatpush1.xpose.msra.mxu0 0.0
      %1634 = vmatprep.subr.mxu0 0.0
      %1635 = vmatpush1.xpose.msra.mxu0 0.0
      %1636 = vmatprep.subr.mxu0 0.0
      %1637 = vmatpush1.xpose.msra.mxu0 0.0
      %1638 = vmatprep.subr.mxu0 0.0
      %1639 = vmatpush1.xpose.msra.mxu0 0.0
      %1640 = vmatprep.subr.mxu0 0.0
      %1641 = vmatpush1.xpose.msra.mxu0 0.0
      %1642 = vmatprep.subr.mxu0 0.0
      %1643 = vmatpush1.xpose.msra.mxu0 0.0
      %1644 = vmatprep.subr.mxu0 0.0
      %1645 = vmatpush1.xpose.msra.mxu0 0.0
      %1646 = vmatprep.subr.mxu0 0.0
      %1647 = vmatpush1.xpose.msra.mxu0 0.0
      %1648 = vmatprep.subr.mxu0 0.0
      %1649 = vmatpush1.xpose.msra.mxu0 0.0
      %1650 = vmatprep.subr.mxu0 0.0
      %1651 = vmatpush1.xpose.msra.mxu0 0.0
      %1652 = vmatprep.subr.mxu0 0.0
      %1653 = vmatpush1.xpose.msra.mxu0 0.0
      %1654 = vmatprep.subr.mxu0 0.0
      %1655 = vmatpush1.xpose.msra.mxu0 0.0
      %1656 = vmatprep.subr.mxu0 0.0
      %1657 = vmatpush1.xpose.msra.mxu0 0.0
      %1658 = vmatprep.subr.mxu0 0.0
      %1659 = vmatpush1.xpose.msra.mxu0 0.0
      %1660 = vmatprep.mubr.f32.mxu0 0.0
      %1661 = vmatmul.mubr.f32.gmra.mrb[0].mxu0 %v1591
      %v1662 = vpop.f32.mrb[0].mxu0
      %v1663 = vadd.f32 0.0, %v1662
      %v1664 = vpop.f32.mrb[0].mxu0
      %1665 = vdwg.mxu0
      %v1667 = vsel %vm946, %v1077, 0
      %v1670 = vsel %vm946, %v1226, 0
      %1672 = vmatprep.subr.mxu0 0.0
      %1673 = vmatpush1.xpose.msra.mxu0 %v1670
      %1674 = vmatprep.subr.mxu0 0.0
      %1675 = vmatpush1.xpose.msra.mxu0 0.0
      %1676 = vmatprep.subr.mxu0 0.0
      %1677 = vmatpush1.xpose.msra.mxu0 0.0
      %1678 = vmatprep.subr.mxu0 0.0
      %1679 = vmatpush1.xpose.msra.mxu0 0.0
      %1680 = vmatprep.subr.mxu0 0.0
      %1681 = vmatpush1.xpose.msra.mxu0 0.0
      %1682 = vmatprep.subr.mxu0 0.0
      %1683 = vmatpush1.xpose.msra.mxu0 0.0
      %1684 = vmatprep.subr.mxu0 0.0
      %1685 = vmatpush1.xpose.msra.mxu0 0.0
      %1686 = vmatprep.subr.mxu0 0.0
      %1687 = vmatpush1.xpose.msra.mxu0 0.0
      %1688 = vmatprep.subr.mxu0 0.0
      %1689 = vmatpush1.xpose.msra.mxu0 0.0
      %1690 = vmatprep.subr.mxu0 0.0
      %1691 = vmatpush1.xpose.msra.mxu0 0.0
      %1692 = vmatprep.subr.mxu0 0.0
      %1693 = vmatpush1.xpose.msra.mxu0 0.0
      %1694 = vmatprep.subr.mxu0 0.0
      %1695 = vmatpush1.xpose.msra.mxu0 0.0
      %1696 = vmatprep.subr.mxu0 0.0
      %1697 = vmatpush1.xpose.msra.mxu0 0.0
      %1698 = vmatprep.subr.mxu0 0.0
      %1699 = vmatpush1.xpose.msra.mxu0 0.0
      %1700 = vmatprep.subr.mxu0 0.0
      %1701 = vmatpush1.xpose.msra.mxu0 0.0
      %1702 = vmatprep.subr.mxu0 0.0
      %1703 = vmatpush1.xpose.msra.mxu0 0.0
      %1704 = vmatprep.subr.mxu0 0.0
      %1705 = vmatpush1.xpose.msra.mxu0 0.0
      %1706 = vmatprep.subr.mxu0 0.0
      %1707 = vmatpush1.xpose.msra.mxu0 0.0
      %1708 = vmatprep.subr.mxu0 0.0
      %1709 = vmatpush1.xpose.msra.mxu0 0.0
      %1710 = vmatprep.subr.mxu0 0.0
      %1711 = vmatpush1.xpose.msra.mxu0 0.0
      %1712 = vmatprep.subr.mxu0 0.0
      %1713 = vmatpush1.xpose.msra.mxu0 0.0
      %1714 = vmatprep.subr.mxu0 0.0
      %1715 = vmatpush1.xpose.msra.mxu0 0.0
      %1716 = vmatprep.subr.mxu0 0.0
      %1717 = vmatpush1.xpose.msra.mxu0 0.0
      %1718 = vmatprep.subr.mxu0 0.0
      %1719 = vmatpush1.xpose.msra.mxu0 0.0
      %1720 = vmatprep.subr.mxu0 0.0
      %1721 = vmatpush1.xpose.msra.mxu0 0.0
      %1722 = vmatprep.subr.mxu0 0.0
      %1723 = vmatpush1.xpose.msra.mxu0 0.0
      %1724 = vmatprep.subr.mxu0 0.0
      %1725 = vmatpush1.xpose.msra.mxu0 0.0
      %1726 = vmatprep.subr.mxu0 0.0
      %1727 = vmatpush1.xpose.msra.mxu0 0.0
      %1728 = vmatprep.subr.mxu0 0.0
      %1729 = vmatpush1.xpose.msra.mxu0 0.0
      %1730 = vmatprep.subr.mxu0 0.0
      %1731 = vmatpush1.xpose.msra.mxu0 0.0
      %1732 = vmatprep.subr.mxu0 0.0
      %1733 = vmatpush1.xpose.msra.mxu0 0.0
      %1734 = vmatprep.subr.mxu0 0.0
      %1735 = vmatpush1.xpose.msra.mxu0 0.0
      %1736 = vmatprep.mubr.f32.mxu0 0.0
      %1737 = vmatmul.mubr.f32.gmra.mrb[0].mxu0 %v1667
      %v1738 = vpop.f32.mrb[0].mxu0
      %v1739 = vadd.f32 0.0, %v1738
      %v1740 = vpop.f32.mrb[0].mxu0
      %1741 = vdwg.mxu0
      %v1743 = vsel %vm946, %v1082, 0
      %v1746 = vsel %vm946, %v1231, 0
      %1748 = vmatprep.subr.mxu0 0.0
      %1749 = vmatpush1.xpose.msra.mxu0 %v1746
      %1750 = vmatprep.subr.mxu0 0.0
      %1751 = vmatpush1.xpose.msra.mxu0 0.0
      %1752 = vmatprep.subr.mxu0 0.0
      %1753 = vmatpush1.xpose.msra.mxu0 0.0
      %1754 = vmatprep.subr.mxu0 0.0
      %1755 = vmatpush1.xpose.msra.mxu0 0.0
      %1756 = vmatprep.subr.mxu0 0.0
      %1757 = vmatpush1.xpose.msra.mxu0 0.0
      %1758 = vmatprep.subr.mxu0 0.0
      %1759 = vmatpush1.xpose.msra.mxu0 0.0
      %1760 = vmatprep.subr.mxu0 0.0
      %1761 = vmatpush1.xpose.msra.mxu0 0.0
      %1762 = vmatprep.subr.mxu0 0.0
      %1763 = vmatpush1.xpose.msra.mxu0 0.0
      %1764 = vmatprep.subr.mxu0 0.0
      %1765 = vmatpush1.xpose.msra.mxu0 0.0
      %1766 = vmatprep.subr.mxu0 0.0
      %1767 = vmatpush1.xpose.msra.mxu0 0.0
      %1768 = vmatprep.subr.mxu0 0.0
      %1769 = vmatpush1.xpose.msra.mxu0 0.0
      %1770 = vmatprep.subr.mxu0 0.0
      %1771 = vmatpush1.xpose.msra.mxu0 0.0
      %1772 = vmatprep.subr.mxu0 0.0
      %1773 = vmatpush1.xpose.msra.mxu0 0.0
      %1774 = vmatprep.subr.mxu0 0.0
      %1775 = vmatpush1.xpose.msra.mxu0 0.0
      %1776 = vmatprep.subr.mxu0 0.0
      %1777 = vmatpush1.xpose.msra.mxu0 0.0
      %1778 = vmatprep.subr.mxu0 0.0
      %1779 = vmatpush1.xpose.msra.mxu0 0.0
      %1780 = vmatprep.subr.mxu0 0.0
      %1781 = vmatpush1.xpose.msra.mxu0 0.0
      %1782 = vmatprep.subr.mxu0 0.0
      %1783 = vmatpush1.xpose.msra.mxu0 0.0
      %1784 = vmatprep.subr.mxu0 0.0
      %1785 = vmatpush1.xpose.msra.mxu0 0.0
      %1786 = vmatprep.subr.mxu0 0.0
      %1787 = vmatpush1.xpose.msra.mxu0 0.0
      %1788 = vmatprep.subr.mxu0 0.0
      %1789 = vmatpush1.xpose.msra.mxu0 0.0
      %1790 = vmatprep.subr.mxu0 0.0
      %1791 = vmatpush1.xpose.msra.mxu0 0.0
      %1792 = vmatprep.subr.mxu0 0.0
      %1793 = vmatpush1.xpose.msra.mxu0 0.0
      %1794 = vmatprep.subr.mxu0 0.0
      %1795 = vmatpush1.xpose.msra.mxu0 0.0
      %1796 = vmatprep.subr.mxu0 0.0
      %1797 = vmatpush1.xpose.msra.mxu0 0.0
      %1798 = vmatprep.subr.mxu0 0.0
      %1799 = vmatpush1.xpose.msra.mxu0 0.0
      %1800 = vmatprep.subr.mxu0 0.0
      %1801 = vmatpush1.xpose.msra.mxu0 0.0
      %1802 = vmatprep.subr.mxu0 0.0
      %1803 = vmatpush1.xpose.msra.mxu0 0.0
      %1804 = vmatprep.subr.mxu0 0.0
      %1805 = vmatpush1.xpose.msra.mxu0 0.0
      %1806 = vmatprep.subr.mxu0 0.0
      %1807 = vmatpush1.xpose.msra.mxu0 0.0
      %1808 = vmatprep.subr.mxu0 0.0
      %1809 = vmatpush1.xpose.msra.mxu0 0.0
      %1810 = vmatprep.subr.mxu0 0.0
      %1811 = vmatpush1.xpose.msra.mxu0 0.0
      %1812 = vmatprep.mubr.f32.mxu0 0.0
      %1813 = vmatmul.mubr.f32.gmra.mrb[0].mxu0 %v1743
      %v1814 = vpop.f32.mrb[0].mxu0
      %v1815 = vadd.f32 0.0, %v1814
      %v1816 = vpop.f32.mrb[0].mxu0
      %1817 = vdwg.mxu0
      %v1819 = vsel %vm946, %v1087, 0
      %v1822 = vsel %vm946, %v1236, 0
      %1824 = vmatprep.subr.mxu0 0.0
      %1825 = vmatpush1.xpose.msra.mxu0 %v1822
      %1826 = vmatprep.subr.mxu0 0.0
      %1827 = vmatpush1.xpose.msra.mxu0 0.0
      %1828 = vmatprep.subr.mxu0 0.0
      %1829 = vmatpush1.xpose.msra.mxu0 0.0
      %1830 = vmatprep.subr.mxu0 0.0
      %1831 = vmatpush1.xpose.msra.mxu0 0.0
      %1832 = vmatprep.subr.mxu0 0.0
      %1833 = vmatpush1.xpose.msra.mxu0 0.0
      %1834 = vmatprep.subr.mxu0 0.0
      %1835 = vmatpush1.xpose.msra.mxu0 0.0
      %1836 = vmatprep.subr.mxu0 0.0
      %1837 = vmatpush1.xpose.msra.mxu0 0.0
      %1838 = vmatprep.subr.mxu0 0.0
      %1839 = vmatpush1.xpose.msra.mxu0 0.0
      %1840 = vmatprep.subr.mxu0 0.0
      %1841 = vmatpush1.xpose.msra.mxu0 0.0
      %1842 = vmatprep.subr.mxu0 0.0
      %1843 = vmatpush1.xpose.msra.mxu0 0.0
      %1844 = vmatprep.subr.mxu0 0.0
      %1845 = vmatpush1.xpose.msra.mxu0 0.0
      %1846 = vmatprep.subr.mxu0 0.0
      %1847 = vmatpush1.xpose.msra.mxu0 0.0
      %1848 = vmatprep.subr.mxu0 0.0
      %1849 = vmatpush1.xpose.msra.mxu0 0.0
      %1850 = vmatprep.subr.mxu0 0.0
      %1851 = vmatpush1.xpose.msra.mxu0 0.0
      %1852 = vmatprep.subr.mxu0 0.0
      %1853 = vmatpush1.xpose.msra.mxu0 0.0
      %1854 = vmatprep.subr.mxu0 0.0
      %1855 = vmatpush1.xpose.msra.mxu0 0.0
      %1856 = vmatprep.subr.mxu0 0.0
      %1857 = vmatpush1.xpose.msra.mxu0 0.0
      %1858 = vmatprep.subr.mxu0 0.0
      %1859 = vmatpush1.xpose.msra.mxu0 0.0
      %1860 = vmatprep.subr.mxu0 0.0
      %1861 = vmatpush1.xpose.msra.mxu0 0.0
      %1862 = vmatprep.subr.mxu0 0.0
      %1863 = vmatpush1.xpose.msra.mxu0 0.0
      %1864 = vmatprep.subr.mxu0 0.0
      %1865 = vmatpush1.xpose.msra.mxu0 0.0
      %1866 = vmatprep.subr.mxu0 0.0
      %1867 = vmatpush1.xpose.msra.mxu0 0.0
      %1868 = vmatprep.subr.mxu0 0.0
      %1869 = vmatpush1.xpose.msra.mxu0 0.0
      %1870 = vmatprep.subr.mxu0 0.0
      %1871 = vmatpush1.xpose.msra.mxu0 0.0
      %1872 = vmatprep.subr.mxu0 0.0
      %1873 = vmatpush1.xpose.msra.mxu0 0.0
      %1874 = vmatprep.subr.mxu0 0.0
      %1875 = vmatpush1.xpose.msra.mxu0 0.0
      %1876 = vmatprep.subr.mxu0 0.0
      %1877 = vmatpush1.xpose.msra.mxu0 0.0
      %1878 = vmatprep.subr.mxu0 0.0
      %1879 = vmatpush1.xpose.msra.mxu0 0.0
      %1880 = vmatprep.subr.mxu0 0.0
      %1881 = vmatpush1.xpose.msra.mxu0 0.0
      %1882 = vmatprep.subr.mxu0 0.0
      %1883 = vmatpush1.xpose.msra.mxu0 0.0
      %1884 = vmatprep.subr.mxu0 0.0
      %1885 = vmatpush1.xpose.msra.mxu0 0.0
      %1886 = vmatprep.subr.mxu0 0.0
      %1887 = vmatpush1.xpose.msra.mxu0 0.0
      %1888 = vmatprep.mubr.f32.mxu0 0.0
      %1889 = vmatmul.mubr.f32.gmra.mrb[0].mxu0 %v1819
      %v1890 = vpop.f32.mrb[0].mxu0
      %v1891 = vadd.f32 0.0, %v1890
      %v1892 = vpop.f32.mrb[0].mxu0
      %1893 = vdwg.mxu0
      %v1895 = vsel %vm946, %v1092, 0
      %v1898 = vsel %vm946, %v1241, 0
      %1900 = vmatprep.subr.mxu0 0.0
      %1901 = vmatpush1.xpose.msra.mxu0 %v1898
      %1902 = vmatprep.subr.mxu0 0.0
      %1903 = vmatpush1.xpose.msra.mxu0 0.0
      %1904 = vmatprep.subr.mxu0 0.0
      %1905 = vmatpush1.xpose.msra.mxu0 0.0
      %1906 = vmatprep.subr.mxu0 0.0
      %1907 = vmatpush1.xpose.msra.mxu0 0.0
      %1908 = vmatprep.subr.mxu0 0.0
      %1909 = vmatpush1.xpose.msra.mxu0 0.0
      %1910 = vmatprep.subr.mxu0 0.0
      %1911 = vmatpush1.xpose.msra.mxu0 0.0
      %1912 = vmatprep.subr.mxu0 0.0
      %1913 = vmatpush1.xpose.msra.mxu0 0.0
      %1914 = vmatprep.subr.mxu0 0.0
      %1915 = vmatpush1.xpose.msra.mxu0 0.0
      %1916 = vmatprep.subr.mxu0 0.0
      %1917 = vmatpush1.xpose.msra.mxu0 0.0
      %1918 = vmatprep.subr.mxu0 0.0
      %1919 = vmatpush1.xpose.msra.mxu0 0.0
      %1920 = vmatprep.subr.mxu0 0.0
      %1921 = vmatpush1.xpose.msra.mxu0 0.0
      %1922 = vmatprep.subr.mxu0 0.0
      %1923 = vmatpush1.xpose.msra.mxu0 0.0
      %1924 = vmatprep.subr.mxu0 0.0
      %1925 = vmatpush1.xpose.msra.mxu0 0.0
      %1926 = vmatprep.subr.mxu0 0.0
      %1927 = vmatpush1.xpose.msra.mxu0 0.0
      %1928 = vmatprep.subr.mxu0 0.0
      %1929 = vmatpush1.xpose.msra.mxu0 0.0
      %1930 = vmatprep.subr.mxu0 0.0
      %1931 = vmatpush1.xpose.msra.mxu0 0.0
      %1932 = vmatprep.subr.mxu0 0.0
      %1933 = vmatpush1.xpose.msra.mxu0 0.0
      %1934 = vmatprep.subr.mxu0 0.0
      %1935 = vmatpush1.xpose.msra.mxu0 0.0
      %1936 = vmatprep.subr.mxu0 0.0
      %1937 = vmatpush1.xpose.msra.mxu0 0.0
      %1938 = vmatprep.subr.mxu0 0.0
      %1939 = vmatpush1.xpose.msra.mxu0 0.0
      %1940 = vmatprep.subr.mxu0 0.0
      %1941 = vmatpush1.xpose.msra.mxu0 0.0
      %1942 = vmatprep.subr.mxu0 0.0
      %1943 = vmatpush1.xpose.msra.mxu0 0.0
      %1944 = vmatprep.subr.mxu0 0.0
      %1945 = vmatpush1.xpose.msra.mxu0 0.0
      %1946 = vmatprep.subr.mxu0 0.0
      %1947 = vmatpush1.xpose.msra.mxu0 0.0
      %1948 = vmatprep.subr.mxu0 0.0
      %1949 = vmatpush1.xpose.msra.mxu0 0.0
      %1950 = vmatprep.subr.mxu0 0.0
      %1951 = vmatpush1.xpose.msra.mxu0 0.0
      %1952 = vmatprep.subr.mxu0 0.0
      %1953 = vmatpush1.xpose.msra.mxu0 0.0
      %1954 = vmatprep.subr.mxu0 0.0
      %1955 = vmatpush1.xpose.msra.mxu0 0.0
      %1956 = vmatprep.subr.mxu0 0.0
      %1957 = vmatpush1.xpose.msra.mxu0 0.0
      %1958 = vmatprep.subr.mxu0 0.0
      %1959 = vmatpush1.xpose.msra.mxu0 0.0
      %1960 = vmatprep.subr.mxu0 0.0
      %1961 = vmatpush1.xpose.msra.mxu0 0.0
      %1962 = vmatprep.subr.mxu0 0.0
      %1963 = vmatpush1.xpose.msra.mxu0 0.0
      %1964 = vmatprep.mubr.f32.mxu0 0.0
      %1965 = vmatmul.mubr.f32.gmra.mrb[0].mxu0 %v1895
      %v1966 = vpop.f32.mrb[0].mxu0
      %v1967 = vadd.f32 0.0, %v1966
      %v1968 = vpop.f32.mrb[0].mxu0
      %1969 = vdwg.mxu0
      %v1971 = vsel %vm946, %v1097, 0
      %v1974 = vsel %vm946, %v1246, 0
      %1976 = vmatprep.subr.mxu0 0.0
      %1977 = vmatpush1.xpose.msra.mxu0 %v1974
      %1978 = vmatprep.subr.mxu0 0.0
      %1979 = vmatpush1.xpose.msra.mxu0 0.0
      %1980 = vmatprep.subr.mxu0 0.0
      %1981 = vmatpush1.xpose.msra.mxu0 0.0
      %1982 = vmatprep.subr.mxu0 0.0
      %1983 = vmatpush1.xpose.msra.mxu0 0.0
      %1984 = vmatprep.subr.mxu0 0.0
      %1985 = vmatpush1.xpose.msra.mxu0 0.0
      %1986 = vmatprep.subr.mxu0 0.0
      %1987 = vmatpush1.xpose.msra.mxu0 0.0
      %1988 = vmatprep.subr.mxu0 0.0
      %1989 = vmatpush1.xpose.msra.mxu0 0.0
      %1990 = vmatprep.subr.mxu0 0.0
      %1991 = vmatpush1.xpose.msra.mxu0 0.0
      %1992 = vmatprep.subr.mxu0 0.0
      %1993 = vmatpush1.xpose.msra.mxu0 0.0
      %1994 = vmatprep.subr.mxu0 0.0
      %1995 = vmatpush1.xpose.msra.mxu0 0.0
      %1996 = vmatprep.subr.mxu0 0.0
      %1997 = vmatpush1.xpose.msra.mxu0 0.0
      %1998 = vmatprep.subr.mxu0 0.0
      %1999 = vmatpush1.xpose.msra.mxu0 0.0
      %2000 = vmatprep.subr.mxu0 0.0
      %2001 = vmatpush1.xpose.msra.mxu0 0.0
      %2002 = vmatprep.subr.mxu0 0.0
      %2003 = vmatpush1.xpose.msra.mxu0 0.0
      %2004 = vmatprep.subr.mxu0 0.0
      %2005 = vmatpush1.xpose.msra.mxu0 0.0
      %2006 = vmatprep.subr.mxu0 0.0
      %2007 = vmatpush1.xpose.msra.mxu0 0.0
      %2008 = vmatprep.subr.mxu0 0.0
      %2009 = vmatpush1.xpose.msra.mxu0 0.0
      %2010 = vmatprep.subr.mxu0 0.0
      %2011 = vmatpush1.xpose.msra.mxu0 0.0
      %2012 = vmatprep.subr.mxu0 0.0
      %2013 = vmatpush1.xpose.msra.mxu0 0.0
      %2014 = vmatprep.subr.mxu0 0.0
      %2015 = vmatpush1.xpose.msra.mxu0 0.0
      %2016 = vmatprep.subr.mxu0 0.0
      %2017 = vmatpush1.xpose.msra.mxu0 0.0
      %2018 = vmatprep.subr.mxu0 0.0
      %2019 = vmatpush1.xpose.msra.mxu0 0.0
      %2020 = vmatprep.subr.mxu0 0.0
      %2021 = vmatpush1.xpose.msra.mxu0 0.0
      %2022 = vmatprep.subr.mxu0 0.0
      %2023 = vmatpush1.xpose.msra.mxu0 0.0
      %2024 = vmatprep.subr.mxu0 0.0
      %2025 = vmatpush1.xpose.msra.mxu0 0.0
      %2026 = vmatprep.subr.mxu0 0.0
      %2027 = vmatpush1.xpose.msra.mxu0 0.0
      %2028 = vmatprep.subr.mxu0 0.0
      %2029 = vmatpush1.xpose.msra.mxu0 0.0
      %2030 = vmatprep.subr.mxu0 0.0
      %2031 = vmatpush1.xpose.msra.mxu0 0.0
      %2032 = vmatprep.subr.mxu0 0.0
      %2033 = vmatpush1.xpose.msra.mxu0 0.0
      %2034 = vmatprep.subr.mxu0 0.0
      %2035 = vmatpush1.xpose.msra.mxu0 0.0
      %2036 = vmatprep.subr.mxu0 0.0
      %2037 = vmatpush1.xpose.msra.mxu0 0.0
      %2038 = vmatprep.subr.mxu0 0.0
      %2039 = vmatpush1.xpose.msra.mxu0 0.0
      %2040 = vmatprep.mubr.f32.mxu0 0.0
      %2041 = vmatmul.mubr.f32.gmra.mrb[0].mxu0 %v1971
      %v2042 = vpop.f32.mrb[0].mxu0
      %v2043 = vadd.f32 0.0, %v2042
      %v2044 = vpop.f32.mrb[0].mxu0
      %2045 = vdwg.mxu0
      %v2047 = vsel %vm946, %v1102, 0
      %v2050 = vsel %vm946, %v1251, 0
      %2052 = vmatprep.subr.mxu0 0.0
      %2053 = vmatpush1.xpose.msra.mxu0 %v2050
      %2054 = vmatprep.subr.mxu0 0.0
      %2055 = vmatpush1.xpose.msra.mxu0 0.0
      %2056 = vmatprep.subr.mxu0 0.0
      %2057 = vmatpush1.xpose.msra.mxu0 0.0
      %2058 = vmatprep.subr.mxu0 0.0
      %2059 = vmatpush1.xpose.msra.mxu0 0.0
      %2060 = vmatprep.subr.mxu0 0.0
      %2061 = vmatpush1.xpose.msra.mxu0 0.0
      %2062 = vmatprep.subr.mxu0 0.0
      %2063 = vmatpush1.xpose.msra.mxu0 0.0
      %2064 = vmatprep.subr.mxu0 0.0
      %2065 = vmatpush1.xpose.msra.mxu0 0.0
      %2066 = vmatprep.subr.mxu0 0.0
      %2067 = vmatpush1.xpose.msra.mxu0 0.0
      %2068 = vmatprep.subr.mxu0 0.0
      %2069 = vmatpush1.xpose.msra.mxu0 0.0
      %2070 = vmatprep.subr.mxu0 0.0
      %2071 = vmatpush1.xpose.msra.mxu0 0.0
      %2072 = vmatprep.subr.mxu0 0.0
      %2073 = vmatpush1.xpose.msra.mxu0 0.0
      %2074 = vmatprep.subr.mxu0 0.0
      %2075 = vmatpush1.xpose.msra.mxu0 0.0
      %2076 = vmatprep.subr.mxu0 0.0
      %2077 = vmatpush1.xpose.msra.mxu0 0.0
      %2078 = vmatprep.subr.mxu0 0.0
      %2079 = vmatpush1.xpose.msra.mxu0 0.0
      %2080 = vmatprep.subr.mxu0 0.0
      %2081 = vmatpush1.xpose.msra.mxu0 0.0
      %2082 = vmatprep.subr.mxu0 0.0
      %2083 = vmatpush1.xpose.msra.mxu0 0.0
      %2084 = vmatprep.subr.mxu0 0.0
      %2085 = vmatpush1.xpose.msra.mxu0 0.0
      %2086 = vmatprep.subr.mxu0 0.0
      %2087 = vmatpush1.xpose.msra.mxu0 0.0
      %2088 = vmatprep.subr.mxu0 0.0
      %2089 = vmatpush1.xpose.msra.mxu0 0.0
      %2090 = vmatprep.subr.mxu0 0.0
      %2091 = vmatpush1.xpose.msra.mxu0 0.0
      %2092 = vmatprep.subr.mxu0 0.0
      %2093 = vmatpush1.xpose.msra.mxu0 0.0
      %2094 = vmatprep.subr.mxu0 0.0
      %2095 = vmatpush1.xpose.msra.mxu0 0.0
      %2096 = vmatprep.subr.mxu0 0.0
      %2097 = vmatpush1.xpose.msra.mxu0 0.0
      %2098 = vmatprep.subr.mxu0 0.0
      %2099 = vmatpush1.xpose.msra.mxu0 0.0
      %2100 = vmatprep.subr.mxu0 0.0
      %2101 = vmatpush1.xpose.msra.mxu0 0.0
      %2102 = vmatprep.subr.mxu0 0.0
      %2103 = vmatpush1.xpose.msra.mxu0 0.0
      %2104 = vmatprep.subr.mxu0 0.0
      %2105 = vmatpush1.xpose.msra.mxu0 0.0
      %2106 = vmatprep.subr.mxu0 0.0
      %2107 = vmatpush1.xpose.msra.mxu0 0.0
      %2108 = vmatprep.subr.mxu0 0.0
      %2109 = vmatpush1.xpose.msra.mxu0 0.0
      %2110 = vmatprep.subr.mxu0 0.0
      %2111 = vmatpush1.xpose.msra.mxu0 0.0
      %2112 = vmatprep.subr.mxu0 0.0
      %2113 = vmatpush1.xpose.msra.mxu0 0.0
      %2114 = vmatprep.subr.mxu0 0.0
      %2115 = vmatpush1.xpose.msra.mxu0 0.0
      %2116 = vmatprep.mubr.f32.mxu0 0.0
      %2117 = vmatmul.mubr.f32.gmra.mrb[0].mxu0 %v2047
      %v2118 = vpop.f32.mrb[0].mxu0
      %v2119 = vadd.f32 0.0, %v2118
      %v2120 = vpop.f32.mrb[0].mxu0
      %2121 = vdwg.mxu0
      %v2123 = vsel %vm946, %v1107, 0
      %v2126 = vsel %vm946, %v1256, 0
      %2128 = vmatprep.subr.mxu0 0.0
      %2129 = vmatpush1.xpose.msra.mxu0 %v2126
      %2130 = vmatprep.subr.mxu0 0.0
      %2131 = vmatpush1.xpose.msra.mxu0 0.0
      %2132 = vmatprep.subr.mxu0 0.0
      %2133 = vmatpush1.xpose.msra.mxu0 0.0
      %2134 = vmatprep.subr.mxu0 0.0
      %2135 = vmatpush1.xpose.msra.mxu0 0.0
      %2136 = vmatprep.subr.mxu0 0.0
      %2137 = vmatpush1.xpose.msra.mxu0 0.0
      %2138 = vmatprep.subr.mxu0 0.0
      %2139 = vmatpush1.xpose.msra.mxu0 0.0
      %2140 = vmatprep.subr.mxu0 0.0
      %2141 = vmatpush1.xpose.msra.mxu0 0.0
      %2142 = vmatprep.subr.mxu0 0.0
      %2143 = vmatpush1.xpose.msra.mxu0 0.0
      %2144 = vmatprep.subr.mxu0 0.0
      %2145 = vmatpush1.xpose.msra.mxu0 0.0
      %2146 = vmatprep.subr.mxu0 0.0
      %2147 = vmatpush1.xpose.msra.mxu0 0.0
      %2148 = vmatprep.subr.mxu0 0.0
      %2149 = vmatpush1.xpose.msra.mxu0 0.0
      %2150 = vmatprep.subr.mxu0 0.0
      %2151 = vmatpush1.xpose.msra.mxu0 0.0
      %2152 = vmatprep.subr.mxu0 0.0
      %2153 = vmatpush1.xpose.msra.mxu0 0.0
      %2154 = vmatprep.subr.mxu0 0.0
      %2155 = vmatpush1.xpose.msra.mxu0 0.0
      %2156 = vmatprep.subr.mxu0 0.0
      %2157 = vmatpush1.xpose.msra.mxu0 0.0
      %2158 = vmatprep.subr.mxu0 0.0
      %2159 = vmatpush1.xpose.msra.mxu0 0.0
      %2160 = vmatprep.subr.mxu0 0.0
      %2161 = vmatpush1.xpose.msra.mxu0 0.0
      %2162 = vmatprep.subr.mxu0 0.0
      %2163 = vmatpush1.xpose.msra.mxu0 0.0
      %2164 = vmatprep.subr.mxu0 0.0
      %2165 = vmatpush1.xpose.msra.mxu0 0.0
      %2166 = vmatprep.subr.mxu0 0.0
      %2167 = vmatpush1.xpose.msra.mxu0 0.0
      %2168 = vmatprep.subr.mxu0 0.0
      %2169 = vmatpush1.xpose.msra.mxu0 0.0
      %2170 = vmatprep.subr.mxu0 0.0
      %2171 = vmatpush1.xpose.msra.mxu0 0.0
      %2172 = vmatprep.subr.mxu0 0.0
      %2173 = vmatpush1.xpose.msra.mxu0 0.0
      %2174 = vmatprep.subr.mxu0 0.0
      %2175 = vmatpush1.xpose.msra.mxu0 0.0
      %2176 = vmatprep.subr.mxu0 0.0
      %2177 = vmatpush1.xpose.msra.mxu0 0.0
      %2178 = vmatprep.subr.mxu0 0.0
      %2179 = vmatpush1.xpose.msra.mxu0 0.0
      %2180 = vmatprep.subr.mxu0 0.0
      %2181 = vmatpush1.xpose.msra.mxu0 0.0
      %2182 = vmatprep.subr.mxu0 0.0
      %2183 = vmatpush1.xpose.msra.mxu0 0.0
      %2184 = vmatprep.subr.mxu0 0.0
      %2185 = vmatpush1.xpose.msra.mxu0 0.0
      %2186 = vmatprep.subr.mxu0 0.0
      %2187 = vmatpush1.xpose.msra.mxu0 0.0
      %2188 = vmatprep.subr.mxu0 0.0
      %2189 = vmatpush1.xpose.msra.mxu0 0.0
      %2190 = vmatprep.subr.mxu0 0.0
      %2191 = vmatpush1.xpose.msra.mxu0 0.0
      %2192 = vmatprep.mubr.f32.mxu0 0.0
      %2193 = vmatmul.mubr.f32.gmra.mrb[0].mxu0 %v2123
      %v2194 = vpop.f32.mrb[0].mxu0
      %v2195 = vadd.f32 0.0, %v2194
      %v2196 = vpop.f32.mrb[0].mxu0
      %2197 = vdwg.mxu0
      %v2199 = vsel %vm946, %v1112, 0
      %v2202 = vsel %vm946, %v1261, 0
      %2204 = vmatprep.subr.mxu0 0.0
      %2205 = vmatpush1.xpose.msra.mxu0 %v2202
      %2206 = vmatprep.subr.mxu0 0.0
      %2207 = vmatpush1.xpose.msra.mxu0 0.0
      %2208 = vmatprep.subr.mxu0 0.0
      %2209 = vmatpush1.xpose.msra.mxu0 0.0
      %2210 = vmatprep.subr.mxu0 0.0
      %2211 = vmatpush1.xpose.msra.mxu0 0.0
      %2212 = vmatprep.subr.mxu0 0.0
      %2213 = vmatpush1.xpose.msra.mxu0 0.0
      %2214 = vmatprep.subr.mxu0 0.0
      %2215 = vmatpush1.xpose.msra.mxu0 0.0
      %2216 = vmatprep.subr.mxu0 0.0
      %2217 = vmatpush1.xpose.msra.mxu0 0.0
      %2218 = vmatprep.subr.mxu0 0.0
      %2219 = vmatpush1.xpose.msra.mxu0 0.0
      %2220 = vmatprep.subr.mxu0 0.0
      %2221 = vmatpush1.xpose.msra.mxu0 0.0
      %2222 = vmatprep.subr.mxu0 0.0
      %2223 = vmatpush1.xpose.msra.mxu0 0.0
      %2224 = vmatprep.subr.mxu0 0.0
      %2225 = vmatpush1.xpose.msra.mxu0 0.0
      %2226 = vmatprep.subr.mxu0 0.0
      %2227 = vmatpush1.xpose.msra.mxu0 0.0
      %2228 = vmatprep.subr.mxu0 0.0
      %2229 = vmatpush1.xpose.msra.mxu0 0.0
      %2230 = vmatprep.subr.mxu0 0.0
      %2231 = vmatpush1.xpose.msra.mxu0 0.0
      %2232 = vmatprep.subr.mxu0 0.0
      %2233 = vmatpush1.xpose.msra.mxu0 0.0
      %2234 = vmatprep.subr.mxu0 0.0
      %2235 = vmatpush1.xpose.msra.mxu0 0.0
      %2236 = vmatprep.subr.mxu0 0.0
      %2237 = vmatpush1.xpose.msra.mxu0 0.0
      %2238 = vmatprep.subr.mxu0 0.0
      %2239 = vmatpush1.xpose.msra.mxu0 0.0
      %2240 = vmatprep.subr.mxu0 0.0
      %2241 = vmatpush1.xpose.msra.mxu0 0.0
      %2242 = vmatprep.subr.mxu0 0.0
      %2243 = vmatpush1.xpose.msra.mxu0 0.0
      %2244 = vmatprep.subr.mxu0 0.0
      %2245 = vmatpush1.xpose.msra.mxu0 0.0
      %2246 = vmatprep.subr.mxu0 0.0
      %2247 = vmatpush1.xpose.msra.mxu0 0.0
      %2248 = vmatprep.subr.mxu0 0.0
      %2249 = vmatpush1.xpose.msra.mxu0 0.0
      %2250 = vmatprep.subr.mxu0 0.0
      %2251 = vmatpush1.xpose.msra.mxu0 0.0
      %2252 = vmatprep.subr.mxu0 0.0
      %2253 = vmatpush1.xpose.msra.mxu0 0.0
      %2254 = vmatprep.subr.mxu0 0.0
      %2255 = vmatpush1.xpose.msra.mxu0 0.0
      %2256 = vmatprep.subr.mxu0 0.0
      %2257 = vmatpush1.xpose.msra.mxu0 0.0
      %2258 = vmatprep.subr.mxu0 0.0
      %2259 = vmatpush1.xpose.msra.mxu0 0.0
      %2260 = vmatprep.subr.mxu0 0.0
      %2261 = vmatpush1.xpose.msra.mxu0 0.0
      %2262 = vmatprep.subr.mxu0 0.0
      %2263 = vmatpush1.xpose.msra.mxu0 0.0
      %2264 = vmatprep.subr.mxu0 0.0
      %2265 = vmatpush1.xpose.msra.mxu0 0.0
      %2266 = vmatprep.subr.mxu0 0.0
      %2267 = vmatpush1.xpose.msra.mxu0 0.0
      %2268 = vmatprep.mubr.f32.mxu0 0.0
      %2269 = vmatmul.mubr.f32.gmra.mrb[0].mxu0 %v2199
      %v2270 = vpop.f32.mrb[0].mxu0
      %v2271 = vadd.f32 0.0, %v2270
      %v2272 = vpop.f32.mrb[0].mxu0
      %2273 = vdwg.mxu0
      %v2275 = vsel %vm946, %v1117, 0
      %v2278 = vsel %vm946, %v1266, 0
      %2280 = vmatprep.subr.mxu0 0.0
      %2281 = vmatpush1.xpose.msra.mxu0 %v2278
      %2282 = vmatprep.subr.mxu0 0.0
      %2283 = vmatpush1.xpose.msra.mxu0 0.0
      %2284 = vmatprep.subr.mxu0 0.0
      %2285 = vmatpush1.xpose.msra.mxu0 0.0
      %2286 = vmatprep.subr.mxu0 0.0
      %2287 = vmatpush1.xpose.msra.mxu0 0.0
      %2288 = vmatprep.subr.mxu0 0.0
      %2289 = vmatpush1.xpose.msra.mxu0 0.0
      %2290 = vmatprep.subr.mxu0 0.0
      %2291 = vmatpush1.xpose.msra.mxu0 0.0
      %2292 = vmatprep.subr.mxu0 0.0
      %2293 = vmatpush1.xpose.msra.mxu0 0.0
      %2294 = vmatprep.subr.mxu0 0.0
      %2295 = vmatpush1.xpose.msra.mxu0 0.0
      %2296 = vmatprep.subr.mxu0 0.0
      %2297 = vmatpush1.xpose.msra.mxu0 0.0
      %2298 = vmatprep.subr.mxu0 0.0
      %2299 = vmatpush1.xpose.msra.mxu0 0.0
      %2300 = vmatprep.subr.mxu0 0.0
      %2301 = vmatpush1.xpose.msra.mxu0 0.0
      %2302 = vmatprep.subr.mxu0 0.0
      %2303 = vmatpush1.xpose.msra.mxu0 0.0
      %2304 = vmatprep.subr.mxu0 0.0
      %2305 = vmatpush1.xpose.msra.mxu0 0.0
      %2306 = vmatprep.subr.mxu0 0.0
      %2307 = vmatpush1.xpose.msra.mxu0 0.0
      %2308 = vmatprep.subr.mxu0 0.0
      %2309 = vmatpush1.xpose.msra.mxu0 0.0
      %2310 = vmatprep.subr.mxu0 0.0
      %2311 = vmatpush1.xpose.msra.mxu0 0.0
      %2312 = vmatprep.subr.mxu0 0.0
      %2313 = vmatpush1.xpose.msra.mxu0 0.0
      %2314 = vmatprep.subr.mxu0 0.0
      %2315 = vmatpush1.xpose.msra.mxu0 0.0
      %2316 = vmatprep.subr.mxu0 0.0
      %2317 = vmatpush1.xpose.msra.mxu0 0.0
      %2318 = vmatprep.subr.mxu0 0.0
      %2319 = vmatpush1.xpose.msra.mxu0 0.0
      %2320 = vmatprep.subr.mxu0 0.0
      %2321 = vmatpush1.xpose.msra.mxu0 0.0
      %2322 = vmatprep.subr.mxu0 0.0
      %2323 = vmatpush1.xpose.msra.mxu0 0.0
      %2324 = vmatprep.subr.mxu0 0.0
      %2325 = vmatpush1.xpose.msra.mxu0 0.0
      %2326 = vmatprep.subr.mxu0 0.0
      %2327 = vmatpush1.xpose.msra.mxu0 0.0
      %2328 = vmatprep.subr.mxu0 0.0
      %2329 = vmatpush1.xpose.msra.mxu0 0.0
      %2330 = vmatprep.subr.mxu0 0.0
      %2331 = vmatpush1.xpose.msra.mxu0 0.0
      %2332 = vmatprep.subr.mxu0 0.0
      %2333 = vmatpush1.xpose.msra.mxu0 0.0
      %2334 = vmatprep.subr.mxu0 0.0
      %2335 = vmatpush1.xpose.msra.mxu0 0.0
      %2336 = vmatprep.subr.mxu0 0.0
      %2337 = vmatpush1.xpose.msra.mxu0 0.0
      %2338 = vmatprep.subr.mxu0 0.0
      %2339 = vmatpush1.xpose.msra.mxu0 0.0
      %2340 = vmatprep.subr.mxu0 0.0
      %2341 = vmatpush1.xpose.msra.mxu0 0.0
      %2342 = vmatprep.subr.mxu0 0.0
      %2343 = vmatpush1.xpose.msra.mxu0 0.0
      %2344 = vmatprep.mubr.f32.mxu0 0.0
      %2345 = vmatmul.mubr.f32.gmra.mrb[0].mxu0 %v2275
      %v2346 = vpop.f32.mrb[0].mxu0
      %v2347 = vadd.f32 0.0, %v2346
      %v2348 = vpop.f32.mrb[0].mxu0
      %2349 = vdwg.mxu0
      %v2351 = vsel %vm946, %v1122, 0
      %v2354 = vsel %vm946, %v1271, 0
      %2356 = vmatprep.subr.mxu0 0.0
      %2357 = vmatpush1.xpose.msra.mxu0 %v2354
      %2358 = vmatprep.subr.mxu0 0.0
      %2359 = vmatpush1.xpose.msra.mxu0 0.0
      %2360 = vmatprep.subr.mxu0 0.0
      %2361 = vmatpush1.xpose.msra.mxu0 0.0
      %2362 = vmatprep.subr.mxu0 0.0
      %2363 = vmatpush1.xpose.msra.mxu0 0.0
      %2364 = vmatprep.subr.mxu0 0.0
      %2365 = vmatpush1.xpose.msra.mxu0 0.0
      %2366 = vmatprep.subr.mxu0 0.0
      %2367 = vmatpush1.xpose.msra.mxu0 0.0
      %2368 = vmatprep.subr.mxu0 0.0
      %2369 = vmatpush1.xpose.msra.mxu0 0.0
      %2370 = vmatprep.subr.mxu0 0.0
      %2371 = vmatpush1.xpose.msra.mxu0 0.0
      %2372 = vmatprep.subr.mxu0 0.0
      %2373 = vmatpush1.xpose.msra.mxu0 0.0
      %2374 = vmatprep.subr.mxu0 0.0
      %2375 = vmatpush1.xpose.msra.mxu0 0.0
      %2376 = vmatprep.subr.mxu0 0.0
      %2377 = vmatpush1.xpose.msra.mxu0 0.0
      %2378 = vmatprep.subr.mxu0 0.0
      %2379 = vmatpush1.xpose.msra.mxu0 0.0
      %2380 = vmatprep.subr.mxu0 0.0
      %2381 = vmatpush1.xpose.msra.mxu0 0.0
      %2382 = vmatprep.subr.mxu0 0.0
      %2383 = vmatpush1.xpose.msra.mxu0 0.0
      %2384 = vmatprep.subr.mxu0 0.0
      %2385 = vmatpush1.xpose.msra.mxu0 0.0
      %2386 = vmatprep.subr.mxu0 0.0
      %2387 = vmatpush1.xpose.msra.mxu0 0.0
      %2388 = vmatprep.subr.mxu0 0.0
      %2389 = vmatpush1.xpose.msra.mxu0 0.0
      %2390 = vmatprep.subr.mxu0 0.0
      %2391 = vmatpush1.xpose.msra.mxu0 0.0
      %2392 = vmatprep.subr.mxu0 0.0
      %2393 = vmatpush1.xpose.msra.mxu0 0.0
      %2394 = vmatprep.subr.mxu0 0.0
      %2395 = vmatpush1.xpose.msra.mxu0 0.0
      %2396 = vmatprep.subr.mxu0 0.0
      %2397 = vmatpush1.xpose.msra.mxu0 0.0
      %2398 = vmatprep.subr.mxu0 0.0
      %2399 = vmatpush1.xpose.msra.mxu0 0.0
      %2400 = vmatprep.subr.mxu0 0.0
      %2401 = vmatpush1.xpose.msra.mxu0 0.0
      %2402 = vmatprep.subr.mxu0 0.0
      %2403 = vmatpush1.xpose.msra.mxu0 0.0
      %2404 = vmatprep.subr.mxu0 0.0
      %2405 = vmatpush1.xpose.msra.mxu0 0.0
      %2406 = vmatprep.subr.mxu0 0.0
      %2407 = vmatpush1.xpose.msra.mxu0 0.0
      %2408 = vmatprep.subr.mxu0 0.0
      %2409 = vmatpush1.xpose.msra.mxu0 0.0
      %2410 = vmatprep.subr.mxu0 0.0
      %2411 = vmatpush1.xpose.msra.mxu0 0.0
      %2412 = vmatprep.subr.mxu0 0.0
      %2413 = vmatpush1.xpose.msra.mxu0 0.0
      %2414 = vmatprep.subr.mxu0 0.0
      %2415 = vmatpush1.xpose.msra.mxu0 0.0
      %2416 = vmatprep.subr.mxu0 0.0
      %2417 = vmatpush1.xpose.msra.mxu0 0.0
      %2418 = vmatprep.subr.mxu0 0.0
      %2419 = vmatpush1.xpose.msra.mxu0 0.0
      %2420 = vmatprep.mubr.f32.mxu0 0.0
      %2421 = vmatmul.mubr.f32.gmra.mrb[0].mxu0 %v2351
      %v2422 = vpop.f32.mrb[0].mxu0
      %v2423 = vadd.f32 0.0, %v2422
      %v2424 = vpop.f32.mrb[0].mxu0
      %2425 = vdwg.mxu0
      %v2427 = vsel %vm946, %v1127, 0
      %v2430 = vsel %vm946, %v1276, 0
      %2432 = vmatprep.subr.mxu0 0.0
      %2433 = vmatpush1.xpose.msra.mxu0 %v2430
      %2434 = vmatprep.subr.mxu0 0.0
      %2435 = vmatpush1.xpose.msra.mxu0 0.0
      %2436 = vmatprep.subr.mxu0 0.0
      %2437 = vmatpush1.xpose.msra.mxu0 0.0
      %2438 = vmatprep.subr.mxu0 0.0
      %2439 = vmatpush1.xpose.msra.mxu0 0.0
      %2440 = vmatprep.subr.mxu0 0.0
      %2441 = vmatpush1.xpose.msra.mxu0 0.0
      %2442 = vmatprep.subr.mxu0 0.0
      %2443 = vmatpush1.xpose.msra.mxu0 0.0
      %2444 = vmatprep.subr.mxu0 0.0
      %2445 = vmatpush1.xpose.msra.mxu0 0.0
      %2446 = vmatprep.subr.mxu0 0.0
      %2447 = vmatpush1.xpose.msra.mxu0 0.0
      %2448 = vmatprep.subr.mxu0 0.0
      %2449 = vmatpush1.xpose.msra.mxu0 0.0
      %2450 = vmatprep.subr.mxu0 0.0
      %2451 = vmatpush1.xpose.msra.mxu0 0.0
      %2452 = vmatprep.subr.mxu0 0.0
      %2453 = vmatpush1.xpose.msra.mxu0 0.0
      %2454 = vmatprep.subr.mxu0 0.0
      %2455 = vmatpush1.xpose.msra.mxu0 0.0
      %2456 = vmatprep.subr.mxu0 0.0
      %2457 = vmatpush1.xpose.msra.mxu0 0.0
      %2458 = vmatprep.subr.mxu0 0.0
      %2459 = vmatpush1.xpose.msra.mxu0 0.0
      %2460 = vmatprep.subr.mxu0 0.0
      %2461 = vmatpush1.xpose.msra.mxu0 0.0
      %2462 = vmatprep.subr.mxu0 0.0
      %2463 = vmatpush1.xpose.msra.mxu0 0.0
      %2464 = vmatprep.subr.mxu0 0.0
      %2465 = vmatpush1.xpose.msra.mxu0 0.0
      %2466 = vmatprep.subr.mxu0 0.0
      %2467 = vmatpush1.xpose.msra.mxu0 0.0
      %2468 = vmatprep.subr.mxu0 0.0
      %2469 = vmatpush1.xpose.msra.mxu0 0.0
      %2470 = vmatprep.subr.mxu0 0.0
      %2471 = vmatpush1.xpose.msra.mxu0 0.0
      %2472 = vmatprep.subr.mxu0 0.0
      %2473 = vmatpush1.xpose.msra.mxu0 0.0
      %2474 = vmatprep.subr.mxu0 0.0
      %2475 = vmatpush1.xpose.msra.mxu0 0.0
      %2476 = vmatprep.subr.mxu0 0.0
      %2477 = vmatpush1.xpose.msra.mxu0 0.0
      %2478 = vmatprep.subr.mxu0 0.0
      %2479 = vmatpush1.xpose.msra.mxu0 0.0
      %2480 = vmatprep.subr.mxu0 0.0
      %2481 = vmatpush1.xpose.msra.mxu0 0.0
      %2482 = vmatprep.subr.mxu0 0.0
      %2483 = vmatpush1.xpose.msra.mxu0 0.0
      %2484 = vmatprep.subr.mxu0 0.0
      %2485 = vmatpush1.xpose.msra.mxu0 0.0
      %2486 = vmatprep.subr.mxu0 0.0
      %2487 = vmatpush1.xpose.msra.mxu0 0.0
      %2488 = vmatprep.subr.mxu0 0.0
      %2489 = vmatpush1.xpose.msra.mxu0 0.0
      %2490 = vmatprep.subr.mxu0 0.0
      %2491 = vmatpush1.xpose.msra.mxu0 0.0
      %2492 = vmatprep.subr.mxu0 0.0
      %2493 = vmatpush1.xpose.msra.mxu0 0.0
      %2494 = vmatprep.subr.mxu0 0.0
      %2495 = vmatpush1.xpose.msra.mxu0 0.0
      %2496 = vmatprep.mubr.f32.mxu0 0.0
      %2497 = vmatmul.mubr.f32.gmra.mrb[0].mxu0 %v2427
      %v2498 = vpop.f32.mrb[0].mxu0
      %v2499 = vadd.f32 0.0, %v2498
      %v2500 = vpop.f32.mrb[0].mxu0
      %2501 = vdwg.mxu0
      %v2503 = vsel %vm946, %v1132, 0
      %v2506 = vsel %vm946, %v1281, 0
      %2508 = vmatprep.subr.mxu0 0.0
      %2509 = vmatpush1.xpose.msra.mxu0 %v2506
      %2510 = vmatprep.subr.mxu0 0.0
      %2511 = vmatpush1.xpose.msra.mxu0 0.0
      %2512 = vmatprep.subr.mxu0 0.0
      %2513 = vmatpush1.xpose.msra.mxu0 0.0
      %2514 = vmatprep.subr.mxu0 0.0
      %2515 = vmatpush1.xpose.msra.mxu0 0.0
      %2516 = vmatprep.subr.mxu0 0.0
      %2517 = vmatpush1.xpose.msra.mxu0 0.0
      %2518 = vmatprep.subr.mxu0 0.0
      %2519 = vmatpush1.xpose.msra.mxu0 0.0
      %2520 = vmatprep.subr.mxu0 0.0
      %2521 = vmatpush1.xpose.msra.mxu0 0.0
      %2522 = vmatprep.subr.mxu0 0.0
      %2523 = vmatpush1.xpose.msra.mxu0 0.0
      %2524 = vmatprep.subr.mxu0 0.0
      %2525 = vmatpush1.xpose.msra.mxu0 0.0
      %2526 = vmatprep.subr.mxu0 0.0
      %2527 = vmatpush1.xpose.msra.mxu0 0.0
      %2528 = vmatprep.subr.mxu0 0.0
      %2529 = vmatpush1.xpose.msra.mxu0 0.0
      %2530 = vmatprep.subr.mxu0 0.0
      %2531 = vmatpush1.xpose.msra.mxu0 0.0
      %2532 = vmatprep.subr.mxu0 0.0
      %2533 = vmatpush1.xpose.msra.mxu0 0.0
      %2534 = vmatprep.subr.mxu0 0.0
      %2535 = vmatpush1.xpose.msra.mxu0 0.0
      %2536 = vmatprep.subr.mxu0 0.0
      %2537 = vmatpush1.xpose.msra.mxu0 0.0
      %2538 = vmatprep.subr.mxu0 0.0
      %2539 = vmatpush1.xpose.msra.mxu0 0.0
      %2540 = vmatprep.subr.mxu0 0.0
      %2541 = vmatpush1.xpose.msra.mxu0 0.0
      %2542 = vmatprep.subr.mxu0 0.0
      %2543 = vmatpush1.xpose.msra.mxu0 0.0
      %2544 = vmatprep.subr.mxu0 0.0
      %2545 = vmatpush1.xpose.msra.mxu0 0.0
      %2546 = vmatprep.subr.mxu0 0.0
      %2547 = vmatpush1.xpose.msra.mxu0 0.0
      %2548 = vmatprep.subr.mxu0 0.0
      %2549 = vmatpush1.xpose.msra.mxu0 0.0
      %2550 = vmatprep.subr.mxu0 0.0
      %2551 = vmatpush1.xpose.msra.mxu0 0.0
      %2552 = vmatprep.subr.mxu0 0.0
      %2553 = vmatpush1.xpose.msra.mxu0 0.0
      %2554 = vmatprep.subr.mxu0 0.0
      %2555 = vmatpush1.xpose.msra.mxu0 0.0
      %2556 = vmatprep.subr.mxu0 0.0
      %2557 = vmatpush1.xpose.msra.mxu0 0.0
      %2558 = vmatprep.subr.mxu0 0.0
      %2559 = vmatpush1.xpose.msra.mxu0 0.0
      %2560 = vmatprep.subr.mxu0 0.0
      %2561 = vmatpush1.xpose.msra.mxu0 0.0
      %2562 = vmatprep.subr.mxu0 0.0
      %2563 = vmatpush1.xpose.msra.mxu0 0.0
      %2564 = vmatprep.subr.mxu0 0.0
      %2565 = vmatpush1.xpose.msra.mxu0 0.0
      %2566 = vmatprep.subr.mxu0 0.0
      %2567 = vmatpush1.xpose.msra.mxu0 0.0
      %2568 = vmatprep.subr.mxu0 0.0
      %2569 = vmatpush1.xpose.msra.mxu0 0.0
      %2570 = vmatprep.subr.mxu0 0.0
      %2571 = vmatpush1.xpose.msra.mxu0 0.0
      %2572 = vmatprep.mubr.f32.mxu0 0.0
      %2573 = vmatmul.mubr.f32.gmra.mrb[0].mxu0 %v2503
      %v2574 = vpop.f32.mrb[0].mxu0
      %v2575 = vadd.f32 0.0, %v2574
      %v2576 = vpop.f32.mrb[0].mxu0
      %2577 = vdwg.mxu0
      %v2579 = vsel %vm946, %v1137, 0
      %v2582 = vsel %vm946, %v1286, 0
      %2584 = vmatprep.subr.mxu0 0.0
      %2585 = vmatpush1.xpose.msra.mxu0 %v2582
      %2586 = vmatprep.subr.mxu0 0.0
      %2587 = vmatpush1.xpose.msra.mxu0 0.0
      %2588 = vmatprep.subr.mxu0 0.0
      %2589 = vmatpush1.xpose.msra.mxu0 0.0
      %2590 = vmatprep.subr.mxu0 0.0
      %2591 = vmatpush1.xpose.msra.mxu0 0.0
      %2592 = vmatprep.subr.mxu0 0.0
      %2593 = vmatpush1.xpose.msra.mxu0 0.0
      %2594 = vmatprep.subr.mxu0 0.0
      %2595 = vmatpush1.xpose.msra.mxu0 0.0
      %2596 = vmatprep.subr.mxu0 0.0
      %2597 = vmatpush1.xpose.msra.mxu0 0.0
      %2598 = vmatprep.subr.mxu0 0.0
      %2599 = vmatpush1.xpose.msra.mxu0 0.0
      %2600 = vmatprep.subr.mxu0 0.0
      %2601 = vmatpush1.xpose.msra.mxu0 0.0
      %2602 = vmatprep.subr.mxu0 0.0
      %2603 = vmatpush1.xpose.msra.mxu0 0.0
      %2604 = vmatprep.subr.mxu0 0.0
      %2605 = vmatpush1.xpose.msra.mxu0 0.0
      %2606 = vmatprep.subr.mxu0 0.0
      %2607 = vmatpush1.xpose.msra.mxu0 0.0
      %2608 = vmatprep.subr.mxu0 0.0
      %2609 = vmatpush1.xpose.msra.mxu0 0.0
      %2610 = vmatprep.subr.mxu0 0.0
      %2611 = vmatpush1.xpose.msra.mxu0 0.0
      %2612 = vmatprep.subr.mxu0 0.0
      %2613 = vmatpush1.xpose.msra.mxu0 0.0
      %2614 = vmatprep.subr.mxu0 0.0
      %2615 = vmatpush1.xpose.msra.mxu0 0.0
      %2616 = vmatprep.subr.mxu0 0.0
      %2617 = vmatpush1.xpose.msra.mxu0 0.0
      %2618 = vmatprep.subr.mxu0 0.0
      %2619 = vmatpush1.xpose.msra.mxu0 0.0
      %2620 = vmatprep.subr.mxu0 0.0
      %2621 = vmatpush1.xpose.msra.mxu0 0.0
      %2622 = vmatprep.subr.mxu0 0.0
      %2623 = vmatpush1.xpose.msra.mxu0 0.0
      %2624 = vmatprep.subr.mxu0 0.0
      %2625 = vmatpush1.xpose.msra.mxu0 0.0
      %2626 = vmatprep.subr.mxu0 0.0
      %2627 = vmatpush1.xpose.msra.mxu0 0.0
      %2628 = vmatprep.subr.mxu0 0.0
      %2629 = vmatpush1.xpose.msra.mxu0 0.0
      %2630 = vmatprep.subr.mxu0 0.0
      %2631 = vmatpush1.xpose.msra.mxu0 0.0
      %2632 = vmatprep.subr.mxu0 0.0
      %2633 = vmatpush1.xpose.msra.mxu0 0.0
      %2634 = vmatprep.subr.mxu0 0.0
      %2635 = vmatpush1.xpose.msra.mxu0 0.0
      %2636 = vmatprep.subr.mxu0 0.0
      %2637 = vmatpush1.xpose.msra.mxu0 0.0
      %2638 = vmatprep.subr.mxu0 0.0
      %2639 = vmatpush1.xpose.msra.mxu0 0.0
      %2640 = vmatprep.subr.mxu0 0.0
      %2641 = vmatpush1.xpose.msra.mxu0 0.0
      %2642 = vmatprep.subr.mxu0 0.0
      %2643 = vmatpush1.xpose.msra.mxu0 0.0
      %2644 = vmatprep.subr.mxu0 0.0
      %2645 = vmatpush1.xpose.msra.mxu0 0.0
      %2646 = vmatprep.subr.mxu0 0.0
      %2647 = vmatpush1.xpose.msra.mxu0 0.0
      %2648 = vmatprep.mubr.f32.mxu0 0.0
      %2649 = vmatmul.mubr.f32.gmra.mrb[0].mxu0 %v2579
      %v2650 = vpop.f32.mrb[0].mxu0
      %v2651 = vadd.f32 0.0, %v2650
      %v2652 = vpop.f32.mrb[0].mxu0
      %2653 = vdwg.mxu0
      %v2654 = vmul.f32 %v1511, 0.17677669
      %v2655 = vmul.f32 %v1587, 0.17677669
      %v2656 = vmul.f32 %v1663, 0.17677669
      %v2657 = vmul.f32 %v1739, 0.17677669
      %v2658 = vmul.f32 %v1815, 0.17677669
      %v2659 = vmul.f32 %v1891, 0.17677669
      %v2660 = vmul.f32 %v1967, 0.17677669
      %v2661 = vmul.f32 %v2043, 0.17677669
      %v2662 = vmul.f32 %v2119, 0.17677669
      %v2663 = vmul.f32 %v2195, 0.17677669
      %v2664 = vmul.f32 %v2271, 0.17677669
      %v2665 = vmul.f32 %v2347, 0.17677669
      %v2666 = vmul.f32 %v2423, 0.17677669
      %v2667 = vmul.f32 %v2499, 0.17677669
      %v2668 = vmul.f32 %v2575, 0.17677669
      %v2669 = vmul.f32 %v2651, 0.17677669
      %vm2670 = vcmask 64512
      %v2671 = vsel %vm2670, %v2654, -inf
      %2672 = vmax.xlane.f32.xlu0 %v2671
      %v2673 = vpop.xlane.xlu0 %2672
      %v2674 = vsel %vm2670, %v2655, -inf
      %2675 = vmax.xlane.f32.xlu0 %v2674
      %v2676 = vpop.xlane.xlu0 %2675
      %v2677 = vsel %vm2670, %v2656, -inf
      %2678 = vmax.xlane.f32.xlu0 %v2677
      %v2679 = vpop.xlane.xlu0 %2678
      %v2680 = vsel %vm2670, %v2657, -inf
      %2681 = vmax.xlane.f32.xlu0 %v2680
      %v2682 = vpop.xlane.xlu0 %2681
      %v2683 = vsel %vm2670, %v2658, -inf
      %2684 = vmax.xlane.f32.xlu0 %v2683
      %v2685 = vpop.xlane.xlu0 %2684
      %v2686 = vsel %vm2670, %v2659, -inf
      %2687 = vmax.xlane.f32.xlu0 %v2686
      %v2688 = vpop.xlane.xlu0 %2687
      %v2689 = vsel %vm2670, %v2660, -inf
      %2690 = vmax.xlane.f32.xlu0 %v2689
      %v2691 = vpop.xlane.xlu0 %2690
      %v2692 = vsel %vm2670, %v2661, -inf
      %2693 = vmax.xlane.f32.xlu0 %v2692
      %v2694 = vpop.xlane.xlu0 %2693
      %v2695 = vsel %vm2670, %v2662, -inf
      %2696 = vmax.xlane.f32.xlu0 %v2695
      %v2697 = vpop.xlane.xlu0 %2696
      %v2698 = vsel %vm2670, %v2663, -inf
      %2699 = vmax.xlane.f32.xlu0 %v2698
      %v2700 = vpop.xlane.xlu0 %2699
      %v2701 = vsel %vm2670, %v2664, -inf
      %2702 = vmax.xlane.f32.xlu0 %v2701
      %v2703 = vpop.xlane.xlu0 %2702
      %v2704 = vsel %vm2670, %v2665, -inf
      %2705 = vmax.xlane.f32.xlu0 %v2704
      %v2706 = vpop.xlane.xlu0 %2705
      %v2707 = vsel %vm2670, %v2666, -inf
      %2708 = vmax.xlane.f32.xlu0 %v2707
      %v2709 = vpop.xlane.xlu0 %2708
      %v2710 = vsel %vm2670, %v2667, -inf
      %2711 = vmax.xlane.f32.xlu0 %v2710
      %v2712 = vpop.xlane.xlu0 %2711
      %v2713 = vsel %vm2670, %v2668, -inf
      %2714 = vmax.xlane.f32.xlu0 %v2713
      %v2715 = vpop.xlane.xlu0 %2714
      %v2716 = vsel %vm2670, %v2669, -inf
      %2717 = vmax.xlane.f32.xlu0 %v2716
      %v2718 = vpop.xlane.xlu0 %2717
      %v2719 = vsub.f32 %v2654, %v2673
      %v2720 = vsub.f32 %v2655, %v2676
      %v2721 = vsub.f32 %v2656, %v2679
      %v2722 = vsub.f32 %v2657, %v2682
      %v2723 = vsub.f32 %v2658, %v2685
      %v2724 = vsub.f32 %v2659, %v2688
      %v2725 = vsub.f32 %v2660, %v2691
      %v2726 = vsub.f32 %v2661, %v2694
      %v2727 = vsub.f32 %v2662, %v2697
      %v2728 = vsub.f32 %v2663, %v2700
      %v2729 = vsub.f32 %v2664, %v2703
      %v2730 = vsub.f32 %v2665, %v2706
      %v2731 = vsub.f32 %v2666, %v2709
      %v2732 = vsub.f32 %v2667, %v2712
      %v2733 = vsub.f32 %v2668, %v2715
      %v2734 = vsub.f32 %v2669, %v2718
      %v2735 = vmul.f32 %v2719, 1.442695
      %v2736 = vpow.pop %v2735
      %v2737 = vmul.f32 %v2720, 1.442695
      %v2738 = vpow.pop %v2737
      %v2739 = vmul.f32 %v2721, 1.442695
      %v2740 = vpow.pop %v2739
      %v2741 = vmul.f32 %v2722, 1.442695
      %v2742 = vpow.pop %v2741
      %v2743 = vmul.f32 %v2723, 1.442695
      %v2744 = vpow.pop %v2743
      %v2745 = vmul.f32 %v2724, 1.442695
      %v2746 = vpow.pop %v2745
      %v2747 = vmul.f32 %v2725, 1.442695
      %v2748 = vpow.pop %v2747
      %v2749 = vmul.f32 %v2726, 1.442695
      %v2750 = vpow.pop %v2749
      %v2751 = vmul.f32 %v2727, 1.442695
      %v2752 = vpow.pop %v2751
      %v2753 = vmul.f32 %v2728, 1.442695
      %v2754 = vpow.pop %v2753
      %v2755 = vmul.f32 %v2729, 1.442695
      %v2756 = vpow.pop %v2755
      %v2757 = vmul.f32 %v2730, 1.442695
      %v2758 = vpow.pop %v2757
      %v2759 = vmul.f32 %v2731, 1.442695
      %v2760 = vpow.pop %v2759
      %v2761 = vmul.f32 %v2732, 1.442695
      %v2762 = vpow.pop %v2761
      %v2763 = vmul.f32 %v2733, 1.442695
      %v2764 = vpow.pop %v2763
      %v2765 = vmul.f32 %v2734, 1.442695
      %v2766 = vpow.pop %v2765
      %v2767 = vsel %vm2670, %v2736, 0.0
      %2768 = vadd.xlane.f32.xlu0 %v2767
      %v2769 = vpop.xlane.xlu0 %2768
      %v2770 = vsel %vm2670, %v2738, 0.0
      %2771 = vadd.xlane.f32.xlu0 %v2770
      %v2772 = vpop.xlane.xlu0 %2771
      %v2773 = vsel %vm2670, %v2740, 0.0
      %2774 = vadd.xlane.f32.xlu0 %v2773
      %v2775 = vpop.xlane.xlu0 %2774
      %v2776 = vsel %vm2670, %v2742, 0.0
      %2777 = vadd.xlane.f32.xlu0 %v2776
      %v2778 = vpop.xlane.xlu0 %2777
      %v2779 = vsel %vm2670, %v2744, 0.0
      %2780 = vadd.xlane.f32.xlu0 %v2779
      %v2781 = vpop.xlane.xlu0 %2780
      %v2782 = vsel %vm2670, %v2746, 0.0
      %2783 = vadd.xlane.f32.xlu0 %v2782
      %v2784 = vpop.xlane.xlu0 %2783
      %v2785 = vsel %vm2670, %v2748, 0.0
      %2786 = vadd.xlane.f32.xlu0 %v2785
      %v2787 = vpop.xlane.xlu0 %2786
      %v2788 = vsel %vm2670, %v2750, 0.0
      %2789 = vadd.xlane.f32.xlu0 %v2788
      %v2790 = vpop.xlane.xlu0 %2789
      %v2791 = vsel %vm2670, %v2752, 0.0
      %2792 = vadd.xlane.f32.xlu0 %v2791
      %v2793 = vpop.xlane.xlu0 %2792
      %v2794 = vsel %vm2670, %v2754, 0.0
      %2795 = vadd.xlane.f32.xlu0 %v2794
      %v2796 = vpop.xlane.xlu0 %2795
      %v2797 = vsel %vm2670, %v2756, 0.0
      %2798 = vadd.xlane.f32.xlu0 %v2797
      %v2799 = vpop.xlane.xlu0 %2798
      %v2800 = vsel %vm2670, %v2758, 0.0
      %2801 = vadd.xlane.f32.xlu0 %v2800
      %v2802 = vpop.xlane.xlu0 %2801
      %v2803 = vsel %vm2670, %v2760, 0.0
      %2804 = vadd.xlane.f32.xlu0 %v2803
      %v2805 = vpop.xlane.xlu0 %2804
      %v2806 = vsel %vm2670, %v2762, 0.0
      %2807 = vadd.xlane.f32.xlu0 %v2806
      %v2808 = vpop.xlane.xlu0 %2807
      %v2809 = vsel %vm2670, %v2764, 0.0
      %2810 = vadd.xlane.f32.xlu0 %v2809
      %v2811 = vpop.xlane.xlu0 %2810
      %v2812 = vsel %vm2670, %v2766, 0.0
      %2813 = vadd.xlane.f32.xlu0 %v2812
      %v2814 = vpop.xlane.xlu0 %2813
      %v2815 = vrcp.pop %v2769
      %v2816 = vmul.f32 %v2736, %v2815
      %v2817 = vrcp.pop %v2772
      %v2818 = vmul.f32 %v2738, %v2817
      %v2819 = vrcp.pop %v2775
      %v2820 = vmul.f32 %v2740, %v2819
      %v2821 = vrcp.pop %v2778
      %v2822 = vmul.f32 %v2742, %v2821
      %v2823 = vrcp.pop %v2781
      %v2824 = vmul.f32 %v2744, %v2823
      %v2825 = vrcp.pop %v2784
      %v2826 = vmul.f32 %v2746, %v2825
      %v2827 = vrcp.pop %v2787
      %v2828 = vmul.f32 %v2748, %v2827
      %v2829 = vrcp.pop %v2790
      %v2830 = vmul.f32 %v2750, %v2829
      %v2831 = vrcp.pop %v2793
      %v2832 = vmul.f32 %v2752, %v2831
      %v2833 = vrcp.pop %v2796
      %v2834 = vmul.f32 %v2754, %v2833
      %v2835 = vrcp.pop %v2799
      %v2836 = vmul.f32 %v2756, %v2835
      %v2837 = vrcp.pop %v2802
      %v2838 = vmul.f32 %v2758, %v2837
      %v2839 = vrcp.pop %v2805
      %v2840 = vmul.f32 %v2760, %v2839
      %v2841 = vrcp.pop %v2808
      %v2842 = vmul.f32 %v2762, %v2841
      %v2843 = vrcp.pop %v2811
      %v2844 = vmul.f32 %v2764, %v2843
      %v2845 = vrcp.pop %v2814
      %v2846 = vmul.f32 %v2766, %v2845
      %v2848 = vsel %vm2670, %v2816, 0
      %2850 = vmatprep.subr.mxu0 0.0
      %2851 = vmatpush1.msra.mxu0 %v1360
      %2852 = vmatprep.subr.mxu0 0.0
      %2853 = vmatpush1.msra.mxu0 0.0
      %2854 = vmatprep.subr.mxu0 0.0
      %2855 = vmatpush1.msra.mxu0 0.0
      %2856 = vmatprep.subr.mxu0 0.0
      %2857 = vmatpush1.msra.mxu0 0.0
      %2858 = vmatprep.subr.mxu0 0.0
      %2859 = vmatpush1.msra.mxu0 0.0
      %2860 = vmatprep.subr.mxu0 0.0
      %2861 = vmatpush1.msra.mxu0 0.0
      %2862 = vmatprep.subr.mxu0 0.0
      %2863 = vmatpush1.msra.mxu0 0.0
      %2864 = vmatprep.subr.mxu0 0.0
      %2865 = vmatpush1.msra.mxu0 0.0
      %2866 = vmatprep.subr.mxu0 0.0
      %2867 = vmatpush1.msra.mxu0 0.0
      %2868 = vmatprep.subr.mxu0 0.0
      %2869 = vmatpush1.msra.mxu0 0.0
      %2870 = vmatprep.subr.mxu0 0.0
      %2871 = vmatpush1.msra.mxu0 0.0
      %2872 = vmatprep.subr.mxu0 0.0
      %2873 = vmatpush1.msra.mxu0 0.0
      %2874 = vmatprep.subr.mxu0 0.0
      %2875 = vmatpush1.msra.mxu0 0.0
      %2876 = vmatprep.subr.mxu0 0.0
      %2877 = vmatpush1.msra.mxu0 0.0
      %2878 = vmatprep.subr.mxu0 0.0
      %2879 = vmatpush1.msra.mxu0 0.0
      %2880 = vmatprep.subr.mxu0 0.0
      %2881 = vmatpush1.msra.mxu0 0.0
      %2882 = vmatprep.subr.mxu0 0.0
      %2883 = vmatpush1.msra.mxu0 0.0
      %2884 = vmatprep.subr.mxu0 0.0
      %2885 = vmatpush1.msra.mxu0 0.0
      %2886 = vmatprep.subr.mxu0 0.0
      %2887 = vmatpush1.msra.mxu0 0.0
      %2888 = vmatprep.subr.mxu0 0.0
      %2889 = vmatpush1.msra.mxu0 0.0
      %2890 = vmatprep.subr.mxu0 0.0
      %2891 = vmatpush1.msra.mxu0 0.0
      %2892 = vmatprep.subr.mxu0 0.0
      %2893 = vmatpush1.msra.mxu0 0.0
      %2894 = vmatprep.subr.mxu0 0.0
      %2895 = vmatpush1.msra.mxu0 0.0
      %2896 = vmatprep.subr.mxu0 0.0
      %2897 = vmatpush1.msra.mxu0 0.0
      %2898 = vmatprep.subr.mxu0 0.0
      %2899 = vmatpush1.msra.mxu0 0.0
      %2900 = vmatprep.subr.mxu0 0.0
      %2901 = vmatpush1.msra.mxu0 0.0
      %2902 = vmatprep.subr.mxu0 0.0
      %2903 = vmatpush1.msra.mxu0 0.0
      %2904 = vmatprep.subr.mxu0 0.0
      %2905 = vmatpush1.msra.mxu0 0.0
      %2906 = vmatprep.subr.mxu0 0.0
      %2907 = vmatpush1.msra.mxu0 0.0
      %2908 = vmatprep.subr.mxu0 0.0
      %2909 = vmatpush1.msra.mxu0 0.0
      %2910 = vmatprep.subr.mxu0 0.0
      %2911 = vmatpush1.msra.mxu0 0.0
      %2912 = vmatprep.subr.mxu0 0.0
      %2913 = vmatpush1.msra.mxu0 0.0
      %2914 = vmatprep.mubr.f32.mxu0 0.0
      %2915 = vmatmul.mubr.f32.gmra.mrb[0].mxu0 %v2848
      %v2916 = vpop.f32.mrb[0].mxu0
      %v2917 = vadd.f32 0.0, %v2916
      %v2918 = vpop.f32.mrb[0].mxu0
      %2919 = vdwg.mxu0
      %v2921 = vsel %vm2670, %v2818, 0
      %2923 = vmatprep.subr.mxu0 0.0
      %2924 = vmatpush1.msra.mxu0 %v1365
      %2925 = vmatprep.subr.mxu0 0.0
      %2926 = vmatpush1.msra.mxu0 0.0
      %2927 = vmatprep.subr.mxu0 0.0
      %2928 = vmatpush1.msra.mxu0 0.0
      %2929 = vmatprep.subr.mxu0 0.0
      %2930 = vmatpush1.msra.mxu0 0.0
      %2931 = vmatprep.subr.mxu0 0.0
      %2932 = vmatpush1.msra.mxu0 0.0
      %2933 = vmatprep.subr.mxu0 0.0
      %2934 = vmatpush1.msra.mxu0 0.0
      %2935 = vmatprep.subr.mxu0 0.0
      %2936 = vmatpush1.msra.mxu0 0.0
      %2937 = vmatprep.subr.mxu0 0.0
      %2938 = vmatpush1.msra.mxu0 0.0
      %2939 = vmatprep.subr.mxu0 0.0
      %2940 = vmatpush1.msra.mxu0 0.0
      %2941 = vmatprep.subr.mxu0 0.0
      %2942 = vmatpush1.msra.mxu0 0.0
      %2943 = vmatprep.subr.mxu0 0.0
      %2944 = vmatpush1.msra.mxu0 0.0
      %2945 = vmatprep.subr.mxu0 0.0
      %2946 = vmatpush1.msra.mxu0 0.0
      %2947 = vmatprep.subr.mxu0 0.0
      %2948 = vmatpush1.msra.mxu0 0.0
      %2949 = vmatprep.subr.mxu0 0.0
      %2950 = vmatpush1.msra.mxu0 0.0
      %2951 = vmatprep.subr.mxu0 0.0
      %2952 = vmatpush1.msra.mxu0 0.0
      %2953 = vmatprep.subr.mxu0 0.0
      %2954 = vmatpush1.msra.mxu0 0.0
      %2955 = vmatprep.subr.mxu0 0.0
      %2956 = vmatpush1.msra.mxu0 0.0
      %2957 = vmatprep.subr.mxu0 0.0
      %2958 = vmatpush1.msra.mxu0 0.0
      %2959 = vmatprep.subr.mxu0 0.0
      %2960 = vmatpush1.msra.mxu0 0.0
      %2961 = vmatprep.subr.mxu0 0.0
      %2962 = vmatpush1.msra.mxu0 0.0
      %2963 = vmatprep.subr.mxu0 0.0
      %2964 = vmatpush1.msra.mxu0 0.0
      %2965 = vmatprep.subr.mxu0 0.0
      %2966 = vmatpush1.msra.mxu0 0.0
      %2967 = vmatprep.subr.mxu0 0.0
      %2968 = vmatpush1.msra.mxu0 0.0
      %2969 = vmatprep.subr.mxu0 0.0
      %2970 = vmatpush1.msra.mxu0 0.0
      %2971 = vmatprep.subr.mxu0 0.0
      %2972 = vmatpush1.msra.mxu0 0.0
      %2973 = vmatprep.subr.mxu0 0.0
      %2974 = vmatpush1.msra.mxu0 0.0
      %2975 = vmatprep.subr.mxu0 0.0
      %2976 = vmatpush1.msra.mxu0 0.0
      %2977 = vmatprep.subr.mxu0 0.0
      %2978 = vmatpush1.msra.mxu0 0.0
      %2979 = vmatprep.subr.mxu0 0.0
      %2980 = vmatpush1.msra.mxu0 0.0
      %2981 = vmatprep.subr.mxu0 0.0
      %2982 = vmatpush1.msra.mxu0 0.0
      %2983 = vmatprep.subr.mxu0 0.0
      %2984 = vmatpush1.msra.mxu0 0.0
      %2985 = vmatprep.subr.mxu0 0.0
      %2986 = vmatpush1.msra.mxu0 0.0
      %2987 = vmatprep.mubr.f32.mxu0 0.0
      %2988 = vmatmul.mubr.f32.gmra.mrb[0].mxu0 %v2921
      %v2989 = vpop.f32.mrb[0].mxu0
      %v2990 = vadd.f32 0.0, %v2989
      %v2991 = vpop.f32.mrb[0].mxu0
      %2992 = vdwg.mxu0
      %v2994 = vsel %vm2670, %v2820, 0
      %2996 = vmatprep.subr.mxu0 0.0
      %2997 = vmatpush1.msra.mxu0 %v1370
      %2998 = vmatprep.subr.mxu0 0.0
      %2999 = vmatpush1.msra.mxu0 0.0
      %3000 = vmatprep.subr.mxu0 0.0
      %3001 = vmatpush1.msra.mxu0 0.0
      %3002 = vmatprep.subr.mxu0 0.0
      %3003 = vmatpush1.msra.mxu0 0.0
      %3004 = vmatprep.subr.mxu0 0.0
      %3005 = vmatpush1.msra.mxu0 0.0
      %3006 = vmatprep.subr.mxu0 0.0
      %3007 = vmatpush1.msra.mxu0 0.0
      %3008 = vmatprep.subr.mxu0 0.0
      %3009 = vmatpush1.msra.mxu0 0.0
      %3010 = vmatprep.subr.mxu0 0.0
      %3011 = vmatpush1.msra.mxu0 0.0
      %3012 = vmatprep.subr.mxu0 0.0
      %3013 = vmatpush1.msra.mxu0 0.0
      %3014 = vmatprep.subr.mxu0 0.0
      %3015 = vmatpush1.msra.mxu0 0.0
      %3016 = vmatprep.subr.mxu0 0.0
      %3017 = vmatpush1.msra.mxu0 0.0
      %3018 = vmatprep.subr.mxu0 0.0
      %3019 = vmatpush1.msra.mxu0 0.0
      %3020 = vmatprep.subr.mxu0 0.0
      %3021 = vmatpush1.msra.mxu0 0.0
      %3022 = vmatprep.subr.mxu0 0.0
      %3023 = vmatpush1.msra.mxu0 0.0
      %3024 = vmatprep.subr.mxu0 0.0
      %3025 = vmatpush1.msra.mxu0 0.0
      %3026 = vmatprep.subr.mxu0 0.0
      %3027 = vmatpush1.msra.mxu0 0.0
      %3028 = vmatprep.subr.mxu0 0.0
      %3029 = vmatpush1.msra.mxu0 0.0
      %3030 = vmatprep.subr.mxu0 0.0
      %3031 = vmatpush1.msra.mxu0 0.0
      %3032 = vmatprep.subr.mxu0 0.0
      %3033 = vmatpush1.msra.mxu0 0.0
      %3034 = vmatprep.subr.mxu0 0.0
      %3035 = vmatpush1.msra.mxu0 0.0
      %3036 = vmatprep.subr.mxu0 0.0
      %3037 = vmatpush1.msra.mxu0 0.0
      %3038 = vmatprep.subr.mxu0 0.0
      %3039 = vmatpush1.msra.mxu0 0.0
      %3040 = vmatprep.subr.mxu0 0.0
      %3041 = vmatpush1.msra.mxu0 0.0
      %3042 = vmatprep.subr.mxu0 0.0
      %3043 = vmatpush1.msra.mxu0 0.0
      %3044 = vmatprep.subr.mxu0 0.0
      %3045 = vmatpush1.msra.mxu0 0.0
      %3046 = vmatprep.subr.mxu0 0.0
      %3047 = vmatpush1.msra.mxu0 0.0
      %3048 = vmatprep.subr.mxu0 0.0
      %3049 = vmatpush1.msra.mxu0 0.0
      %3050 = vmatprep.subr.mxu0 0.0
      %3051 = vmatpush1.msra.mxu0 0.0
      %3052 = vmatprep.subr.mxu0 0.0
      %3053 = vmatpush1.msra.mxu0 0.0
      %3054 = vmatprep.subr.mxu0 0.0
      %3055 = vmatpush1.msra.mxu0 0.0
      %3056 = vmatprep.subr.mxu0 0.0
      %3057 = vmatpush1.msra.mxu0 0.0
      %3058 = vmatprep.subr.mxu0 0.0
      %3059 = vmatpush1.msra.mxu0 0.0
      %3060 = vmatprep.mubr.f32.mxu0 0.0
      %3061 = vmatmul.mubr.f32.gmra.mrb[0].mxu0 %v2994
      %v3062 = vpop.f32.mrb[0].mxu0
      %v3063 = vadd.f32 0.0, %v3062
      %v3064 = vpop.f32.mrb[0].mxu0
      %3065 = vdwg.mxu0
      %v3067 = vsel %vm2670, %v2822, 0
      %3069 = vmatprep.subr.mxu0 0.0
      %3070 = vmatpush1.msra.mxu0 %v1375
      %3071 = vmatprep.subr.mxu0 0.0
      %3072 = vmatpush1.msra.mxu0 0.0
      %3073 = vmatprep.subr.mxu0 0.0
      %3074 = vmatpush1.msra.mxu0 0.0
      %3075 = vmatprep.subr.mxu0 0.0
      %3076 = vmatpush1.msra.mxu0 0.0
      %3077 = vmatprep.subr.mxu0 0.0
      %3078 = vmatpush1.msra.mxu0 0.0
      %3079 = vmatprep.subr.mxu0 0.0
      %3080 = vmatpush1.msra.mxu0 0.0
      %3081 = vmatprep.subr.mxu0 0.0
      %3082 = vmatpush1.msra.mxu0 0.0
      %3083 = vmatprep.subr.mxu0 0.0
      %3084 = vmatpush1.msra.mxu0 0.0
      %3085 = vmatprep.subr.mxu0 0.0
      %3086 = vmatpush1.msra.mxu0 0.0
      %3087 = vmatprep.subr.mxu0 0.0
      %3088 = vmatpush1.msra.mxu0 0.0
      %3089 = vmatprep.subr.mxu0 0.0
      %3090 = vmatpush1.msra.mxu0 0.0
      %3091 = vmatprep.subr.mxu0 0.0
      %3092 = vmatpush1.msra.mxu0 0.0
      %3093 = vmatprep.subr.mxu0 0.0
      %3094 = vmatpush1.msra.mxu0 0.0
      %3095 = vmatprep.subr.mxu0 0.0
      %3096 = vmatpush1.msra.mxu0 0.0
      %3097 = vmatprep.subr.mxu0 0.0
      %3098 = vmatpush1.msra.mxu0 0.0
      %3099 = vmatprep.subr.mxu0 0.0
      %3100 = vmatpush1.msra.mxu0 0.0
      %3101 = vmatprep.subr.mxu0 0.0
      %3102 = vmatpush1.msra.mxu0 0.0
      %3103 = vmatprep.subr.mxu0 0.0
      %3104 = vmatpush1.msra.mxu0 0.0
      %3105 = vmatprep.subr.mxu0 0.0
      %3106 = vmatpush1.msra.mxu0 0.0
      %3107 = vmatprep.subr.mxu0 0.0
      %3108 = vmatpush1.msra.mxu0 0.0
      %3109 = vmatprep.subr.mxu0 0.0
      %3110 = vmatpush1.msra.mxu0 0.0
      %3111 = vmatprep.subr.mxu0 0.0
      %3112 = vmatpush1.msra.mxu0 0.0
      %3113 = vmatprep.subr.mxu0 0.0
      %3114 = vmatpush1.msra.mxu0 0.0
      %3115 = vmatprep.subr.mxu0 0.0
      %3116 = vmatpush1.msra.mxu0 0.0
      %3117 = vmatprep.subr.mxu0 0.0
      %3118 = vmatpush1.msra.mxu0 0.0
      %3119 = vmatprep.subr.mxu0 0.0
      %3120 = vmatpush1.msra.mxu0 0.0
      %3121 = vmatprep.subr.mxu0 0.0
      %3122 = vmatpush1.msra.mxu0 0.0
      %3123 = vmatprep.subr.mxu0 0.0
      %3124 = vmatpush1.msra.mxu0 0.0
      %3125 = vmatprep.subr.mxu0 0.0
      %3126 = vmatpush1.msra.mxu0 0.0
      %3127 = vmatprep.subr.mxu0 0.0
      %3128 = vmatpush1.msra.mxu0 0.0
      %3129 = vmatprep.subr.mxu0 0.0
      %3130 = vmatpush1.msra.mxu0 0.0
      %3131 = vmatprep.subr.mxu0 0.0
      %3132 = vmatpush1.msra.mxu0 0.0
      %3133 = vmatprep.mubr.f32.mxu0 0.0
      %3134 = vmatmul.mubr.f32.gmra.mrb[0].mxu0 %v3067
      %v3135 = vpop.f32.mrb[0].mxu0
      %v3136 = vadd.f32 0.0, %v3135
      %v3137 = vpop.f32.mrb[0].mxu0
      %3138 = vdwg.mxu0
      %v3140 = vsel %vm2670, %v2824, 0
      %3142 = vmatprep.subr.mxu0 0.0
      %3143 = vmatpush1.msra.mxu0 %v1380
      %3144 = vmatprep.subr.mxu0 0.0
      %3145 = vmatpush1.msra.mxu0 0.0
      %3146 = vmatprep.subr.mxu0 0.0
      %3147 = vmatpush1.msra.mxu0 0.0
      %3148 = vmatprep.subr.mxu0 0.0
      %3149 = vmatpush1.msra.mxu0 0.0
      %3150 = vmatprep.subr.mxu0 0.0
      %3151 = vmatpush1.msra.mxu0 0.0
      %3152 = vmatprep.subr.mxu0 0.0
      %3153 = vmatpush1.msra.mxu0 0.0
      %3154 = vmatprep.subr.mxu0 0.0
      %3155 = vmatpush1.msra.mxu0 0.0
      %3156 = vmatprep.subr.mxu0 0.0
      %3157 = vmatpush1.msra.mxu0 0.0
      %3158 = vmatprep.subr.mxu0 0.0
      %3159 = vmatpush1.msra.mxu0 0.0
      %3160 = vmatprep.subr.mxu0 0.0
      %3161 = vmatpush1.msra.mxu0 0.0
      %3162 = vmatprep.subr.mxu0 0.0
      %3163 = vmatpush1.msra.mxu0 0.0
      %3164 = vmatprep.subr.mxu0 0.0
      %3165 = vmatpush1.msra.mxu0 0.0
      %3166 = vmatprep.subr.mxu0 0.0
      %3167 = vmatpush1.msra.mxu0 0.0
      %3168 = vmatprep.subr.mxu0 0.0
      %3169 = vmatpush1.msra.mxu0 0.0
      %3170 = vmatprep.subr.mxu0 0.0
      %3171 = vmatpush1.msra.mxu0 0.0
      %3172 = vmatprep.subr.mxu0 0.0
      %3173 = vmatpush1.msra.mxu0 0.0
      %3174 = vmatprep.subr.mxu0 0.0
      %3175 = vmatpush1.msra.mxu0 0.0
      %3176 = vmatprep.subr.mxu0 0.0
      %3177 = vmatpush1.msra.mxu0 0.0
      %3178 = vmatprep.subr.mxu0 0.0
      %3179 = vmatpush1.msra.mxu0 0.0
      %3180 = vmatprep.subr.mxu0 0.0
      %3181 = vmatpush1.msra.mxu0 0.0
      %3182 = vmatprep.subr.mxu0 0.0
      %3183 = vmatpush1.msra.mxu0 0.0
      %3184 = vmatprep.subr.mxu0 0.0
      %3185 = vmatpush1.msra.mxu0 0.0
      %3186 = vmatprep.subr.mxu0 0.0
      %3187 = vmatpush1.msra.mxu0 0.0
      %3188 = vmatprep.subr.mxu0 0.0
      %3189 = vmatpush1.msra.mxu0 0.0
      %3190 = vmatprep.subr.mxu0 0.0
      %3191 = vmatpush1.msra.mxu0 0.0
      %3192 = vmatprep.subr.mxu0 0.0
      %3193 = vmatpush1.msra.mxu0 0.0
      %3194 = vmatprep.subr.mxu0 0.0
      %3195 = vmatpush1.msra.mxu0 0.0
      %3196 = vmatprep.subr.mxu0 0.0
      %3197 = vmatpush1.msra.mxu0 0.0
      %3198 = vmatprep.subr.mxu0 0.0
      %3199 = vmatpush1.msra.mxu0 0.0
      %3200 = vmatprep.subr.mxu0 0.0
      %3201 = vmatpush1.msra.mxu0 0.0
      %3202 = vmatprep.subr.mxu0 0.0
      %3203 = vmatpush1.msra.mxu0 0.0
      %3204 = vmatprep.subr.mxu0 0.0
      %3205 = vmatpush1.msra.mxu0 0.0
      %3206 = vmatprep.mubr.f32.mxu0 0.0
      %3207 = vmatmul.mubr.f32.gmra.mrb[0].mxu0 %v3140
      %v3208 = vpop.f32.mrb[0].mxu0
      %v3209 = vadd.f32 0.0, %v3208
      %v3210 = vpop.f32.mrb[0].mxu0
      %3211 = vdwg.mxu0
      %v3213 = vsel %vm2670, %v2826, 0
      %3215 = vmatprep.subr.mxu0 0.0
      %3216 = vmatpush1.msra.mxu0 %v1385
      %3217 = vmatprep.subr.mxu0 0.0
      %3218 = vmatpush1.msra.mxu0 0.0
      %3219 = vmatprep.subr.mxu0 0.0
      %3220 = vmatpush1.msra.mxu0 0.0
      %3221 = vmatprep.subr.mxu0 0.0
      %3222 = vmatpush1.msra.mxu0 0.0
      %3223 = vmatprep.subr.mxu0 0.0
      %3224 = vmatpush1.msra.mxu0 0.0
      %3225 = vmatprep.subr.mxu0 0.0
      %3226 = vmatpush1.msra.mxu0 0.0
      %3227 = vmatprep.subr.mxu0 0.0
      %3228 = vmatpush1.msra.mxu0 0.0
      %3229 = vmatprep.subr.mxu0 0.0
      %3230 = vmatpush1.msra.mxu0 0.0
      %3231 = vmatprep.subr.mxu0 0.0
      %3232 = vmatpush1.msra.mxu0 0.0
      %3233 = vmatprep.subr.mxu0 0.0
      %3234 = vmatpush1.msra.mxu0 0.0
      %3235 = vmatprep.subr.mxu0 0.0
      %3236 = vmatpush1.msra.mxu0 0.0
      %3237 = vmatprep.subr.mxu0 0.0
      %3238 = vmatpush1.msra.mxu0 0.0
      %3239 = vmatprep.subr.mxu0 0.0
      %3240 = vmatpush1.msra.mxu0 0.0
      %3241 = vmatprep.subr.mxu0 0.0
      %3242 = vmatpush1.msra.mxu0 0.0
      %3243 = vmatprep.subr.mxu0 0.0
      %3244 = vmatpush1.msra.mxu0 0.0
      %3245 = vmatprep.subr.mxu0 0.0
      %3246 = vmatpush1.msra.mxu0 0.0
      %3247 = vmatprep.subr.mxu0 0.0
      %3248 = vmatpush1.msra.mxu0 0.0
      %3249 = vmatprep.subr.mxu0 0.0
      %3250 = vmatpush1.msra.mxu0 0.0
      %3251 = vmatprep.subr.mxu0 0.0
      %3252 = vmatpush1.msra.mxu0 0.0
      %3253 = vmatprep.subr.mxu0 0.0
      %3254 = vmatpush1.msra.mxu0 0.0
      %3255 = vmatprep.subr.mxu0 0.0
      %3256 = vmatpush1.msra.mxu0 0.0
      %3257 = vmatprep.subr.mxu0 0.0
      %3258 = vmatpush1.msra.mxu0 0.0
      %3259 = vmatprep.subr.mxu0 0.0
      %3260 = vmatpush1.msra.mxu0 0.0
      %3261 = vmatprep.subr.mxu0 0.0
      %3262 = vmatpush1.msra.mxu0 0.0
      %3263 = vmatprep.subr.mxu0 0.0
      %3264 = vmatpush1.msra.mxu0 0.0
      %3265 = vmatprep.subr.mxu0 0.0
      %3266 = vmatpush1.msra.mxu0 0.0
      %3267 = vmatprep.subr.mxu0 0.0
      %3268 = vmatpush1.msra.mxu0 0.0
      %3269 = vmatprep.subr.mxu0 0.0
      %3270 = vmatpush1.msra.mxu0 0.0
      %3271 = vmatprep.subr.mxu0 0.0
      %3272 = vmatpush1.msra.mxu0 0.0
      %3273 = vmatprep.subr.mxu0 0.0
      %3274 = vmatpush1.msra.mxu0 0.0
      %3275 = vmatprep.subr.mxu0 0.0
      %3276 = vmatpush1.msra.mxu0 0.0
      %3277 = vmatprep.subr.mxu0 0.0
      %3278 = vmatpush1.msra.mxu0 0.0
      %3279 = vmatprep.mubr.f32.mxu0 0.0
      %3280 = vmatmul.mubr.f32.gmra.mrb[0].mxu0 %v3213
      %v3281 = vpop.f32.mrb[0].mxu0
      %v3282 = vadd.f32 0.0, %v3281
      %v3283 = vpop.f32.mrb[0].mxu0
      %3284 = vdwg.mxu0
      %v3286 = vsel %vm2670, %v2828, 0
      %3288 = vmatprep.subr.mxu0 0.0
      %3289 = vmatpush1.msra.mxu0 %v1390
      %3290 = vmatprep.subr.mxu0 0.0
      %3291 = vmatpush1.msra.mxu0 0.0
      %3292 = vmatprep.subr.mxu0 0.0
      %3293 = vmatpush1.msra.mxu0 0.0
      %3294 = vmatprep.subr.mxu0 0.0
      %3295 = vmatpush1.msra.mxu0 0.0
      %3296 = vmatprep.subr.mxu0 0.0
      %3297 = vmatpush1.msra.mxu0 0.0
      %3298 = vmatprep.subr.mxu0 0.0
      %3299 = vmatpush1.msra.mxu0 0.0
      %3300 = vmatprep.subr.mxu0 0.0
      %3301 = vmatpush1.msra.mxu0 0.0
      %3302 = vmatprep.subr.mxu0 0.0
      %3303 = vmatpush1.msra.mxu0 0.0
      %3304 = vmatprep.subr.mxu0 0.0
      %3305 = vmatpush1.msra.mxu0 0.0
      %3306 = vmatprep.subr.mxu0 0.0
      %3307 = vmatpush1.msra.mxu0 0.0
      %3308 = vmatprep.subr.mxu0 0.0
      %3309 = vmatpush1.msra.mxu0 0.0
      %3310 = vmatprep.subr.mxu0 0.0
      %3311 = vmatpush1.msra.mxu0 0.0
      %3312 = vmatprep.subr.mxu0 0.0
      %3313 = vmatpush1.msra.mxu0 0.0
      %3314 = vmatprep.subr.mxu0 0.0
      %3315 = vmatpush1.msra.mxu0 0.0
      %3316 = vmatprep.subr.mxu0 0.0
      %3317 = vmatpush1.msra.mxu0 0.0
      %3318 = vmatprep.subr.mxu0 0.0
      %3319 = vmatpush1.msra.mxu0 0.0
      %3320 = vmatprep.subr.mxu0 0.0
      %3321 = vmatpush1.msra.mxu0 0.0
      %3322 = vmatprep.subr.mxu0 0.0
      %3323 = vmatpush1.msra.mxu0 0.0
      %3324 = vmatprep.subr.mxu0 0.0
      %3325 = vmatpush1.msra.mxu0 0.0
      %3326 = vmatprep.subr.mxu0 0.0
      %3327 = vmatpush1.msra.mxu0 0.0
      %3328 = vmatprep.subr.mxu0 0.0
      %3329 = vmatpush1.msra.mxu0 0.0
      %3330 = vmatprep.subr.mxu0 0.0
      %3331 = vmatpush1.msra.mxu0 0.0
      %3332 = vmatprep.subr.mxu0 0.0
      %3333 = vmatpush1.msra.mxu0 0.0
      %3334 = vmatprep.subr.mxu0 0.0
      %3335 = vmatpush1.msra.mxu0 0.0
      %3336 = vmatprep.subr.mxu0 0.0
      %3337 = vmatpush1.msra.mxu0 0.0
      %3338 = vmatprep.subr.mxu0 0.0
      %3339 = vmatpush1.msra.mxu0 0.0
      %3340 = vmatprep.subr.mxu0 0.0
      %3341 = vmatpush1.msra.mxu0 0.0
      %3342 = vmatprep.subr.mxu0 0.0
      %3343 = vmatpush1.msra.mxu0 0.0
      %3344 = vmatprep.subr.mxu0 0.0
      %3345 = vmatpush1.msra.mxu0 0.0
      %3346 = vmatprep.subr.mxu0 0.0
      %3347 = vmatpush1.msra.mxu0 0.0
      %3348 = vmatprep.subr.mxu0 0.0
      %3349 = vmatpush1.msra.mxu0 0.0
      %3350 = vmatprep.subr.mxu0 0.0
      %3351 = vmatpush1.msra.mxu0 0.0
      %3352 = vmatprep.mubr.f32.mxu0 0.0
      %3353 = vmatmul.mubr.f32.gmra.mrb[0].mxu0 %v3286
      %v3354 = vpop.f32.mrb[0].mxu0
      %v3355 = vadd.f32 0.0, %v3354
      %v3356 = vpop.f32.mrb[0].mxu0
      %3357 = vdwg.mxu0
      %v3359 = vsel %vm2670, %v2830, 0
      %3361 = vmatprep.subr.mxu0 0.0
      %3362 = vmatpush1.msra.mxu0 %v1395
      %3363 = vmatprep.subr.mxu0 0.0
      %3364 = vmatpush1.msra.mxu0 0.0
      %3365 = vmatprep.subr.mxu0 0.0
      %3366 = vmatpush1.msra.mxu0 0.0
      %3367 = vmatprep.subr.mxu0 0.0
      %3368 = vmatpush1.msra.mxu0 0.0
      %3369 = vmatprep.subr.mxu0 0.0
      %3370 = vmatpush1.msra.mxu0 0.0
      %3371 = vmatprep.subr.mxu0 0.0
      %3372 = vmatpush1.msra.mxu0 0.0
      %3373 = vmatprep.subr.mxu0 0.0
      %3374 = vmatpush1.msra.mxu0 0.0
      %3375 = vmatprep.subr.mxu0 0.0
      %3376 = vmatpush1.msra.mxu0 0.0
      %3377 = vmatprep.subr.mxu0 0.0
      %3378 = vmatpush1.msra.mxu0 0.0
      %3379 = vmatprep.subr.mxu0 0.0
      %3380 = vmatpush1.msra.mxu0 0.0
      %3381 = vmatprep.subr.mxu0 0.0
      %3382 = vmatpush1.msra.mxu0 0.0
      %3383 = vmatprep.subr.mxu0 0.0
      %3384 = vmatpush1.msra.mxu0 0.0
      %3385 = vmatprep.subr.mxu0 0.0
      %3386 = vmatpush1.msra.mxu0 0.0
      %3387 = vmatprep.subr.mxu0 0.0
      %3388 = vmatpush1.msra.mxu0 0.0
      %3389 = vmatprep.subr.mxu0 0.0
      %3390 = vmatpush1.msra.mxu0 0.0
      %3391 = vmatprep.subr.mxu0 0.0
      %3392 = vmatpush1.msra.mxu0 0.0
      %3393 = vmatprep.subr.mxu0 0.0
      %3394 = vmatpush1.msra.mxu0 0.0
      %3395 = vmatprep.subr.mxu0 0.0
      %3396 = vmatpush1.msra.mxu0 0.0
      %3397 = vmatprep.subr.mxu0 0.0
      %3398 = vmatpush1.msra.mxu0 0.0
      %3399 = vmatprep.subr.mxu0 0.0
      %3400 = vmatpush1.msra.mxu0 0.0
      %3401 = vmatprep.subr.mxu0 0.0
      %3402 = vmatpush1.msra.mxu0 0.0
      %3403 = vmatprep.subr.mxu0 0.0
      %3404 = vmatpush1.msra.mxu0 0.0
      %3405 = vmatprep.subr.mxu0 0.0
      %3406 = vmatpush1.msra.mxu0 0.0
      %3407 = vmatprep.subr.mxu0 0.0
      %3408 = vmatpush1.msra.mxu0 0.0
      %3409 = vmatprep.subr.mxu0 0.0
      %3410 = vmatpush1.msra.mxu0 0.0
      %3411 = vmatprep.subr.mxu0 0.0
      %3412 = vmatpush1.msra.mxu0 0.0
      %3413 = vmatprep.subr.mxu0 0.0
      %3414 = vmatpush1.msra.mxu0 0.0
      %3415 = vmatprep.subr.mxu0 0.0
      %3416 = vmatpush1.msra.mxu0 0.0
      %3417 = vmatprep.subr.mxu0 0.0
      %3418 = vmatpush1.msra.mxu0 0.0
      %3419 = vmatprep.subr.mxu0 0.0
      %3420 = vmatpush1.msra.mxu0 0.0
      %3421 = vmatprep.subr.mxu0 0.0
      %3422 = vmatpush1.msra.mxu0 0.0
      %3423 = vmatprep.subr.mxu0 0.0
      %3424 = vmatpush1.msra.mxu0 0.0
      %3425 = vmatprep.mubr.f32.mxu0 0.0
      %3426 = vmatmul.mubr.f32.gmra.mrb[0].mxu0 %v3359
      %v3427 = vpop.f32.mrb[0].mxu0
      %v3428 = vadd.f32 0.0, %v3427
      %v3429 = vpop.f32.mrb[0].mxu0
      %3430 = vdwg.mxu0
      %v3432 = vsel %vm2670, %v2832, 0
      %3434 = vmatprep.subr.mxu0 0.0
      %3435 = vmatpush1.msra.mxu0 %v1400
      %3436 = vmatprep.subr.mxu0 0.0
      %3437 = vmatpush1.msra.mxu0 0.0
      %3438 = vmatprep.subr.mxu0 0.0
      %3439 = vmatpush1.msra.mxu0 0.0
      %3440 = vmatprep.subr.mxu0 0.0
      %3441 = vmatpush1.msra.mxu0 0.0
      %3442 = vmatprep.subr.mxu0 0.0
      %3443 = vmatpush1.msra.mxu0 0.0
      %3444 = vmatprep.subr.mxu0 0.0
      %3445 = vmatpush1.msra.mxu0 0.0
      %3446 = vmatprep.subr.mxu0 0.0
      %3447 = vmatpush1.msra.mxu0 0.0
      %3448 = vmatprep.subr.mxu0 0.0
      %3449 = vmatpush1.msra.mxu0 0.0
      %3450 = vmatprep.subr.mxu0 0.0
      %3451 = vmatpush1.msra.mxu0 0.0
      %3452 = vmatprep.subr.mxu0 0.0
      %3453 = vmatpush1.msra.mxu0 0.0
      %3454 = vmatprep.subr.mxu0 0.0
      %3455 = vmatpush1.msra.mxu0 0.0
      %3456 = vmatprep.subr.mxu0 0.0
      %3457 = vmatpush1.msra.mxu0 0.0
      %3458 = vmatprep.subr.mxu0 0.0
      %3459 = vmatpush1.msra.mxu0 0.0
      %3460 = vmatprep.subr.mxu0 0.0
      %3461 = vmatpush1.msra.mxu0 0.0
      %3462 = vmatprep.subr.mxu0 0.0
      %3463 = vmatpush1.msra.mxu0 0.0
      %3464 = vmatprep.subr.mxu0 0.0
      %3465 = vmatpush1.msra.mxu0 0.0
      %3466 = vmatprep.subr.mxu0 0.0
      %3467 = vmatpush1.msra.mxu0 0.0
      %3468 = vmatprep.subr.mxu0 0.0
      %3469 = vmatpush1.msra.mxu0 0.0
      %3470 = vmatprep.subr.mxu0 0.0
      %3471 = vmatpush1.msra.mxu0 0.0
      %3472 = vmatprep.subr.mxu0 0.0
      %3473 = vmatpush1.msra.mxu0 0.0
      %3474 = vmatprep.subr.mxu0 0.0
      %3475 = vmatpush1.msra.mxu0 0.0
      %3476 = vmatprep.subr.mxu0 0.0
      %3477 = vmatpush1.msra.mxu0 0.0
      %3478 = vmatprep.subr.mxu0 0.0
      %3479 = vmatpush1.msra.mxu0 0.0
      %3480 = vmatprep.subr.mxu0 0.0
      %3481 = vmatpush1.msra.mxu0 0.0
      %3482 = vmatprep.subr.mxu0 0.0
      %3483 = vmatpush1.msra.mxu0 0.0
      %3484 = vmatprep.subr.mxu0 0.0
      %3485 = vmatpush1.msra.mxu0 0.0
      %3486 = vmatprep.subr.mxu0 0.0
      %3487 = vmatpush1.msra.mxu0 0.0
      %3488 = vmatprep.subr.mxu0 0.0
      %3489 = vmatpush1.msra.mxu0 0.0
      %3490 = vmatprep.subr.mxu0 0.0
      %3491 = vmatpush1.msra.mxu0 0.0
      %3492 = vmatprep.subr.mxu0 0.0
      %3493 = vmatpush1.msra.mxu0 0.0
      %3494 = vmatprep.subr.mxu0 0.0
      %3495 = vmatpush1.msra.mxu0 0.0
      %3496 = vmatprep.subr.mxu0 0.0
      %3497 = vmatpush1.msra.mxu0 0.0
      %3498 = vmatprep.mubr.f32.mxu0 0.0
      %3499 = vmatmul.mubr.f32.gmra.mrb[0].mxu0 %v3432
      %v3500 = vpop.f32.mrb[0].mxu0
      %v3501 = vadd.f32 0.0, %v3500
      %v3502 = vpop.f32.mrb[0].mxu0
      %3503 = vdwg.mxu0
      %v3505 = vsel %vm2670, %v2834, 0
      %3507 = vmatprep.subr.mxu0 0.0
      %3508 = vmatpush1.msra.mxu0 %v1405
      %3509 = vmatprep.subr.mxu0 0.0
      %3510 = vmatpush1.msra.mxu0 0.0
      %3511 = vmatprep.subr.mxu0 0.0
      %3512 = vmatpush1.msra.mxu0 0.0
      %3513 = vmatprep.subr.mxu0 0.0
      %3514 = vmatpush1.msra.mxu0 0.0
      %3515 = vmatprep.subr.mxu0 0.0
      %3516 = vmatpush1.msra.mxu0 0.0
      %3517 = vmatprep.subr.mxu0 0.0
      %3518 = vmatpush1.msra.mxu0 0.0
      %3519 = vmatprep.subr.mxu0 0.0
      %3520 = vmatpush1.msra.mxu0 0.0
      %3521 = vmatprep.subr.mxu0 0.0
      %3522 = vmatpush1.msra.mxu0 0.0
      %3523 = vmatprep.subr.mxu0 0.0
      %3524 = vmatpush1.msra.mxu0 0.0
      %3525 = vmatprep.subr.mxu0 0.0
      %3526 = vmatpush1.msra.mxu0 0.0
      %3527 = vmatprep.subr.mxu0 0.0
      %3528 = vmatpush1.msra.mxu0 0.0
      %3529 = vmatprep.subr.mxu0 0.0
      %3530 = vmatpush1.msra.mxu0 0.0
      %3531 = vmatprep.subr.mxu0 0.0
      %3532 = vmatpush1.msra.mxu0 0.0
      %3533 = vmatprep.subr.mxu0 0.0
      %3534 = vmatpush1.msra.mxu0 0.0
      %3535 = vmatprep.subr.mxu0 0.0
      %3536 = vmatpush1.msra.mxu0 0.0
      %3537 = vmatprep.subr.mxu0 0.0
      %3538 = vmatpush1.msra.mxu0 0.0
      %3539 = vmatprep.subr.mxu0 0.0
      %3540 = vmatpush1.msra.mxu0 0.0
      %3541 = vmatprep.subr.mxu0 0.0
      %3542 = vmatpush1.msra.mxu0 0.0
      %3543 = vmatprep.subr.mxu0 0.0
      %3544 = vmatpush1.msra.mxu0 0.0
      %3545 = vmatprep.subr.mxu0 0.0
      %3546 = vmatpush1.msra.mxu0 0.0
      %3547 = vmatprep.subr.mxu0 0.0
      %3548 = vmatpush1.msra.mxu0 0.0
      %3549 = vmatprep.subr.mxu0 0.0
      %3550 = vmatpush1.msra.mxu0 0.0
      %3551 = vmatprep.subr.mxu0 0.0
      %3552 = vmatpush1.msra.mxu0 0.0
      %3553 = vmatprep.subr.mxu0 0.0
      %3554 = vmatpush1.msra.mxu0 0.0
      %3555 = vmatprep.subr.mxu0 0.0
      %3556 = vmatpush1.msra.mxu0 0.0
      %3557 = vmatprep.subr.mxu0 0.0
      %3558 = vmatpush1.msra.mxu0 0.0
      %3559 = vmatprep.subr.mxu0 0.0
      %3560 = vmatpush1.msra.mxu0 0.0
      %3561 = vmatprep.subr.mxu0 0.0
      %3562 = vmatpush1.msra.mxu0 0.0
      %3563 = vmatprep.subr.mxu0 0.0
      %3564 = vmatpush1.msra.mxu0 0.0
      %3565 = vmatprep.subr.mxu0 0.0
      %3566 = vmatpush1.msra.mxu0 0.0
      %3567 = vmatprep.subr.mxu0 0.0
      %3568 = vmatpush1.msra.mxu0 0.0
      %3569 = vmatprep.subr.mxu0 0.0
      %3570 = vmatpush1.msra.mxu0 0.0
      %3571 = vmatprep.mubr.f32.mxu0 0.0
      %3572 = vmatmul.mubr.f32.gmra.mrb[0].mxu0 %v3505
      %v3573 = vpop.f32.mrb[0].mxu0
      %v3574 = vadd.f32 0.0, %v3573
      %v3575 = vpop.f32.mrb[0].mxu0
      %3576 = vdwg.mxu0
      %v3578 = vsel %vm2670, %v2836, 0
      %3580 = vmatprep.subr.mxu0 0.0
      %3581 = vmatpush1.msra.mxu0 %v1410
      %3582 = vmatprep.subr.mxu0 0.0
      %3583 = vmatpush1.msra.mxu0 0.0
      %3584 = vmatprep.subr.mxu0 0.0
      %3585 = vmatpush1.msra.mxu0 0.0
      %3586 = vmatprep.subr.mxu0 0.0
      %3587 = vmatpush1.msra.mxu0 0.0
      %3588 = vmatprep.subr.mxu0 0.0
      %3589 = vmatpush1.msra.mxu0 0.0
      %3590 = vmatprep.subr.mxu0 0.0
      %3591 = vmatpush1.msra.mxu0 0.0
      %3592 = vmatprep.subr.mxu0 0.0
      %3593 = vmatpush1.msra.mxu0 0.0
      %3594 = vmatprep.subr.mxu0 0.0
      %3595 = vmatpush1.msra.mxu0 0.0
      %3596 = vmatprep.subr.mxu0 0.0
      %3597 = vmatpush1.msra.mxu0 0.0
      %3598 = vmatprep.subr.mxu0 0.0
      %3599 = vmatpush1.msra.mxu0 0.0
      %3600 = vmatprep.subr.mxu0 0.0
      %3601 = vmatpush1.msra.mxu0 0.0
      %3602 = vmatprep.subr.mxu0 0.0
      %3603 = vmatpush1.msra.mxu0 0.0
      %3604 = vmatprep.subr.mxu0 0.0
      %3605 = vmatpush1.msra.mxu0 0.0
      %3606 = vmatprep.subr.mxu0 0.0
      %3607 = vmatpush1.msra.mxu0 0.0
      %3608 = vmatprep.subr.mxu0 0.0
      %3609 = vmatpush1.msra.mxu0 0.0
      %3610 = vmatprep.subr.mxu0 0.0
      %3611 = vmatpush1.msra.mxu0 0.0
      %3612 = vmatprep.subr.mxu0 0.0
      %3613 = vmatpush1.msra.mxu0 0.0
      %3614 = vmatprep.subr.mxu0 0.0
      %3615 = vmatpush1.msra.mxu0 0.0
      %3616 = vmatprep.subr.mxu0 0.0
      %3617 = vmatpush1.msra.mxu0 0.0
      %3618 = vmatprep.subr.mxu0 0.0
      %3619 = vmatpush1.msra.mxu0 0.0
      %3620 = vmatprep.subr.mxu0 0.0
      %3621 = vmatpush1.msra.mxu0 0.0
      %3622 = vmatprep.subr.mxu0 0.0
      %3623 = vmatpush1.msra.mxu0 0.0
      %3624 = vmatprep.subr.mxu0 0.0
      %3625 = vmatpush1.msra.mxu0 0.0
      %3626 = vmatprep.subr.mxu0 0.0
      %3627 = vmatpush1.msra.mxu0 0.0
      %3628 = vmatprep.subr.mxu0 0.0
      %3629 = vmatpush1.msra.mxu0 0.0
      %3630 = vmatprep.subr.mxu0 0.0
      %3631 = vmatpush1.msra.mxu0 0.0
      %3632 = vmatprep.subr.mxu0 0.0
      %3633 = vmatpush1.msra.mxu0 0.0
      %3634 = vmatprep.subr.mxu0 0.0
      %3635 = vmatpush1.msra.mxu0 0.0
      %3636 = vmatprep.subr.mxu0 0.0
      %3637 = vmatpush1.msra.mxu0 0.0
      %3638 = vmatprep.subr.mxu0 0.0
      %3639 = vmatpush1.msra.mxu0 0.0
      %3640 = vmatprep.subr.mxu0 0.0
      %3641 = vmatpush1.msra.mxu0 0.0
      %3642 = vmatprep.subr.mxu0 0.0
      %3643 = vmatpush1.msra.mxu0 0.0
      %3644 = vmatprep.mubr.f32.mxu0 0.0
      %3645 = vmatmul.mubr.f32.gmra.mrb[0].mxu0 %v3578
      %v3646 = vpop.f32.mrb[0].mxu0
      %v3647 = vadd.f32 0.0, %v3646
      %v3648 = vpop.f32.mrb[0].mxu0
      %3649 = vdwg.mxu0
      %v3651 = vsel %vm2670, %v2838, 0
      %3653 = vmatprep.subr.mxu0 0.0
      %3654 = vmatpush1.msra.mxu0 %v1415
      %3655 = vmatprep.subr.mxu0 0.0
      %3656 = vmatpush1.msra.mxu0 0.0
      %3657 = vmatprep.subr.mxu0 0.0
      %3658 = vmatpush1.msra.mxu0 0.0
      %3659 = vmatprep.subr.mxu0 0.0
      %3660 = vmatpush1.msra.mxu0 0.0
      %3661 = vmatprep.subr.mxu0 0.0
      %3662 = vmatpush1.msra.mxu0 0.0
      %3663 = vmatprep.subr.mxu0 0.0
      %3664 = vmatpush1.msra.mxu0 0.0
      %3665 = vmatprep.subr.mxu0 0.0
      %3666 = vmatpush1.msra.mxu0 0.0
      %3667 = vmatprep.subr.mxu0 0.0
      %3668 = vmatpush1.msra.mxu0 0.0
      %3669 = vmatprep.subr.mxu0 0.0
      %3670 = vmatpush1.msra.mxu0 0.0
      %3671 = vmatprep.subr.mxu0 0.0
      %3672 = vmatpush1.msra.mxu0 0.0
      %3673 = vmatprep.subr.mxu0 0.0
      %3674 = vmatpush1.msra.mxu0 0.0
      %3675 = vmatprep.subr.mxu0 0.0
      %3676 = vmatpush1.msra.mxu0 0.0
      %3677 = vmatprep.subr.mxu0 0.0
      %3678 = vmatpush1.msra.mxu0 0.0
      %3679 = vmatprep.subr.mxu0 0.0
      %3680 = vmatpush1.msra.mxu0 0.0
      %3681 = vmatprep.subr.mxu0 0.0
      %3682 = vmatpush1.msra.mxu0 0.0
      %3683 = vmatprep.subr.mxu0 0.0
      %3684 = vmatpush1.msra.mxu0 0.0
      %3685 = vmatprep.subr.mxu0 0.0
      %3686 = vmatpush1.msra.mxu0 0.0
      %3687 = vmatprep.subr.mxu0 0.0
      %3688 = vmatpush1.msra.mxu0 0.0
      %3689 = vmatprep.subr.mxu0 0.0
      %3690 = vmatpush1.msra.mxu0 0.0
      %3691 = vmatprep.subr.mxu0 0.0
      %3692 = vmatpush1.msra.mxu0 0.0
      %3693 = vmatprep.subr.mxu0 0.0
      %3694 = vmatpush1.msra.mxu0 0.0
      %3695 = vmatprep.subr.mxu0 0.0
      %3696 = vmatpush1.msra.mxu0 0.0
      %3697 = vmatprep.subr.mxu0 0.0
      %3698 = vmatpush1.msra.mxu0 0.0
      %3699 = vmatprep.subr.mxu0 0.0
      %3700 = vmatpush1.msra.mxu0 0.0
      %3701 = vmatprep.subr.mxu0 0.0
      %3702 = vmatpush1.msra.mxu0 0.0
      %3703 = vmatprep.subr.mxu0 0.0
      %3704 = vmatpush1.msra.mxu0 0.0
      %3705 = vmatprep.subr.mxu0 0.0
      %3706 = vmatpush1.msra.mxu0 0.0
      %3707 = vmatprep.subr.mxu0 0.0
      %3708 = vmatpush1.msra.mxu0 0.0
      %3709 = vmatprep.subr.mxu0 0.0
      %3710 = vmatpush1.msra.mxu0 0.0
      %3711 = vmatprep.subr.mxu0 0.0
      %3712 = vmatpush1.msra.mxu0 0.0
      %3713 = vmatprep.subr.mxu0 0.0
      %3714 = vmatpush1.msra.mxu0 0.0
      %3715 = vmatprep.subr.mxu0 0.0
      %3716 = vmatpush1.msra.mxu0 0.0
      %3717 = vmatprep.mubr.f32.mxu0 0.0
      %3718 = vmatmul.mubr.f32.gmra.mrb[0].mxu0 %v3651
      %v3719 = vpop.f32.mrb[0].mxu0
      %v3720 = vadd.f32 0.0, %v3719
      %v3721 = vpop.f32.mrb[0].mxu0
      %3722 = vdwg.mxu0
      %v3724 = vsel %vm2670, %v2840, 0
      %3726 = vmatprep.subr.mxu0 0.0
      %3727 = vmatpush1.msra.mxu0 %v1420
      %3728 = vmatprep.subr.mxu0 0.0
      %3729 = vmatpush1.msra.mxu0 0.0
      %3730 = vmatprep.subr.mxu0 0.0
      %3731 = vmatpush1.msra.mxu0 0.0
      %3732 = vmatprep.subr.mxu0 0.0
      %3733 = vmatpush1.msra.mxu0 0.0
      %3734 = vmatprep.subr.mxu0 0.0
      %3735 = vmatpush1.msra.mxu0 0.0
      %3736 = vmatprep.subr.mxu0 0.0
      %3737 = vmatpush1.msra.mxu0 0.0
      %3738 = vmatprep.subr.mxu0 0.0
      %3739 = vmatpush1.msra.mxu0 0.0
      %3740 = vmatprep.subr.mxu0 0.0
      %3741 = vmatpush1.msra.mxu0 0.0
      %3742 = vmatprep.subr.mxu0 0.0
      %3743 = vmatpush1.msra.mxu0 0.0
      %3744 = vmatprep.subr.mxu0 0.0
      %3745 = vmatpush1.msra.mxu0 0.0
      %3746 = vmatprep.subr.mxu0 0.0
      %3747 = vmatpush1.msra.mxu0 0.0
      %3748 = vmatprep.subr.mxu0 0.0
      %3749 = vmatpush1.msra.mxu0 0.0
      %3750 = vmatprep.subr.mxu0 0.0
      %3751 = vmatpush1.msra.mxu0 0.0
      %3752 = vmatprep.subr.mxu0 0.0
      %3753 = vmatpush1.msra.mxu0 0.0
      %3754 = vmatprep.subr.mxu0 0.0
      %3755 = vmatpush1.msra.mxu0 0.0
      %3756 = vmatprep.subr.mxu0 0.0
      %3757 = vmatpush1.msra.mxu0 0.0
      %3758 = vmatprep.subr.mxu0 0.0
      %3759 = vmatpush1.msra.mxu0 0.0
      %3760 = vmatprep.subr.mxu0 0.0
      %3761 = vmatpush1.msra.mxu0 0.0
      %3762 = vmatprep.subr.mxu0 0.0
      %3763 = vmatpush1.msra.mxu0 0.0
      %3764 = vmatprep.subr.mxu0 0.0
      %3765 = vmatpush1.msra.mxu0 0.0
      %3766 = vmatprep.subr.mxu0 0.0
      %3767 = vmatpush1.msra.mxu0 0.0
      %3768 = vmatprep.subr.mxu0 0.0
      %3769 = vmatpush1.msra.mxu0 0.0
      %3770 = vmatprep.subr.mxu0 0.0
      %3771 = vmatpush1.msra.mxu0 0.0
      %3772 = vmatprep.subr.mxu0 0.0
      %3773 = vmatpush1.msra.mxu0 0.0
      %3774 = vmatprep.subr.mxu0 0.0
      %3775 = vmatpush1.msra.mxu0 0.0
      %3776 = vmatprep.subr.mxu0 0.0
      %3777 = vmatpush1.msra.mxu0 0.0
      %3778 = vmatprep.subr.mxu0 0.0
      %3779 = vmatpush1.msra.mxu0 0.0
      %3780 = vmatprep.subr.mxu0 0.0
      %3781 = vmatpush1.msra.mxu0 0.0
      %3782 = vmatprep.subr.mxu0 0.0
      %3783 = vmatpush1.msra.mxu0 0.0
      %3784 = vmatprep.subr.mxu0 0.0
      %3785 = vmatpush1.msra.mxu0 0.0
      %3786 = vmatprep.subr.mxu0 0.0
      %3787 = vmatpush1.msra.mxu0 0.0
      %3788 = vmatprep.subr.mxu0 0.0
      %3789 = vmatpush1.msra.mxu0 0.0
      %3790 = vmatprep.mubr.f32.mxu0 0.0
      %3791 = vmatmul.mubr.f32.gmra.mrb[0].mxu0 %v3724
      %v3792 = vpop.f32.mrb[0].mxu0
      %v3793 = vadd.f32 0.0, %v3792
      %v3794 = vpop.f32.mrb[0].mxu0
      %3795 = vdwg.mxu0
      %v3797 = vsel %vm2670, %v2842, 0
      %3799 = vmatprep.subr.mxu0 0.0
      %3800 = vmatpush1.msra.mxu0 %v1425
      %3801 = vmatprep.subr.mxu0 0.0
      %3802 = vmatpush1.msra.mxu0 0.0
      %3803 = vmatprep.subr.mxu0 0.0
      %3804 = vmatpush1.msra.mxu0 0.0
      %3805 = vmatprep.subr.mxu0 0.0
      %3806 = vmatpush1.msra.mxu0 0.0
      %3807 = vmatprep.subr.mxu0 0.0
      %3808 = vmatpush1.msra.mxu0 0.0
      %3809 = vmatprep.subr.mxu0 0.0
      %3810 = vmatpush1.msra.mxu0 0.0
      %3811 = vmatprep.subr.mxu0 0.0
      %3812 = vmatpush1.msra.mxu0 0.0
      %3813 = vmatprep.subr.mxu0 0.0
      %3814 = vmatpush1.msra.mxu0 0.0
      %3815 = vmatprep.subr.mxu0 0.0
      %3816 = vmatpush1.msra.mxu0 0.0
      %3817 = vmatprep.subr.mxu0 0.0
      %3818 = vmatpush1.msra.mxu0 0.0
      %3819 = vmatprep.subr.mxu0 0.0
      %3820 = vmatpush1.msra.mxu0 0.0
      %3821 = vmatprep.subr.mxu0 0.0
      %3822 = vmatpush1.msra.mxu0 0.0
      %3823 = vmatprep.subr.mxu0 0.0
      %3824 = vmatpush1.msra.mxu0 0.0
      %3825 = vmatprep.subr.mxu0 0.0
      %3826 = vmatpush1.msra.mxu0 0.0
      %3827 = vmatprep.subr.mxu0 0.0
      %3828 = vmatpush1.msra.mxu0 0.0
      %3829 = vmatprep.subr.mxu0 0.0
      %3830 = vmatpush1.msra.mxu0 0.0
      %3831 = vmatprep.subr.mxu0 0.0
      %3832 = vmatpush1.msra.mxu0 0.0
      %3833 = vmatprep.subr.mxu0 0.0
      %3834 = vmatpush1.msra.mxu0 0.0
      %3835 = vmatprep.subr.mxu0 0.0
      %3836 = vmatpush1.msra.mxu0 0.0
      %3837 = vmatprep.subr.mxu0 0.0
      %3838 = vmatpush1.msra.mxu0 0.0
      %3839 = vmatprep.subr.mxu0 0.0
      %3840 = vmatpush1.msra.mxu0 0.0
      %3841 = vmatprep.subr.mxu0 0.0
      %3842 = vmatpush1.msra.mxu0 0.0
      %3843 = vmatprep.subr.mxu0 0.0
      %3844 = vmatpush1.msra.mxu0 0.0
      %3845 = vmatprep.subr.mxu0 0.0
      %3846 = vmatpush1.msra.mxu0 0.0
      %3847 = vmatprep.subr.mxu0 0.0
      %3848 = vmatpush1.msra.mxu0 0.0
      %3849 = vmatprep.subr.mxu0 0.0
      %3850 = vmatpush1.msra.mxu0 0.0
      %3851 = vmatprep.subr.mxu0 0.0
      %3852 = vmatpush1.msra.mxu0 0.0
      %3853 = vmatprep.subr.mxu0 0.0
      %3854 = vmatpush1.msra.mxu0 0.0
      %3855 = vmatprep.subr.mxu0 0.0
      %3856 = vmatpush1.msra.mxu0 0.0
      %3857 = vmatprep.subr.mxu0 0.0
      %3858 = vmatpush1.msra.mxu0 0.0
      %3859 = vmatprep.subr.mxu0 0.0
      %3860 = vmatpush1.msra.mxu0 0.0
      %3861 = vmatprep.subr.mxu0 0.0
      %3862 = vmatpush1.msra.mxu0 0.0
      %3863 = vmatprep.mubr.f32.mxu0 0.0
      %3864 = vmatmul.mubr.f32.gmra.mrb[0].mxu0 %v3797
      %v3865 = vpop.f32.mrb[0].mxu0
      %v3866 = vadd.f32 0.0, %v3865
      %v3867 = vpop.f32.mrb[0].mxu0
      %3868 = vdwg.mxu0
      %v3870 = vsel %vm2670, %v2844, 0
      %3872 = vmatprep.subr.mxu0 0.0
      %3873 = vmatpush1.msra.mxu0 %v1430
      %3874 = vmatprep.subr.mxu0 0.0
      %3875 = vmatpush1.msra.mxu0 0.0
      %3876 = vmatprep.subr.mxu0 0.0
      %3877 = vmatpush1.msra.mxu0 0.0
      %3878 = vmatprep.subr.mxu0 0.0
      %3879 = vmatpush1.msra.mxu0 0.0
      %3880 = vmatprep.subr.mxu0 0.0
      %3881 = vmatpush1.msra.mxu0 0.0
      %3882 = vmatprep.subr.mxu0 0.0
      %3883 = vmatpush1.msra.mxu0 0.0
      %3884 = vmatprep.subr.mxu0 0.0
      %3885 = vmatpush1.msra.mxu0 0.0
      %3886 = vmatprep.subr.mxu0 0.0
      %3887 = vmatpush1.msra.mxu0 0.0
      %3888 = vmatprep.subr.mxu0 0.0
      %3889 = vmatpush1.msra.mxu0 0.0
      %3890 = vmatprep.subr.mxu0 0.0
      %3891 = vmatpush1.msra.mxu0 0.0
      %3892 = vmatprep.subr.mxu0 0.0
      %3893 = vmatpush1.msra.mxu0 0.0
      %3894 = vmatprep.subr.mxu0 0.0
      %3895 = vmatpush1.msra.mxu0 0.0
      %3896 = vmatprep.subr.mxu0 0.0
      %3897 = vmatpush1.msra.mxu0 0.0
      %3898 = vmatprep.subr.mxu0 0.0
      %3899 = vmatpush1.msra.mxu0 0.0
      %3900 = vmatprep.subr.mxu0 0.0
      %3901 = vmatpush1.msra.mxu0 0.0
      %3902 = vmatprep.subr.mxu0 0.0
      %3903 = vmatpush1.msra.mxu0 0.0
      %3904 = vmatprep.subr.mxu0 0.0
      %3905 = vmatpush1.msra.mxu0 0.0
      %3906 = vmatprep.subr.mxu0 0.0
      %3907 = vmatpush1.msra.mxu0 0.0
      %3908 = vmatprep.subr.mxu0 0.0
      %3909 = vmatpush1.msra.mxu0 0.0
      %3910 = vmatprep.subr.mxu0 0.0
      %3911 = vmatpush1.msra.mxu0 0.0
      %3912 = vmatprep.subr.mxu0 0.0
      %3913 = vmatpush1.msra.mxu0 0.0
      %3914 = vmatprep.subr.mxu0 0.0
      %3915 = vmatpush1.msra.mxu0 0.0
      %3916 = vmatprep.subr.mxu0 0.0
      %3917 = vmatpush1.msra.mxu0 0.0
      %3918 = vmatprep.subr.mxu0 0.0
      %3919 = vmatpush1.msra.mxu0 0.0
      %3920 = vmatprep.subr.mxu0 0.0
      %3921 = vmatpush1.msra.mxu0 0.0
      %3922 = vmatprep.subr.mxu0 0.0
      %3923 = vmatpush1.msra.mxu0 0.0
      %3924 = vmatprep.subr.mxu0 0.0
      %3925 = vmatpush1.msra.mxu0 0.0
      %3926 = vmatprep.subr.mxu0 0.0
      %3927 = vmatpush1.msra.mxu0 0.0
      %3928 = vmatprep.subr.mxu0 0.0
      %3929 = vmatpush1.msra.mxu0 0.0
      %3930 = vmatprep.subr.mxu0 0.0
      %3931 = vmatpush1.msra.mxu0 0.0
      %3932 = vmatprep.subr.mxu0 0.0
      %3933 = vmatpush1.msra.mxu0 0.0
      %3934 = vmatprep.subr.mxu0 0.0
      %3935 = vmatpush1.msra.mxu0 0.0
      %3936 = vmatprep.mubr.f32.mxu0 0.0
      %3937 = vmatmul.mubr.f32.gmra.mrb[0].mxu0 %v3870
      %v3938 = vpop.f32.mrb[0].mxu0
      %v3939 = vadd.f32 0.0, %v3938
      %v3940 = vpop.f32.mrb[0].mxu0
      %3941 = vdwg.mxu0
      %v3943 = vsel %vm2670, %v2846, 0
      %3945 = vmatprep.subr.mxu0 0.0
      %3946 = vmatpush1.msra.mxu0 %v1435
      %3947 = vmatprep.subr.mxu0 0.0
      %3948 = vmatpush1.msra.mxu0 0.0
      %3949 = vmatprep.subr.mxu0 0.0
      %3950 = vmatpush1.msra.mxu0 0.0
      %3951 = vmatprep.subr.mxu0 0.0
      %3952 = vmatpush1.msra.mxu0 0.0
      %3953 = vmatprep.subr.mxu0 0.0
      %3954 = vmatpush1.msra.mxu0 0.0
      %3955 = vmatprep.subr.mxu0 0.0
      %3956 = vmatpush1.msra.mxu0 0.0
      %3957 = vmatprep.subr.mxu0 0.0
      %3958 = vmatpush1.msra.mxu0 0.0
      %3959 = vmatprep.subr.mxu0 0.0
      %3960 = vmatpush1.msra.mxu0 0.0
      %3961 = vmatprep.subr.mxu0 0.0
      %3962 = vmatpush1.msra.mxu0 0.0
      %3963 = vmatprep.subr.mxu0 0.0
      %3964 = vmatpush1.msra.mxu0 0.0
      %3965 = vmatprep.subr.mxu0 0.0
      %3966 = vmatpush1.msra.mxu0 0.0
      %3967 = vmatprep.subr.mxu0 0.0
      %3968 = vmatpush1.msra.mxu0 0.0
      %3969 = vmatprep.subr.mxu0 0.0
      %3970 = vmatpush1.msra.mxu0 0.0
      %3971 = vmatprep.subr.mxu0 0.0
      %3972 = vmatpush1.msra.mxu0 0.0
      %3973 = vmatprep.subr.mxu0 0.0
      %3974 = vmatpush1.msra.mxu0 0.0
      %3975 = vmatprep.subr.mxu0 0.0
      %3976 = vmatpush1.msra.mxu0 0.0
      %3977 = vmatprep.subr.mxu0 0.0
      %3978 = vmatpush1.msra.mxu0 0.0
      %3979 = vmatprep.subr.mxu0 0.0
      %3980 = vmatpush1.msra.mxu0 0.0
      %3981 = vmatprep.subr.mxu0 0.0
      %3982 = vmatpush1.msra.mxu0 0.0
      %3983 = vmatprep.subr.mxu0 0.0
      %3984 = vmatpush1.msra.mxu0 0.0
      %3985 = vmatprep.subr.mxu0 0.0
      %3986 = vmatpush1.msra.mxu0 0.0
      %3987 = vmatprep.subr.mxu0 0.0
      %3988 = vmatpush1.msra.mxu0 0.0
      %3989 = vmatprep.subr.mxu0 0.0
      %3990 = vmatpush1.msra.mxu0 0.0
      %3991 = vmatprep.subr.mxu0 0.0
      %3992 = vmatpush1.msra.mxu0 0.0
      %3993 = vmatprep.subr.mxu0 0.0
      %3994 = vmatpush1.msra.mxu0 0.0
      %3995 = vmatprep.subr.mxu0 0.0
      %3996 = vmatpush1.msra.mxu0 0.0
      %3997 = vmatprep.subr.mxu0 0.0
      %3998 = vmatpush1.msra.mxu0 0.0
      %3999 = vmatprep.subr.mxu0 0.0
      %4000 = vmatpush1.msra.mxu0 0.0
      %4001 = vmatprep.subr.mxu0 0.0
      %4002 = vmatpush1.msra.mxu0 0.0
      %4003 = vmatprep.subr.mxu0 0.0
      %4004 = vmatpush1.msra.mxu0 0.0
      %4005 = vmatprep.subr.mxu0 0.0
      %4006 = vmatpush1.msra.mxu0 0.0
      %4007 = vmatprep.subr.mxu0 0.0
      %4008 = vmatpush1.msra.mxu0 0.0
      %4009 = vmatprep.mubr.f32.mxu0 0.0
      %4010 = vmatmul.mubr.f32.gmra.mrb[0].mxu0 %v3943
      %v4011 = vpop.f32.mrb[0].mxu0
      %v4012 = vadd.f32 0.0, %v4011
      %v4013 = vpop.f32.mrb[0].mxu0
      %4014 = vdwg.mxu0
      %v4015 = vsel %vm946, %v2917, 0.0
      %v4016 = vrot.slane %v4015, 4
      %v4017 = vadd.f32 %v4015, %v4016
      %v4018 = vrot.slane %v4017, 2
      %v4019 = vadd.f32 %v4017, %v4018
      %v4020 = vrot.slane %v4019, 1
      %v4021 = vadd.f32 %v4019, %v4020
      %v4022 = vsel %vm946, %v2990, 0.0
      %v4023 = vrot.slane %v4022, 4
      %v4024 = vadd.f32 %v4022, %v4023
      %v4025 = vrot.slane %v4024, 2
      %v4026 = vadd.f32 %v4024, %v4025
      %v4027 = vrot.slane %v4026, 1
      %v4028 = vadd.f32 %v4026, %v4027
      %v4029 = vsel %vm946, %v3063, 0.0
      %v4030 = vrot.slane %v4029, 4
      %v4031 = vadd.f32 %v4029, %v4030
      %v4032 = vrot.slane %v4031, 2
      %v4033 = vadd.f32 %v4031, %v4032
      %v4034 = vrot.slane %v4033, 1
      %v4035 = vadd.f32 %v4033, %v4034
      %v4036 = vsel %vm946, %v3136, 0.0
      %v4037 = vrot.slane %v4036, 4
      %v4038 = vadd.f32 %v4036, %v4037
      %v4039 = vrot.slane %v4038, 2
      %v4040 = vadd.f32 %v4038, %v4039
      %v4041 = vrot.slane %v4040, 1
      %v4042 = vadd.f32 %v4040, %v4041
      %v4043 = vsel %vm946, %v3209, 0.0
      %v4044 = vrot.slane %v4043, 4
      %v4045 = vadd.f32 %v4043, %v4044
      %v4046 = vrot.slane %v4045, 2
      %v4047 = vadd.f32 %v4045, %v4046
      %v4048 = vrot.slane %v4047, 1
      %v4049 = vadd.f32 %v4047, %v4048
      %v4050 = vsel %vm946, %v3282, 0.0
      %v4051 = vrot.slane %v4050, 4
      %v4052 = vadd.f32 %v4050, %v4051
      %v4053 = vrot.slane %v4052, 2
      %v4054 = vadd.f32 %v4052, %v4053
      %v4055 = vrot.slane %v4054, 1
      %v4056 = vadd.f32 %v4054, %v4055
      %v4057 = vsel %vm946, %v3355, 0.0
      %v4058 = vrot.slane %v4057, 4
      %v4059 = vadd.f32 %v4057, %v4058
      %v4060 = vrot.slane %v4059, 2
      %v4061 = vadd.f32 %v4059, %v4060
      %v4062 = vrot.slane %v4061, 1
      %v4063 = vadd.f32 %v4061, %v4062
      %v4064 = vsel %vm946, %v3428, 0.0
      %v4065 = vrot.slane %v4064, 4
      %v4066 = vadd.f32 %v4064, %v4065
      %v4067 = vrot.slane %v4066, 2
      %v4068 = vadd.f32 %v4066, %v4067
      %v4069 = vrot.slane %v4068, 1
      %v4070 = vadd.f32 %v4068, %v4069
      %v4071 = vsel %vm946, %v3501, 0.0
      %v4072 = vrot.slane %v4071, 4
      %v4073 = vadd.f32 %v4071, %v4072
      %v4074 = vrot.slane %v4073, 2
      %v4075 = vadd.f32 %v4073, %v4074
      %v4076 = vrot.slane %v4075, 1
      %v4077 = vadd.f32 %v4075, %v4076
      %v4078 = vsel %vm946, %v3574, 0.0
      %v4079 = vrot.slane %v4078, 4
      %v4080 = vadd.f32 %v4078, %v4079
      %v4081 = vrot.slane %v4080, 2
      %v4082 = vadd.f32 %v4080, %v4081
      %v4083 = vrot.slane %v4082, 1
      %v4084 = vadd.f32 %v4082, %v4083
      %v4085 = vsel %vm946, %v3647, 0.0
      %v4086 = vrot.slane %v4085, 4
      %v4087 = vadd.f32 %v4085, %v4086
      %v4088 = vrot.slane %v4087, 2
      %v4089 = vadd.f32 %v4087, %v4088
      %v4090 = vrot.slane %v4089, 1
      %v4091 = vadd.f32 %v4089, %v4090
      %v4092 = vsel %vm946, %v3720, 0.0
      %v4093 = vrot.slane %v4092, 4
      %v4094 = vadd.f32 %v4092, %v4093
      %v4095 = vrot.slane %v4094, 2
      %v4096 = vadd.f32 %v4094, %v4095
      %v4097 = vrot.slane %v4096, 1
      %v4098 = vadd.f32 %v4096, %v4097
      %v4099 = vsel %vm946, %v3793, 0.0
      %v4100 = vrot.slane %v4099, 4
      %v4101 = vadd.f32 %v4099, %v4100
      %v4102 = vrot.slane %v4101, 2
      %v4103 = vadd.f32 %v4101, %v4102
      %v4104 = vrot.slane %v4103, 1
      %v4105 = vadd.f32 %v4103, %v4104
      %v4106 = vsel %vm946, %v3866, 0.0
      %v4107 = vrot.slane %v4106, 4
      %v4108 = vadd.f32 %v4106, %v4107
      %v4109 = vrot.slane %v4108, 2
      %v4110 = vadd.f32 %v4108, %v4109
      %v4111 = vrot.slane %v4110, 1
      %v4112 = vadd.f32 %v4110, %v4111
      %v4113 = vsel %vm946, %v3939, 0.0
      %v4114 = vrot.slane %v4113, 4
      %v4115 = vadd.f32 %v4113, %v4114
      %v4116 = vrot.slane %v4115, 2
      %v4117 = vadd.f32 %v4115, %v4116
      %v4118 = vrot.slane %v4117, 1
      %v4119 = vadd.f32 %v4117, %v4118
      %v4120 = vsel %vm946, %v4012, 0.0
      %v4121 = vrot.slane %v4120, 4
      %v4122 = vadd.f32 %v4120, %v4121
      %v4123 = vrot.slane %v4122, 2
      %v4124 = vadd.f32 %v4122, %v4123
      %v4125 = vrot.slane %v4124, 1
      %v4126 = vadd.f32 %v4124, %v4125
      %v4127 = vrcp.pop 8.0
      %v4128 = vmul.f32 %v4021, %v4127
      %v4129 = vmul.f32 %v4028, %v4127
      %v4130 = vmul.f32 %v4035, %v4127
      %v4131 = vmul.f32 %v4042, %v4127
      %v4132 = vmul.f32 %v4049, %v4127
      %v4133 = vmul.f32 %v4056, %v4127
      %v4134 = vmul.f32 %v4063, %v4127
      %v4135 = vmul.f32 %v4070, %v4127
      %v4136 = vmul.f32 %v4077, %v4127
      %v4137 = vmul.f32 %v4084, %v4127
      %v4138 = vmul.f32 %v4091, %v4127
      %v4139 = vmul.f32 %v4098, %v4127
      %v4140 = vmul.f32 %v4105, %v4127
      %v4141 = vmul.f32 %v4112, %v4127
      %v4142 = vmul.f32 %v4119, %v4127
      %v4143 = vmul.f32 %v4126, %v4127
      %v4144 = vld [vmem:[%s9] sm:$0xff]
      %v4145 = vld [vmem:[%s9 + $0x8] sm:$0xff]
      %v4146 = vld [vmem:[%s9 + $0x10] sm:$0xff]
      %v4147 = vld [vmem:[%s9 + $0x18] sm:$0xff]
      %v4148 = vld [vmem:[%s10] sm:$0x1]
      %v4150 = vlaneseq
      %v4151 = vshrl.u32 %v4150, 7
      %v4152 = vsub.s32 0, %v4151
      %v4153 = vrot.slane %v4148, %v4152
      %vm4171 = vcmask 1041409
      %v4172 = vsel %vm4171, %v4129, %v4128
      %vm4173 = vcmask 1042434
      %v4174 = vsel %vm4173, %v4130, %v4172
      %vm4175 = vcmask 1043459
      %v4176 = vsel %vm4175, %v4131, %v4174
      %vm4177 = vcmask 1044484
      %v4178 = vsel %vm4177, %v4132, %v4176
      %vm4179 = vcmask 1045509
      %v4180 = vsel %vm4179, %v4133, %v4178
      %vm4181 = vcmask 1046534
      %v4182 = vsel %vm4181, %v4134, %v4180
      %vm4183 = vcmask 1047559
      %v4184 = vsel %vm4183, %v4135, %v4182
      %v4185 = vsel %vm4171, %v4137, %v4136
      %v4186 = vsel %vm4173, %v4138, %v4185
      %v4187 = vsel %vm4175, %v4139, %v4186
      %v4188 = vsel %vm4177, %v4140, %v4187
      %v4189 = vsel %vm4179, %v4141, %v4188
      %v4190 = vsel %vm4181, %v4142, %v4189
      %v4191 = vsel %vm4183, %v4143, %v4190
      %v4192 = vsel %vm946, %v4184, 0
      %v4194 = vsel %vm946, %v4191, 0
      %4196 = vmatprep.subr.mxu0 0.0
      %4197 = vmatpush1.msra.mxu0 %v4144
      %4198 = vmatprep.subr.mxu0 0.0
      %4199 = vmatpush1.msra.mxu0 %v4145
      %4200 = vmatprep.subr.mxu0 0.0
      %4201 = vmatpush1.msra.mxu0 %v4146
      %4202 = vmatprep.subr.mxu0 0.0
      %4203 = vmatpush1.msra.mxu0 %v4147
      %4204 = vmatprep.subr.mxu0 0.0
      %4205 = vmatpush1.msra.mxu0 0.0
      %4206 = vmatprep.subr.mxu0 0.0
      %4207 = vmatpush1.msra.mxu0 0.0
      %4208 = vmatprep.subr.mxu0 0.0
      %4209 = vmatpush1.msra.mxu0 0.0
      %4210 = vmatprep.subr.mxu0 0.0
      %4211 = vmatpush1.msra.mxu0 0.0
      %4212 = vmatprep.subr.mxu0 0.0
      %4213 = vmatpush1.msra.mxu0 0.0
      %4214 = vmatprep.subr.mxu0 0.0
      %4215 = vmatpush1.msra.mxu0 0.0
      %4216 = vmatprep.subr.mxu0 0.0
      %4217 = vmatpush1.msra.mxu0 0.0
      %4218 = vmatprep.subr.mxu0 0.0
      %4219 = vmatpush1.msra.mxu0 0.0
      %4220 = vmatprep.subr.mxu0 0.0
      %4221 = vmatpush1.msra.mxu0 0.0
      %4222 = vmatprep.subr.mxu0 0.0
      %4223 = vmatpush1.msra.mxu0 0.0
      %4224 = vmatprep.subr.mxu0 0.0
      %4225 = vmatpush1.msra.mxu0 0.0
      %4226 = vmatprep.subr.mxu0 0.0
      %4227 = vmatpush1.msra.mxu0 0.0
      %4228 = vmatprep.subr.mxu0 0.0
      %4229 = vmatpush1.msra.mxu0 0.0
      %4230 = vmatprep.subr.mxu0 0.0
      %4231 = vmatpush1.msra.mxu0 0.0
      %4232 = vmatprep.subr.mxu0 0.0
      %4233 = vmatpush1.msra.mxu0 0.0
      %4234 = vmatprep.subr.mxu0 0.0
      %4235 = vmatpush1.msra.mxu0 0.0
      %4236 = vmatprep.subr.mxu0 0.0
      %4237 = vmatpush1.msra.mxu0 0.0
      %4238 = vmatprep.subr.mxu0 0.0
      %4239 = vmatpush1.msra.mxu0 0.0
      %4240 = vmatprep.subr.mxu0 0.0
      %4241 = vmatpush1.msra.mxu0 0.0
      %4242 = vmatprep.subr.mxu0 0.0
      %4243 = vmatpush1.msra.mxu0 0.0
      %4244 = vmatprep.subr.mxu0 0.0
      %4245 = vmatpush1.msra.mxu0 0.0
      %4246 = vmatprep.subr.mxu0 0.0
      %4247 = vmatpush1.msra.mxu0 0.0
      %4248 = vmatprep.subr.mxu0 0.0
      %4249 = vmatpush1.msra.mxu0 0.0
      %4250 = vmatprep.subr.mxu0 0.0
      %4251 = vmatpush1.msra.mxu0 0.0
      %4252 = vmatprep.subr.mxu0 0.0
      %4253 = vmatpush1.msra.mxu0 0.0
      %4254 = vmatprep.subr.mxu0 0.0
      %4255 = vmatpush1.msra.mxu0 0.0
      %4256 = vmatprep.subr.mxu0 0.0
      %4257 = vmatpush1.msra.mxu0 0.0
      %4258 = vmatprep.subr.mxu0 0.0
      %4259 = vmatpush1.msra.mxu0 0.0
      %4260 = vmatprep.mubr.f32.mxu0 0.0
      %4261 = vmatmul.mubr.f32.gmra.mrb[0].mxu0 %v4192
      %v4262 = vpop.f32.mrb[0].mxu0
      %v4263 = vadd.f32 %v4153, %v4262
      %v4264 = vpop.f32.mrb[0].mxu0
      %4265 = vmatprep.mubr.f32.mxu0 0.0
      %4266 = vmatmul.mubr.f32.gmra.mrb[0].mxu0 %v4194
      %v4267 = vpop.f32.mrb[0].mxu0
      %v4268 = vadd.f32 %v4153, %v4267
      %v4269 = vpop.f32.mrb[0].mxu0
      %4270 = vdwg.mxu0
      %v4271 = vmax.f32 %v4263, 0.0
      %v4272 = vmax.f32 %v4268, 0.0
      %v4273 = vld [vmem:[%s11] sm:$0xff]
      %v4274 = vld [vmem:[%s11 + $0x8] sm:$0xff]
      %v4275 = vld [vmem:[%s11 + $0x10] sm:$0xff]
      %v4276 = vld [vmem:[%s11 + $0x18] sm:$0xff]
      %v4277 = vld [vmem:[%s11 + $0x20] sm:$0xff]
      %v4278 = vld [vmem:[%s11 + $0x28] sm:$0xff]
      %v4279 = vld [vmem:[%s11 + $0x30] sm:$0xff]
      %v4280 = vld [vmem:[%s11 + $0x38] sm:$0xff]
      %v4281 = vld [vmem:[%s12] sm:$0x1]
      %v4283 = vlaneseq
      %v4284 = vshrl.u32 %v4283, 7
      %v4285 = vsub.s32 0, %v4284
      %v4286 = vrot.slane %v4281, %v4285
      %v4289 = vsel %vm716, %v4271, 0
      %v4292 = vsel %vm716, %v4272, 0
      %4294 = vmatprep.subr.mxu0 0.0
      %4295 = vmatpush1.msra.mxu0 %v4273
      %4296 = vmatprep.subr.mxu0 0.0
      %4297 = vmatpush1.msra.mxu0 %v4274
      %4298 = vmatprep.subr.mxu0 0.0
      %4299 = vmatpush1.msra.mxu0 %v4275
      %4300 = vmatprep.subr.mxu0 0.0
      %4301 = vmatpush1.msra.mxu0 %v4276
      %4302 = vmatprep.subr.mxu0 0.0
      %4303 = vmatpush1.msra.mxu0 %v4277
      %4304 = vmatprep.subr.mxu0 0.0
      %4305 = vmatpush1.msra.mxu0 %v4278
      %4306 = vmatprep.subr.mxu0 0.0
      %4307 = vmatpush1.msra.mxu0 %v4279
      %4308 = vmatprep.subr.mxu0 0.0
      %4309 = vmatpush1.msra.mxu0 %v4280
      %4310 = vmatprep.subr.mxu0 0.0
      %4311 = vmatpush1.msra.mxu0 0.0
      %4312 = vmatprep.subr.mxu0 0.0
      %4313 = vmatpush1.msra.mxu0 0.0
      %4314 = vmatprep.subr.mxu0 0.0
      %4315 = vmatpush1.msra.mxu0 0.0
      %4316 = vmatprep.subr.mxu0 0.0
      %4317 = vmatpush1.msra.mxu0 0.0
      %4318 = vmatprep.subr.mxu0 0.0
      %4319 = vmatpush1.msra.mxu0 0.0
      %4320 = vmatprep.subr.mxu0 0.0
      %4321 = vmatpush1.msra.mxu0 0.0
      %4322 = vmatprep.subr.mxu0 0.0
      %4323 = vmatpush1.msra.mxu0 0.0
      %4324 = vmatprep.subr.mxu0 0.0
      %4325 = vmatpush1.msra.mxu0 0.0
      %4326 = vmatprep.subr.mxu0 0.0
      %4327 = vmatpush1.msra.mxu0 0.0
      %4328 = vmatprep.subr.mxu0 0.0
      %4329 = vmatpush1.msra.mxu0 0.0
      %4330 = vmatprep.subr.mxu0 0.0
      %4331 = vmatpush1.msra.mxu0 0.0
      %4332 = vmatprep.subr.mxu0 0.0
      %4333 = vmatpush1.msra.mxu0 0.0
      %4334 = vmatprep.subr.mxu0 0.0
      %4335 = vmatpush1.msra.mxu0 0.0
      %4336 = vmatprep.subr.mxu0 0.0
      %4337 = vmatpush1.msra.mxu0 0.0
      %4338 = vmatprep.subr.mxu0 0.0
      %4339 = vmatpush1.msra.mxu0 0.0
      %4340 = vmatprep.subr.mxu0 0.0
      %4341 = vmatpush1.msra.mxu0 0.0
      %4342 = vmatprep.subr.mxu0 0.0
      %4343 = vmatpush1.msra.mxu0 0.0
      %4344 = vmatprep.subr.mxu0 0.0
      %4345 = vmatpush1.msra.mxu0 0.0
      %4346 = vmatprep.subr.mxu0 0.0
      %4347 = vmatpush1.msra.mxu0 0.0
      %4348 = vmatprep.subr.mxu0 0.0
      %4349 = vmatpush1.msra.mxu0 0.0
      %4350 = vmatprep.subr.mxu0 0.0
      %4351 = vmatpush1.msra.mxu0 0.0
      %4352 = vmatprep.subr.mxu0 0.0
      %4353 = vmatpush1.msra.mxu0 0.0
      %4354 = vmatprep.subr.mxu0 0.0
      %4355 = vmatpush1.msra.mxu0 0.0
      %4356 = vmatprep.subr.mxu0 0.0
      %4357 = vmatpush1.msra.mxu0 0.0
      %4358 = vmatprep.mubr.f32.mxu0 0.0
      %4359 = vmatmul.mubr.f32.gmra.mrb[0].mxu0 %v4289
      %v4360 = vpop.f32.mrb[0].mxu0
      %v4361 = vadd.f32 %v4286, %v4360
      %v4362 = vpop.f32.mrb[0].mxu0
      %4363 = vmatprep.mubr.f32.mxu0 0.0
      %4364 = vmatmul.mubr.f32.gmra.mrb[0].mxu0 %v4292
      %v4365 = vpop.f32.mrb[0].mxu0
      %v4366 = vadd.f32 %v4286, %v4365
      %v4367 = vpop.f32.mrb[0].mxu0
      %4368 = vdwg.mxu0
      %4369 = vst [vmem:[%s464] sm:$0xff] %v4361
      %4370 = vst [vmem:[%s464 + $0x8] sm:$0xff] %v4366
      %s4371 = smul.u32 2, %s24
      %p4372 = scmp.lt.s32.totalorder %s4371, 3
      %s4373 = scalar_select %p4372, %s4371, 3
      %s4374 = smul.addr %s4373, 8
      %s4375 = scalar_lea.vmem %s13, %s4374
      // Predicated region
      $region73: #{parcel_model.1} parent=71 // pred_check
        %p4376 = pneg %p325
      $region74: #{parcel_model.1} parent=71 // pred_check_branch
        %4378 = sbr.rel (%p4376) target = $region76
      $region75: #{parcel_model.1} parent=71 // pred_region
        %s4379 = smul.u32 2, %s24
      $region76: #{parcel_model.1} parent=71 // pred_fallthru
        _
    $region72: #{parcel_model.1} parent=5 // pred_fallthru
      _
    %p4380 = scmp.le.s32.totalorder 2, %s19
    // Predicated region
    $region77: #{parcel_model.1} parent=5 // pred_check
      %p4381 = pneg %p4380
    $region78: #{parcel_model.1} parent=5 // pred_check_branch
      %4383 = sbr.rel (%p4381) target = $region80
    $region79: #{parcel_model.1} parent=5 // pred_region
      %s4384 = ssub.s32 %s19, 2
      // Predicated region
      $region81: #{parcel_model.1} parent=79 // pred_check
        %p4385 = pneg %p331
      $region82: #{parcel_model.1} parent=79 // pred_check_branch
        %4387 = sbr.rel (%p4385) target = $region84
      $region83: #{parcel_model.1} parent=79 // pred_region
        %s4388 = smul.u32 2, %s25
        %p4389 = scmp.lt.s32.totalorder %s4388, 3
        %s4390 = scalar_select %p4389, %s4388, 3
        %s4391 = smul.addr %s4390, 8
        %s4392 = scalar_lea.vmem %s13, %s4391
      $region84: #{parcel_model.1} parent=79 // pred_fallthru
        _
    $region80: #{parcel_model.1} parent=5 // pred_fallthru
      _
  $region6: #{parcel_model.1} parent=0 // loop_footer
    %s23 = sadd.s32 1, %s19
  $region7: #{parcel_model.1} parent=0 // loop_footer_branch
    %18 = sbr.rel target = $region3
  $region8: #{parcel_model.1} parent=0 // loop_exit
    _

</llo_original>
